<compile_context>
chip_gen: v7x
topology: tpu7x:2x2x1
jax: 0.10.0
libtpu: 0.0.40
codegen_flags: <defaults>
</compile_context>

<pallas_src>
import functools

import numpy as np
import jax
import jax.numpy as jnp
from jax.experimental import pallas as pl
from jax.experimental.pallas import tpu as pltpu


_LANE = 128


def _round_up(x, m):
    return (x + m - 1) // m * m


def _vmem_limit(nbytes):
    # Bounded blocks -> modest limit; keep <= 48 MiB so it fits v7x's 64 MiB.
    return int(min(max(nbytes + (8 << 20), 32 << 20), 48 << 20))


# ---------------------------------------------------------------------------
# Kernel A — fused token projection (1-D parallel grid over token tiles).
#   headW[0] = enc @ (Wh^T (g0 W0))  (+ bias, folded via ones column)
#   headW[1] = enc @ (Wh^T (g1 W1))  (+ bias)
#   tailT    = Wt @ enc^T            (+ bias, folded via ones row)   [H, N]
# All dots are canonical [M,K]x[K,N]; no in-kernel transposes; the f32
# intermediates are per-tile (bounded) and cast to bf16 before the store.
# ---------------------------------------------------------------------------
def _proj_kernel(enc_ref, enct_ref, wa_ref, wt_ref, headw_ref, tailt_ref, *,
                 h_pad):
    f32 = jnp.float32
    hw = jnp.dot(enc_ref[...], wa_ref[...], preferred_element_type=f32)
    headw_ref[0] = hw[:, :h_pad].astype(headw_ref.dtype)
    headw_ref[1] = hw[:, h_pad:].astype(headw_ref.dtype)
    tailt_ref[...] = jnp.dot(wt_ref[...], enct_ref[...],
                             preferred_element_type=f32).astype(tailt_ref.dtype)


# ---------------------------------------------------------------------------
# Kernel B — score tiles (2-D fully-parallel grid over head rows x tail cols).
#   out[l, rows, cols] = hfW[l, rows] @ tailT[:, cols]
# Two canonical bf16 MXU dots with f32 accumulation, bf16 lane-dense store.
# ---------------------------------------------------------------------------
def _score_kernel(hfw_ref, tailt_ref, out_ref):
    f32 = jnp.float32
    t = tailt_ref[...]
    s0 = jnp.dot(hfw_ref[0], t, preferred_element_type=f32)
    s1 = jnp.dot(hfw_ref[1], t, preferred_element_type=f32)
    out_ref[0] = s0.astype(out_ref.dtype)
    out_ref[1] = s1.astype(out_ref.dtype)


def relation_tagger_forward(enc, params, *, tn=256, tr=1024,
                            score_dtype=jnp.bfloat16):
    """enc: [N, in_size] f32.  Returns [2, n_fields+N, N] in `score_dtype`."""
    n_tokens, in_size = enc.shape
    hidden = params["w_head"].shape[0]
    n_fields = params["field_emb"].shape[0]

    f32, bf16 = jnp.float32, jnp.bfloat16

    d_pad = _round_up(in_size + 1, _LANE)      # +1: ones column folds the biases
    h_pad = _round_up(hidden, _LANE)
    n_pad = _round_up(n_tokens, tn)            # token axis (proj rows / score cols)
    r_pad = _round_up(n_fields + n_pad, tr)    # head-row axis of the score

    g0 = params["gate"][0, 0, 0]
    g1 = params["gate"][1, 0, 0]
    gw0 = g0 * params["w0"]                    # [H, H]
    gw1 = g1 * params["w1"]

    # ---- padded activations: enc in both layouts; ones col/row fold biases.
    # Padded token rows/cols keep zeros everywhere -> exact-zero padded scores.
    enc_p = jnp.zeros((n_pad, d_pad), f32)
    enc_p = enc_p.at[:n_tokens, :in_size].set(enc)
    enc_p = enc_p.at[:n_tokens, in_size].set(1.0)
    enc_p = enc_p.astype(bf16)

    enct_p = jnp.zeros((d_pad, n_pad), f32)
    enct_p = enct_p.at[:in_size, :n_tokens].set(enc.T)
    enct_p = enct_p.at[in_size, :n_tokens].set(1.0)
    enct_p = enct_p.astype(bf16)

    # ---- folded weights.
    # Head side: enc_head @ (g*W) = enc @ (Wh^T (g*W)) + bh (g*W)
    a0 = params["w_head"].T @ gw0              # [in_size, hidden]
    a1 = params["w_head"].T @ gw1
    c0 = params["b_head"] @ gw0                # [hidden]
    c1 = params["b_head"] @ gw1
    wa = jnp.zeros((d_pad, 2 * h_pad), f32)
    wa = wa.at[:in_size, :hidden].set(a0)
    wa = wa.at[in_size, :hidden].set(c0)
    wa = wa.at[:in_size, h_pad:h_pad + hidden].set(a1)
    wa = wa.at[in_size, h_pad:h_pad + hidden].set(c1)
    wa = wa.astype(bf16)

    # Tail side (pre-transposed): tailT = Wt @ enc^T + bt 1^T
    wt = jnp.zeros((h_pad, d_pad), f32)
    wt = wt.at[:hidden, :in_size].set(params["w_tail"])
    wt = wt.at[:hidden, in_size].set(params["b_tail"])
    wt = wt.astype(bf16)

    # ------------------------------------------------------------------ A --
    flops_a = 2 * n_pad * d_pad * 2 * h_pad + 2 * h_pad * d_pad * n_pad
    bytes_a = (2 * n_pad * d_pad * 2 + d_pad * 2 * h_pad * 2 + h_pad * d_pad * 2
               + 2 * n_pad * h_pad * 2 + h_pad * n_pad * 2)
    vmem_a = (2 * (tn * d_pad * 2)             # enc block (x2 buffers)
              + 2 * (d_pad * tn * 2)           # encT block
              + 2 * (d_pad * 2 * h_pad * 2)    # wa
              + 2 * (h_pad * d_pad * 2)        # wt
              + 2 * (2 * tn * h_pad * 2)       # headW out block
              + 2 * (h_pad * tn * 2)           # tailT out block
              + tn * 2 * h_pad * 4             # f32 projection intermediate
              + h_pad * tn * 4)                # f32 tailT intermediate

    headw, tailt = pl.pallas_call(
        functools.partial(_proj_kernel, h_pad=h_pad),
        out_shape=(jax.ShapeDtypeStruct((2, n_pad, h_pad), bf16),
                   jax.ShapeDtypeStruct((h_pad, n_pad), bf16)),
        grid_spec=pltpu.PrefetchScalarGridSpec(
            num_scalar_prefetch=0,
            grid=(n_pad // tn,),
            in_specs=[
                pl.BlockSpec((tn, d_pad), lambda i: (i, 0)),       # enc rows
                pl.BlockSpec((d_pad, tn), lambda i: (0, i)),       # enc^T cols
                pl.BlockSpec((d_pad, 2 * h_pad), lambda i: (0, 0)),  # A0|A1
                pl.BlockSpec((h_pad, d_pad), lambda i: (0, 0)),      # Wt
            ],
            out_specs=[
                pl.BlockSpec((2, tn, h_pad), lambda i: (0, i, 0)),   # headW
                pl.BlockSpec((h_pad, tn), lambda i: (0, i)),         # tailT
            ],
        ),
        compiler_params=pltpu.CompilerParams(
            dimension_semantics=("parallel",),
            vmem_limit_bytes=_vmem_limit(vmem_a),
        ),
        cost_estimate=pl.CostEstimate(flops=flops_a, transcendentals=0,
                                      bytes_accessed=bytes_a),
    )(enc_p, enct_p, wa, wt)

    # ---- field-embedding head rows (tiny: F x H x H) done in plain XLA,
    # then the full head operand hfW = [fembW ; headW ; 0] is assembled.
    fembw = jnp.stack([params["field_emb"] @ gw0,
                       params["field_emb"] @ gw1], axis=0)     # [2, F, hidden]
    fembw_p = jnp.zeros((2, n_fields, h_pad), f32).at[:, :, :hidden].set(fembw)
    pad_rows = r_pad - n_fields - n_pad
    hfw = jnp.concatenate(
        [fembw_p.astype(bf16), headw, jnp.zeros((2, pad_rows, h_pad), bf16)],
        axis=1)                                                # [2, R_pad, H_pad]

    # ------------------------------------------------------------------ B --
    out_bytes = jnp.dtype(score_dtype).itemsize
    flops_b = 2 * (2 * r_pad * h_pad * n_pad)
    bytes_b = (2 * r_pad * h_pad * 2 + (r_pad // tr) * h_pad * n_pad * 2
               + 2 * r_pad * n_pad * out_bytes)
    vmem_b = (2 * (2 * tr * h_pad * 2)          # hfW block (x2 buffers)
              + 2 * (h_pad * tn * 2)            # tailT block
              + 2 * (2 * tr * tn * out_bytes)   # output block
              + 2 * tr * tn * 4 * 2)            # two f32 accumulators

    out_padded = pl.pallas_call(
        _score_kernel,
        out_shape=jax.ShapeDtypeStruct((2, r_pad, n_pad), score_dtype),
        grid_spec=pltpu.PrefetchScalarGridSpec(
            num_scalar_prefetch=0,
            grid=(r_pad // tr, n_pad // tn),
            in_specs=[
                pl.BlockSpec((2, tr, h_pad), lambda i, j: (0, i, 0)),  # hfW rows
                pl.BlockSpec((h_pad, tn), lambda i, j: (0, j)),        # tailT cols
            ],
            out_specs=pl.BlockSpec((2, tr, tn), lambda i, j: (0, i, j)),
        ),
        compiler_params=pltpu.CompilerParams(
            # No scratch carry -> both axes parallel (megacore split on v7x).
            dimension_semantics=("parallel", "parallel"),
            vmem_limit_bytes=_vmem_limit(vmem_b),
        ),
        cost_estimate=pl.CostEstimate(flops=flops_b, transcendentals=0,
                                      bytes_accessed=bytes_b),
    )(hfw, tailt)

    # Real rows are contiguous: [0:F] fields, [F:F+N] tokens.
    n_rows = n_fields + n_tokens
    return out_padded[:, :n_rows, :n_tokens]


def relation_tagger_reference(enc, params):
    """Pure-JAX f32 reference matching the PyTorch forward exactly."""
    enc_head = enc @ params["w_head"].T + params["b_head"]
    enc_tail = enc @ params["w_tail"].T + params["b_tail"]
    enc_head_full = jnp.concatenate([params["field_emb"], enc_head], axis=0)
    t0 = enc_tail @ params["w0"].T
    t1 = enc_tail @ params["w1"].T
    s0 = enc_head_full @ t0.T
    s1 = enc_head_full @ t1.T
    return jnp.stack([s0, s1], axis=0) * params["gate"]


def init_params(key, in_size, hidden_size, n_fields):
    """Deterministic synthetic parameters with the same shapes as the nn.Module."""
    ks = jax.random.split(key, 8)
    bound = 1.0 / np.sqrt(in_size)
    bound_h = 1.0 / np.sqrt(hidden_size)
    return {
        "w_head": jax.random.uniform(ks[0], (hidden_size, in_size), jnp.float32,
                                     -bound, bound),
        "b_head": jax.random.uniform(ks[1], (hidden_size,), jnp.float32,
                                     -bound, bound),
        "w_tail": jax.random.uniform(ks[2], (hidden_size, in_size), jnp.float32,
                                     -bound, bound),
        "b_tail": jax.random.uniform(ks[3], (hidden_size,), jnp.float32,
                                     -bound, bound),
        "field_emb": jax.random.uniform(ks[4], (n_fields, hidden_size),
                                        jnp.float32, 0.0, 1.0),
        "w0": jax.random.uniform(ks[5], (hidden_size, hidden_size), jnp.float32,
                                 -bound_h, bound_h),
        "w1": jax.random.uniform(ks[6], (hidden_size, hidden_size), jnp.float32,
                                 -bound_h, bound_h),
        "gate": jax.random.uniform(ks[7], (2, 1, 1), jnp.float32, 0.0, 1.0),
    }


if __name__ == "__main__":
    in_size, hidden_size, n_fields, n_tokens = 32, 32, 4, 8

    key = jax.random.PRNGKey(0)
    k_enc, k_params = jax.random.split(key)
    enc = jax.random.normal(k_enc, (n_tokens, in_size), jnp.float32)
    params = init_params(k_params, in_size, hidden_size, n_fields)

    fwd = jax.jit(relation_tagger_forward)
    out = jax.block_until_ready(fwd(enc, params))

    ref = relation_tagger_reference(enc, params)
    # Kernel runs bf16 operands/output with f32 accumulation -> compare with a
    # bf16-appropriate tolerance against the pure-f32 reference.
    np.testing.assert_allclose(np.asarray(out.astype(jnp.float32)),
                               np.asarray(ref), rtol=5e-2, atol=8e-2)
    print("KERNEL_OK")
</pallas_src>

<mosaic_0001>
module attributes {stable_mosaic.version = 11 : i64} {
  func.func @_proj_kernel(%arg0: i32, %arg1: memref<256x128xbf16, #tpu.memory_space<vmem>>, %arg2: memref<128x256xbf16, #tpu.memory_space<vmem>>, %arg3: memref<128x256xbf16, #tpu.memory_space<vmem>>, %arg4: memref<128x128xbf16, #tpu.memory_space<vmem>>, %arg5: memref<2x256x128xbf16, #tpu.memory_space<vmem>>, %arg6: memref<128x256xbf16, #tpu.memory_space<vmem>>) attributes {dimension_semantics = [#tpu.dimension_semantics<parallel>], iteration_bounds = array<i64: 1>, scalar_prefetch = 0 : i64, scratch_operands = 0 : i64, tpu.core_type = #tpu.core_type<tc>, window_params = [{transform_indices = @transform_0, window_bounds = array<i64: 256, 128>}, {transform_indices = @transform_1, window_bounds = array<i64: 128, 256>}, {pipeline_mode = #tpu.pipeline_mode<synchronous>, transform_indices = @transform_2, window_bounds = array<i64: 128, 256>}, {pipeline_mode = #tpu.pipeline_mode<synchronous>, transform_indices = @transform_3, window_bounds = array<i64: 128, 128>}, {transform_indices = @transform_4, window_bounds = array<i64: 2, 256, 128>}, {transform_indices = @transform_5, window_bounds = array<i64: 128, 256>}]} {
    %c0 = arith.constant 0 : index
    %c0_0 = arith.constant 0 : index
    %0 = vector.load %arg1[%c0, %c0_0] : memref<256x128xbf16, #tpu.memory_space<vmem>>, vector<256x128xbf16>
    %c0_1 = arith.constant 0 : index
    %c0_2 = arith.constant 0 : index
    %1 = vector.load %arg3[%c0_1, %c0_2] : memref<128x256xbf16, #tpu.memory_space<vmem>>, vector<128x256xbf16>
    %cst = arith.constant dense<0.000000e+00> : vector<256x256xf32>
    %2 = tpu.matmul %0, %1, %cst {dimension_numbers = #tpu.dot_dimension_numbers<[1], [0], [0], [1], [0, 0, 1, 1], [], []>} : vector<256x128xbf16>, vector<128x256xbf16>, vector<256x256xf32> -> vector<256x256xf32>
    %3 = vector.extract_strided_slice %2 {offsets = [0, 0], sizes = [256, 128], strides = [1, 1]} : vector<256x256xf32> to vector<256x128xf32>
    %4 = arith.truncf %3 : vector<256x128xf32> to vector<256x128xbf16>
    %c0_3 = arith.constant 0 : index
    %c0_4 = arith.constant 0 : index
    %c0_5 = arith.constant 0 : index
    %5 = vector.load %arg5[%c0_3, %c0_4, %c0_5] : memref<2x256x128xbf16, #tpu.memory_space<vmem>>, vector<1x256x128xbf16>
    %6 = vector.shape_cast %5 : vector<1x256x128xbf16> to vector<256x128xbf16>
    %7 = vector.shape_cast %4 : vector<256x128xbf16> to vector<1x256x128xbf16>
    tpu.vector_store %arg5[%c0_3, %c0_4, %c0_5], %7 {strides = array<i32>} : memref<2x256x128xbf16, #tpu.memory_space<vmem>>, vector<1x256x128xbf16>,
    %8 = vector.extract_strided_slice %2 {offsets = [0, 128], sizes = [256, 128], strides = [1, 1]} : vector<256x256xf32> to vector<256x128xf32>
    %9 = arith.truncf %8 : vector<256x128xf32> to vector<256x128xbf16>
    %c1 = arith.constant 1 : index
    %c0_6 = arith.constant 0 : index
    %c0_7 = arith.constant 0 : index
    %10 = vector.load %arg5[%c1, %c0_6, %c0_7] : memref<2x256x128xbf16, #tpu.memory_space<vmem>>, vector<1x256x128xbf16>
    %11 = vector.shape_cast %10 : vector<1x256x128xbf16> to vector<256x128xbf16>
    %12 = vector.shape_cast %9 : vector<256x128xbf16> to vector<1x256x128xbf16>
    tpu.vector_store %arg5[%c1, %c0_6, %c0_7], %12 {strides = array<i32>} : memref<2x256x128xbf16, #tpu.memory_space<vmem>>, vector<1x256x128xbf16>,
    %c0_8 = arith.constant 0 : index
    %c0_9 = arith.constant 0 : index
    %13 = vector.load %arg4[%c0_8, %c0_9] : memref<128x128xbf16, #tpu.memory_space<vmem>>, vector<128x128xbf16>
    %c0_10 = arith.constant 0 : index
    %c0_11 = arith.constant 0 : index
    %14 = vector.load %arg2[%c0_10, %c0_11] : memref<128x256xbf16, #tpu.memory_space<vmem>>, vector<128x256xbf16>
    %cst_12 = arith.constant dense<0.000000e+00> : vector<128x256xf32>
    %15 = tpu.matmul %13, %14, %cst_12 {dimension_numbers = #tpu.dot_dimension_numbers<[1], [0], [0], [1], [0, 0, 1, 1], [], []>} : vector<128x128xbf16>, vector<128x256xbf16>, vector<128x256xf32> -> vector<128x256xf32>
    %16 = arith.truncf %15 : vector<128x256xf32> to vector<128x256xbf16>
    %c0_13 = arith.constant 0 : index
    %c0_14 = arith.constant 0 : index
    %17 = vector.load %arg6[%c0_13, %c0_14] : memref<128x256xbf16, #tpu.memory_space<vmem>>, vector<128x256xbf16>
    tpu.vector_store %arg6[%c0_13, %c0_14], %16 {strides = array<i32>} : memref<128x256xbf16, #tpu.memory_space<vmem>>, vector<128x256xbf16>,
    return
  }
  func.func @transform_0(%arg0: i32) -> (i32, i32) {
    %c0_i32 = arith.constant 0 : i32
    %c0_i32_0 = arith.constant 0 : i32
    return %arg0, %c0_i32 : i32, i32
  }
  func.func @transform_1(%arg0: i32) -> (i32, i32) {
    %c0_i32 = arith.constant 0 : i32
    %c0_i32_0 = arith.constant 0 : i32
    return %c0_i32, %arg0 : i32, i32
  }
  func.func @transform_2(%arg0: i32) -> (i32, i32) {
    %c0_i32 = arith.constant 0 : i32
    %c0_i32_0 = arith.constant 0 : i32
    %c0_i32_1 = arith.constant 0 : i32
    return %c0_i32, %c0_i32_0 : i32, i32
  }
  func.func @transform_3(%arg0: i32) -> (i32, i32) {
    %c0_i32 = arith.constant 0 : i32
    %c0_i32_0 = arith.constant 0 : i32
    %c0_i32_1 = arith.constant 0 : i32
    return %c0_i32, %c0_i32_0 : i32, i32
  }
  func.func @transform_4(%arg0: i32) -> (i32, i32, i32) {
    %c0_i32 = arith.constant 0 : i32
    %c0_i32_0 = arith.constant 0 : i32
    %c0_i32_1 = arith.constant 0 : i32
    return %c0_i32, %arg0, %c0_i32_0 : i32, i32, i32
  }
  func.func @transform_5(%arg0: i32) -> (i32, i32) {
    %c0_i32 = arith.constant 0 : i32
    %c0_i32_0 = arith.constant 0 : i32
    return %c0_i32, %arg0 : i32, i32
  }
}

module attributes {stable_mosaic.version = 11 : i64} {
  func.func @_score_kernel(%arg0: i32, %arg1: i32, %arg2: memref<2x1024x128xbf16, #tpu.memory_space<vmem>>, %arg3: memref<128x256xbf16, #tpu.memory_space<vmem>>, %arg4: memref<2x1024x256xbf16, #tpu.memory_space<vmem>>) attributes {dimension_semantics = [#tpu.dimension_semantics<parallel>, #tpu.dimension_semantics<parallel>], iteration_bounds = array<i64: 1, 1>, scalar_prefetch = 0 : i64, scratch_operands = 0 : i64, tpu.core_type = #tpu.core_type<tc>, window_params = [{transform_indices = @transform_0, window_bounds = array<i64: 2, 1024, 128>}, {transform_indices = @transform_1, window_bounds = array<i64: 128, 256>}, {transform_indices = @transform_2, window_bounds = array<i64: 2, 1024, 256>}]} {
    %c0 = arith.constant 0 : index
    %c0_0 = arith.constant 0 : index
    %0 = vector.load %arg3[%c0, %c0_0] : memref<128x256xbf16, #tpu.memory_space<vmem>>, vector<128x256xbf16>
    %c0_1 = arith.constant 0 : index
    %c0_2 = arith.constant 0 : index
    %c0_3 = arith.constant 0 : index
    %1 = vector.load %arg2[%c0_1, %c0_2, %c0_3] : memref<2x1024x128xbf16, #tpu.memory_space<vmem>>, vector<1x1024x128xbf16>
    %2 = vector.shape_cast %1 : vector<1x1024x128xbf16> to vector<1024x128xbf16>
    %cst = arith.constant dense<0.000000e+00> : vector<1024x256xf32>
    %3 = tpu.matmul %2, %0, %cst {dimension_numbers = #tpu.dot_dimension_numbers<[1], [0], [0], [1], [0, 0, 1, 1], [], []>} : vector<1024x128xbf16>, vector<128x256xbf16>, vector<1024x256xf32> -> vector<1024x256xf32>
    %c1 = arith.constant 1 : index
    %c0_4 = arith.constant 0 : index
    %c0_5 = arith.constant 0 : index
    %4 = vector.load %arg2[%c1, %c0_4, %c0_5] : memref<2x1024x128xbf16, #tpu.memory_space<vmem>>, vector<1x1024x128xbf16>
    %5 = vector.shape_cast %4 : vector<1x1024x128xbf16> to vector<1024x128xbf16>
    %cst_6 = arith.constant dense<0.000000e+00> : vector<1024x256xf32>
    %6 = tpu.matmul %5, %0, %cst_6 {dimension_numbers = #tpu.dot_dimension_numbers<[1], [0], [0], [1], [0, 0, 1, 1], [], []>} : vector<1024x128xbf16>, vector<128x256xbf16>, vector<1024x256xf32> -> vector<1024x256xf32>
    %7 = arith.truncf %3 : vector<1024x256xf32> to vector<1024x256xbf16>
    %c0_7 = arith.constant 0 : index
    %c0_8 = arith.constant 0 : index
    %c0_9 = arith.constant 0 : index
    %8 = vector.load %arg4[%c0_7, %c0_8, %c0_9] : memref<2x1024x256xbf16, #tpu.memory_space<vmem>>, vector<1x1024x256xbf16>
    %9 = vector.shape_cast %8 : vector<1x1024x256xbf16> to vector<1024x256xbf16>
    %10 = vector.shape_cast %7 : vector<1024x256xbf16> to vector<1x1024x256xbf16>
    tpu.vector_store %arg4[%c0_7, %c0_8, %c0_9], %10 {strides = array<i32>} : memref<2x1024x256xbf16, #tpu.memory_space<vmem>>, vector<1x1024x256xbf16>,
    %11 = arith.truncf %6 : vector<1024x256xf32> to vector<1024x256xbf16>
    %c1_10 = arith.constant 1 : index
    %c0_11 = arith.constant 0 : index
    %c0_12 = arith.constant 0 : index
    %12 = vector.load %arg4[%c1_10, %c0_11, %c0_12] : memref<2x1024x256xbf16, #tpu.memory_space<vmem>>, vector<1x1024x256xbf16>
    %13 = vector.shape_cast %12 : vector<1x1024x256xbf16> to vector<1024x256xbf16>
    %14 = vector.shape_cast %11 : vector<1024x256xbf16> to vector<1x1024x256xbf16>
    tpu.vector_store %arg4[%c1_10, %c0_11, %c0_12], %14 {strides = array<i32>} : memref<2x1024x256xbf16, #tpu.memory_space<vmem>>, vector<1x1024x256xbf16>,
    return
  }
  func.func @transform_0(%arg0: i32, %arg1: i32) -> (i32, i32, i32) {
    %c0_i32 = arith.constant 0 : i32
    %c0_i32_0 = arith.constant 0 : i32
    %c0_i32_1 = arith.constant 0 : i32
    return %c0_i32, %arg0, %c0_i32_0 : i32, i32, i32
  }
  func.func @transform_1(%arg0: i32, %arg1: i32) -> (i32, i32) {
    %c0_i32 = arith.constant 0 : i32
    %c0_i32_0 = arith.constant 0 : i32
    return %c0_i32, %arg1 : i32, i32
  }
  func.func @transform_2(%arg0: i32, %arg1: i32) -> (i32, i32, i32) {
    %c0_i32 = arith.constant 0 : i32
    %c0_i32_0 = arith.constant 0 : i32
    return %c0_i32, %arg0, %arg1 : i32, i32, i32
  }
}

</mosaic_0001>

<llo_original>
// kernel: relation_tagger_forward.2
$region0: #{relation_tagger_forward.2}
  #allocation0 [shape = 'u32[]', space=smem, size = 0x4, offset = 0x4, fixed_abs, tag = 'smem constant byte address 0x4 - core index']
  #allocation1 [shape = 'u32[144,128]{1,0:T(1,128)}', space=vmem, size = 0x12000, scoped, tag = 'internal scratch']
  %s0 = inlined_call_operand.vmem [shape: bf16[256,128], index: 0, kind: input, shape index: {}]
  %s1 = inlined_call_operand.vmem [shape: bf16[128,256], index: 1, kind: input, shape index: {}]
  %s2 = inlined_call_operand.vmem [shape: bf16[128,256], index: 2, kind: input, shape index: {}]
  %s3 = inlined_call_operand.vmem [shape: bf16[128,128], index: 3, kind: input, shape index: {}]
  %s4 = inlined_call_operand.vmem [shape: bf16[2,256,128], index: 4, kind: output, shape index: {0}]
  %s5 = inlined_call_operand.vmem [shape: bf16[128,256], index: 5, kind: output, shape index: {1}]
  %6 = xla_tuple %s4, %s5
  %s7 = sld [smem:[#allocation0]]
  $region34: #{relation_tagger_forward.2} parent=0
    _
  %s9 = ssub.s32 1, %s7
  %s10 = scalar_select 0, %s9, %s7
  // Predicated region
  $region2: #{relation_tagger_forward.2} parent=0 // pred_check
    _
  $region3: #{relation_tagger_forward.2} parent=0 // pred_check_branch
    %12 = sbr.rel (0) target = $region5
  $region4: #{relation_tagger_forward.2} parent=0 // pred_region
    _
  $region5: #{relation_tagger_forward.2} parent=0 // pred_fallthru
    _
  // Predicated region
  $region6: #{relation_tagger_forward.2} parent=0 // pred_check
    _
  $region7: #{relation_tagger_forward.2} parent=0 // pred_check_branch
    %14 = sbr.rel (0) target = $region9
  $region8: #{relation_tagger_forward.2} parent=0 // pred_region
    _
  $region9: #{relation_tagger_forward.2} parent=0 // pred_fallthru
    _
  // Predicated region
  $region10: #{relation_tagger_forward.2} parent=0 // pred_check
    _
  $region11: #{relation_tagger_forward.2} parent=0 // pred_check_branch
    %16 = sbr.rel (0) target = $region13
  $region12: #{relation_tagger_forward.2} parent=0 // pred_region
    _
  $region13: #{relation_tagger_forward.2} parent=0 // pred_fallthru
    _
  // Predicated region
  $region14: #{relation_tagger_forward.2} parent=0 // pred_check
    _
  $region15: #{relation_tagger_forward.2} parent=0 // pred_check_branch
    %18 = sbr.rel (0) target = $region17
  $region16: #{relation_tagger_forward.2} parent=0 // pred_region
    _
  $region17: #{relation_tagger_forward.2} parent=0 // pred_fallthru
    _
  %v20 = vld [vmem:[%s0] sm:$0xf]
  %v21 = vld [vmem:[%s0 + $0x4] sm:$0xf]
  %v22 = vld [vmem:[%s0 + $0x8] sm:$0xf]
  %v23 = vld [vmem:[%s0 + $0xc] sm:$0xf]
  %v24 = vld [vmem:[%s0 + $0x10] sm:$0xf]
  %v25 = vld [vmem:[%s0 + $0x14] sm:$0xf]
  %v26 = vld [vmem:[%s0 + $0x18] sm:$0xf]
  %v27 = vld [vmem:[%s0 + $0x1c] sm:$0xf]
  %v28 = vld [vmem:[%s0 + $0x20] sm:$0xf]
  %v29 = vld [vmem:[%s0 + $0x24] sm:$0xf]
  %v30 = vld [vmem:[%s0 + $0x28] sm:$0xf]
  %v31 = vld [vmem:[%s0 + $0x2c] sm:$0xf]
  %v32 = vld [vmem:[%s0 + $0x30] sm:$0xf]
  %v33 = vld [vmem:[%s0 + $0x34] sm:$0xf]
  %v34 = vld [vmem:[%s0 + $0x38] sm:$0xf]
  %v35 = vld [vmem:[%s0 + $0x3c] sm:$0xf]
  %v36 = vld [vmem:[%s0 + $0x40] sm:$0xf]
  %v37 = vld [vmem:[%s0 + $0x44] sm:$0xf]
  %v38 = vld [vmem:[%s0 + $0x48] sm:$0xf]
  %v39 = vld [vmem:[%s0 + $0x4c] sm:$0xf]
  %v40 = vld [vmem:[%s0 + $0x50] sm:$0xf]
  %v41 = vld [vmem:[%s0 + $0x54] sm:$0xf]
  %v42 = vld [vmem:[%s0 + $0x58] sm:$0xf]
  %v43 = vld [vmem:[%s0 + $0x5c] sm:$0xf]
  %v44 = vld [vmem:[%s0 + $0x60] sm:$0xf]
  %v45 = vld [vmem:[%s0 + $0x64] sm:$0xf]
  %v46 = vld [vmem:[%s0 + $0x68] sm:$0xf]
  %v47 = vld [vmem:[%s0 + $0x6c] sm:$0xf]
  %v48 = vld [vmem:[%s0 + $0x70] sm:$0xf]
  %v49 = vld [vmem:[%s0 + $0x74] sm:$0xf]
  %v50 = vld [vmem:[%s0 + $0x78] sm:$0xf]
  %v51 = vld [vmem:[%s0 + $0x7c] sm:$0xf]
  %v52 = vld [vmem:[%s2] sm:$0xff]
  %v53 = vld [vmem:[%s2 + $0x8] sm:$0xff]
  %v54 = vld [vmem:[%s2 + $0x10] sm:$0xff]
  %v55 = vld [vmem:[%s2 + $0x18] sm:$0xff]
  %v56 = vld [vmem:[%s2 + $0x20] sm:$0xff]
  %v57 = vld [vmem:[%s2 + $0x28] sm:$0xff]
  %v58 = vld [vmem:[%s2 + $0x30] sm:$0xff]
  %v59 = vld [vmem:[%s2 + $0x38] sm:$0xff]
  %v60 = vld [vmem:[%s2 + $0x40] sm:$0xff]
  %v61 = vld [vmem:[%s2 + $0x48] sm:$0xff]
  %v62 = vld [vmem:[%s2 + $0x50] sm:$0xff]
  %v63 = vld [vmem:[%s2 + $0x58] sm:$0xff]
  %v64 = vld [vmem:[%s2 + $0x60] sm:$0xff]
  %v65 = vld [vmem:[%s2 + $0x68] sm:$0xff]
  %v66 = vld [vmem:[%s2 + $0x70] sm:$0xff]
  %v67 = vld [vmem:[%s2 + $0x78] sm:$0xff]
  %v100 = vunpack.c.l.b16 %v20
  %v101 = vunpack.c.l.b16 %v21
  %v102 = vunpack.c.l.b16 %v22
  %v103 = vunpack.c.l.b16 %v23
  %v104 = vunpack.c.l.b16 %v24
  %v105 = vunpack.c.l.b16 %v25
  %v106 = vunpack.c.l.b16 %v26
  %v107 = vunpack.c.l.b16 %v27
  %v108 = vunpack.c.l.b16 %v28
  %v109 = vunpack.c.l.b16 %v29
  %v110 = vunpack.c.l.b16 %v30
  %v111 = vunpack.c.l.b16 %v31
  %v112 = vunpack.c.l.b16 %v32
  %v113 = vunpack.c.l.b16 %v33
  %v114 = vunpack.c.l.b16 %v34
  %v115 = vunpack.c.l.b16 %v35
  %v116 = vunpack.c.l.b16 %v36
  %v117 = vunpack.c.l.b16 %v37
  %v118 = vunpack.c.l.b16 %v38
  %v119 = vunpack.c.l.b16 %v39
  %v120 = vunpack.c.l.b16 %v40
  %v121 = vunpack.c.l.b16 %v41
  %v122 = vunpack.c.l.b16 %v42
  %v123 = vunpack.c.l.b16 %v43
  %v124 = vunpack.c.l.b16 %v44
  %v125 = vunpack.c.l.b16 %v45
  %v126 = vunpack.c.l.b16 %v46
  %v127 = vunpack.c.l.b16 %v47
  %v128 = vunpack.c.l.b16 %v48
  %v129 = vunpack.c.l.b16 %v49
  %v130 = vunpack.c.l.b16 %v50
  %v131 = vunpack.c.l.b16 %v51
  %v132 = vpack.c.b16 %v101, %v100
  %v133 = vpack.c.b16 %v103, %v102
  %v134 = vpack.c.b16 %v105, %v104
  %v135 = vpack.c.b16 %v107, %v106
  %v136 = vpack.c.b16 %v109, %v108
  %v137 = vpack.c.b16 %v111, %v110
  %v138 = vpack.c.b16 %v113, %v112
  %v139 = vpack.c.b16 %v115, %v114
  %v140 = vpack.c.b16 %v117, %v116
  %v141 = vpack.c.b16 %v119, %v118
  %v142 = vpack.c.b16 %v121, %v120
  %v143 = vpack.c.b16 %v123, %v122
  %v144 = vpack.c.b16 %v125, %v124
  %v145 = vpack.c.b16 %v127, %v126
  %v146 = vpack.c.b16 %v129, %v128
  %v147 = vpack.c.b16 %v131, %v130
  %v180 = vunpack.c.l.b16 %v52
  %v181 = vunpack.c.h.b16 %v52
  %v182 = vunpack.c.l.b16 %v53
  %v183 = vunpack.c.h.b16 %v53
  %v184 = vunpack.c.l.b16 %v54
  %v185 = vunpack.c.h.b16 %v54
  %v186 = vunpack.c.l.b16 %v55
  %v187 = vunpack.c.h.b16 %v55
  %v188 = vunpack.c.l.b16 %v56
  %v189 = vunpack.c.h.b16 %v56
  %v190 = vunpack.c.l.b16 %v57
  %v191 = vunpack.c.h.b16 %v57
  %v192 = vunpack.c.l.b16 %v58
  %v193 = vunpack.c.h.b16 %v58
  %v194 = vunpack.c.l.b16 %v59
  %v195 = vunpack.c.h.b16 %v59
  %v196 = vunpack.c.l.b16 %v60
  %v197 = vunpack.c.h.b16 %v60
  %v198 = vunpack.c.l.b16 %v61
  %v199 = vunpack.c.h.b16 %v61
  %v200 = vunpack.c.l.b16 %v62
  %v201 = vunpack.c.h.b16 %v62
  %v202 = vunpack.c.l.b16 %v63
  %v203 = vunpack.c.h.b16 %v63
  %v204 = vunpack.c.l.b16 %v64
  %v205 = vunpack.c.h.b16 %v64
  %v206 = vunpack.c.l.b16 %v65
  %v207 = vunpack.c.h.b16 %v65
  %v208 = vunpack.c.l.b16 %v66
  %v209 = vunpack.c.h.b16 %v66
  %v210 = vunpack.c.l.b16 %v67
  %v211 = vunpack.c.h.b16 %v67
  %v212 = vpack.c.b16 %v182, %v180
  %v213 = vpack.c.b16 %v183, %v181
  %v214 = vpack.c.b16 %v186, %v184
  %v215 = vpack.c.b16 %v187, %v185
  %v216 = vpack.c.b16 %v190, %v188
  %v217 = vpack.c.b16 %v191, %v189
  %v218 = vpack.c.b16 %v194, %v192
  %v219 = vpack.c.b16 %v195, %v193
  %v220 = vpack.c.b16 %v198, %v196
  %v221 = vpack.c.b16 %v199, %v197
  %v222 = vpack.c.b16 %v202, %v200
  %v223 = vpack.c.b16 %v203, %v201
  %v224 = vpack.c.b16 %v206, %v204
  %v225 = vpack.c.b16 %v207, %v205
  %v226 = vpack.c.b16 %v210, %v208
  %v227 = vpack.c.b16 %v211, %v209
  %244 = vmatprep.subr.bf16.mxu0 %v213
  %245 = vmatpush1.bf16.msra.mxu0 %v212
  %246 = vmatprep.subr.bf16.mxu0 %v215
  %247 = vmatpush1.bf16.msra.mxu0 %v214
  %248 = vmatprep.subr.bf16.mxu0 %v217
  %249 = vmatpush1.bf16.msra.mxu0 %v216
  %250 = vmatprep.subr.bf16.mxu0 %v219
  %251 = vmatpush1.bf16.msra.mxu0 %v218
  %252 = vmatprep.subr.bf16.mxu0 %v221
  %253 = vmatpush1.bf16.msra.mxu0 %v220
  %254 = vmatprep.subr.bf16.mxu0 %v223
  %255 = vmatpush1.bf16.msra.mxu0 %v222
  %256 = vmatprep.subr.bf16.mxu0 %v225
  %257 = vmatpush1.bf16.msra.mxu0 %v224
  %258 = vmatprep.subr.bf16.mxu0 %v227
  %259 = vmatpush1.bf16.msra.mxu0 %v226
  %260 = vmatprep.subr.bf16.mxu0 0
  %261 = vmatpush1.bf16.msra.mxu0 0
  %262 = vmatprep.subr.bf16.mxu0 0
  %263 = vmatpush1.bf16.msra.mxu0 0
  %264 = vmatprep.subr.bf16.mxu0 0
  %265 = vmatpush1.bf16.msra.mxu0 0
  %266 = vmatprep.subr.bf16.mxu0 0
  %267 = vmatpush1.bf16.msra.mxu0 0
  %268 = vmatprep.subr.bf16.mxu0 0
  %269 = vmatpush1.bf16.msra.mxu0 0
  %270 = vmatprep.subr.bf16.mxu0 0
  %271 = vmatpush1.bf16.msra.mxu0 0
  %272 = vmatprep.subr.bf16.mxu0 0
  %273 = vmatpush1.bf16.msra.mxu0 0
  %274 = vmatprep.subr.bf16.mxu0 0
  %275 = vmatpush1.bf16.msra.mxu0 0
  %276 = vmatprep.mubr.bf16.mxu0 0
  %277 = vmatmul.mubr.bf16.gmra.mrb[0].mxu0 %v132
  %v278 = vpop.f32.mrb[0].mxu0
  %v279 = vadd.f32 0.0, %v278
  %v280 = vpop.f32.mrb[0].mxu0
  %v281 = vadd.f32 0.0, %v280
  %v282 = vpop.f32.mrb[0].mxu0
  %v283 = vadd.f32 0.0, %v282
  %v284 = vpop.f32.mrb[0].mxu0
  %v285 = vadd.f32 0.0, %v284
  %286 = vmatprep.mubr.bf16.mxu0 0
  %287 = vmatmul.mubr.bf16.gmra.mrb[0].mxu0 %v133
  %v288 = vpop.f32.mrb[0].mxu0
  %v289 = vadd.f32 0.0, %v288
  %v290 = vpop.f32.mrb[0].mxu0
  %v291 = vadd.f32 0.0, %v290
  %v292 = vpop.f32.mrb[0].mxu0
  %v293 = vadd.f32 0.0, %v292
  %v294 = vpop.f32.mrb[0].mxu0
  %v295 = vadd.f32 0.0, %v294
  %296 = vmatprep.mubr.bf16.mxu0 0
  %297 = vmatmul.mubr.bf16.gmra.mrb[0].mxu0 %v134
  %v298 = vpop.f32.mrb[0].mxu0
  %v299 = vadd.f32 0.0, %v298
  %v300 = vpop.f32.mrb[0].mxu0
  %v301 = vadd.f32 0.0, %v300
  %v302 = vpop.f32.mrb[0].mxu0
  %v303 = vadd.f32 0.0, %v302
  %v304 = vpop.f32.mrb[0].mxu0
  %v305 = vadd.f32 0.0, %v304
  %306 = vmatprep.mubr.bf16.mxu0 0
  %307 = vmatmul.mubr.bf16.gmra.mrb[0].mxu0 %v135
  %v308 = vpop.f32.mrb[0].mxu0
  %v309 = vadd.f32 0.0, %v308
  %v310 = vpop.f32.mrb[0].mxu0
  %v311 = vadd.f32 0.0, %v310
  %v312 = vpop.f32.mrb[0].mxu0
  %v313 = vadd.f32 0.0, %v312
  %v314 = vpop.f32.mrb[0].mxu0
  %v315 = vadd.f32 0.0, %v314
  %316 = vmatprep.mubr.bf16.mxu0 0
  %317 = vmatmul.mubr.bf16.gmra.mrb[0].mxu0 %v136
  %v318 = vpop.f32.mrb[0].mxu0
  %v319 = vadd.f32 0.0, %v318
  %v320 = vpop.f32.mrb[0].mxu0
  %v321 = vadd.f32 0.0, %v320
  %v322 = vpop.f32.mrb[0].mxu0
  %v323 = vadd.f32 0.0, %v322
  %v324 = vpop.f32.mrb[0].mxu0
  %v325 = vadd.f32 0.0, %v324
  %326 = vmatprep.mubr.bf16.mxu0 0
  %327 = vmatmul.mubr.bf16.gmra.mrb[0].mxu0 %v137
  %v328 = vpop.f32.mrb[0].mxu0
  %v329 = vadd.f32 0.0, %v328
  %v330 = vpop.f32.mrb[0].mxu0
  %v331 = vadd.f32 0.0, %v330
  %v332 = vpop.f32.mrb[0].mxu0
  %v333 = vadd.f32 0.0, %v332
  %v334 = vpop.f32.mrb[0].mxu0
  %v335 = vadd.f32 0.0, %v334
  %336 = vmatprep.mubr.bf16.mxu0 0
  %337 = vmatmul.mubr.bf16.gmra.mrb[0].mxu0 %v138
  %v338 = vpop.f32.mrb[0].mxu0
  %v339 = vadd.f32 0.0, %v338
  %v340 = vpop.f32.mrb[0].mxu0
  %v341 = vadd.f32 0.0, %v340
  %v342 = vpop.f32.mrb[0].mxu0
  %v343 = vadd.f32 0.0, %v342
  %v344 = vpop.f32.mrb[0].mxu0
  %v345 = vadd.f32 0.0, %v344
  %346 = vmatprep.mubr.bf16.mxu0 0
  %347 = vmatmul.mubr.bf16.gmra.mrb[0].mxu0 %v139
  %v348 = vpop.f32.mrb[0].mxu0
  %v349 = vadd.f32 0.0, %v348
  %v350 = vpop.f32.mrb[0].mxu0
  %v351 = vadd.f32 0.0, %v350
  %v352 = vpop.f32.mrb[0].mxu0
  %v353 = vadd.f32 0.0, %v352
  %v354 = vpop.f32.mrb[0].mxu0
  %v355 = vadd.f32 0.0, %v354
  %356 = vmatprep.mubr.bf16.mxu0 0
  %357 = vmatmul.mubr.bf16.gmra.mrb[0].mxu0 %v140
  %v358 = vpop.f32.mrb[0].mxu0
  %v359 = vadd.f32 0.0, %v358
  %v360 = vpop.f32.mrb[0].mxu0
  %v361 = vadd.f32 0.0, %v360
  %v362 = vpop.f32.mrb[0].mxu0
  %v363 = vadd.f32 0.0, %v362
  %v364 = vpop.f32.mrb[0].mxu0
  %v365 = vadd.f32 0.0, %v364
  %366 = vmatprep.mubr.bf16.mxu0 0
  %367 = vmatmul.mubr.bf16.gmra.mrb[0].mxu0 %v141
  %v368 = vpop.f32.mrb[0].mxu0
  %v369 = vadd.f32 0.0, %v368
  %v370 = vpop.f32.mrb[0].mxu0
  %v371 = vadd.f32 0.0, %v370
  %v372 = vpop.f32.mrb[0].mxu0
  %v373 = vadd.f32 0.0, %v372
  %v374 = vpop.f32.mrb[0].mxu0
  %v375 = vadd.f32 0.0, %v374
  %376 = vmatprep.mubr.bf16.mxu0 0
  %377 = vmatmul.mubr.bf16.gmra.mrb[0].mxu0 %v142
  %v378 = vpop.f32.mrb[0].mxu0
  %v379 = vadd.f32 0.0, %v378
  %v380 = vpop.f32.mrb[0].mxu0
  %v381 = vadd.f32 0.0, %v380
  %v382 = vpop.f32.mrb[0].mxu0
  %v383 = vadd.f32 0.0, %v382
  %v384 = vpop.f32.mrb[0].mxu0
  %v385 = vadd.f32 0.0, %v384
  %386 = vmatprep.mubr.bf16.mxu0 0
  %387 = vmatmul.mubr.bf16.gmra.mrb[0].mxu0 %v143
  %v388 = vpop.f32.mrb[0].mxu0
  %v389 = vadd.f32 0.0, %v388
  %v390 = vpop.f32.mrb[0].mxu0
  %v391 = vadd.f32 0.0, %v390
  %v392 = vpop.f32.mrb[0].mxu0
  %v393 = vadd.f32 0.0, %v392
  %v394 = vpop.f32.mrb[0].mxu0
  %v395 = vadd.f32 0.0, %v394
  %396 = vmatprep.mubr.bf16.mxu0 0
  %397 = vmatmul.mubr.bf16.gmra.mrb[0].mxu0 %v144
  %v398 = vpop.f32.mrb[0].mxu0
  %v399 = vadd.f32 0.0, %v398
  %v400 = vpop.f32.mrb[0].mxu0
  %v401 = vadd.f32 0.0, %v400
  %v402 = vpop.f32.mrb[0].mxu0
  %v403 = vadd.f32 0.0, %v402
  %v404 = vpop.f32.mrb[0].mxu0
  %v405 = vadd.f32 0.0, %v404
  %406 = vmatprep.mubr.bf16.mxu0 0
  %407 = vmatmul.mubr.bf16.gmra.mrb[0].mxu0 %v145
  %v408 = vpop.f32.mrb[0].mxu0
  %v409 = vadd.f32 0.0, %v408
  %v410 = vpop.f32.mrb[0].mxu0
  %v411 = vadd.f32 0.0, %v410
  %v412 = vpop.f32.mrb[0].mxu0
  %v413 = vadd.f32 0.0, %v412
  %v414 = vpop.f32.mrb[0].mxu0
  %v415 = vadd.f32 0.0, %v414
  %416 = vmatprep.mubr.bf16.mxu0 0
  %417 = vmatmul.mubr.bf16.gmra.mrb[0].mxu0 %v146
  %v418 = vpop.f32.mrb[0].mxu0
  %v419 = vadd.f32 0.0, %v418
  %v420 = vpop.f32.mrb[0].mxu0
  %v421 = vadd.f32 0.0, %v420
  %v422 = vpop.f32.mrb[0].mxu0
  %v423 = vadd.f32 0.0, %v422
  %v424 = vpop.f32.mrb[0].mxu0
  %v425 = vadd.f32 0.0, %v424
  %426 = vmatprep.mubr.bf16.mxu0 0
  %427 = vmatmul.mubr.bf16.gmra.mrb[0].mxu0 %v147
  %v428 = vpop.f32.mrb[0].mxu0
  %v429 = vadd.f32 0.0, %v428
  %v430 = vpop.f32.mrb[0].mxu0
  %v431 = vadd.f32 0.0, %v430
  %v432 = vpop.f32.mrb[0].mxu0
  %v433 = vadd.f32 0.0, %v432
  %v434 = vpop.f32.mrb[0].mxu0
  %v435 = vadd.f32 0.0, %v434
  %436 = vdwg.mxu0
  %v437 = vpack.c.bf16 %v283, %v279
  %v438 = vpack.c.bf16 %v293, %v289
  %v439 = vpack.c.bf16 %v303, %v299
  %v440 = vpack.c.bf16 %v313, %v309
  %v441 = vpack.c.bf16 %v323, %v319
  %v442 = vpack.c.bf16 %v333, %v329
  %v443 = vpack.c.bf16 %v343, %v339
  %v444 = vpack.c.bf16 %v353, %v349
  %v445 = vpack.c.bf16 %v363, %v359
  %v446 = vpack.c.bf16 %v373, %v369
  %v447 = vpack.c.bf16 %v383, %v379
  %v448 = vpack.c.bf16 %v393, %v389
  %v449 = vpack.c.bf16 %v403, %v399
  %v450 = vpack.c.bf16 %v413, %v409
  %v451 = vpack.c.bf16 %v423, %v419
  %v452 = vpack.c.bf16 %v433, %v429
  %v469 = vunpack.c.l.b16 %v437
  %v470 = vunpack.c.h.b16 %v437
  %v471 = vunpack.c.l.b16 %v438
  %v472 = vunpack.c.h.b16 %v438
  %v473 = vunpack.c.l.b16 %v439
  %v474 = vunpack.c.h.b16 %v439
  %v475 = vunpack.c.l.b16 %v440
  %v476 = vunpack.c.h.b16 %v440
  %v477 = vunpack.c.l.b16 %v441
  %v478 = vunpack.c.h.b16 %v441
  %v479 = vunpack.c.l.b16 %v442
  %v480 = vunpack.c.h.b16 %v442
  %v481 = vunpack.c.l.b16 %v443
  %v482 = vunpack.c.h.b16 %v443
  %v483 = vunpack.c.l.b16 %v444
  %v484 = vunpack.c.h.b16 %v444
  %v485 = vunpack.c.l.b16 %v445
  %v486 = vunpack.c.h.b16 %v445
  %v487 = vunpack.c.l.b16 %v446
  %v488 = vunpack.c.h.b16 %v446
  %v489 = vunpack.c.l.b16 %v447
  %v490 = vunpack.c.h.b16 %v447
  %v491 = vunpack.c.l.b16 %v448
  %v492 = vunpack.c.h.b16 %v448
  %v493 = vunpack.c.l.b16 %v449
  %v494 = vunpack.c.h.b16 %v449
  %v495 = vunpack.c.l.b16 %v450
  %v496 = vunpack.c.h.b16 %v450
  %v497 = vunpack.c.l.b16 %v451
  %v498 = vunpack.c.h.b16 %v451
  %v499 = vunpack.c.l.b16 %v452
  %v500 = vunpack.c.h.b16 %v452
  %v501 = vpack.c.b16 %v469, %v469
  %v502 = vpack.c.b16 %v470, %v470
  %v503 = vpack.c.b16 %v471, %v471
  %v504 = vpack.c.b16 %v472, %v472
  %v505 = vpack.c.b16 %v473, %v473
  %v506 = vpack.c.b16 %v474, %v474
  %v507 = vpack.c.b16 %v475, %v475
  %v508 = vpack.c.b16 %v476, %v476
  %v509 = vpack.c.b16 %v477, %v477
  %v510 = vpack.c.b16 %v478, %v478
  %v511 = vpack.c.b16 %v479, %v479
  %v512 = vpack.c.b16 %v480, %v480
  %v513 = vpack.c.b16 %v481, %v481
  %v514 = vpack.c.b16 %v482, %v482
  %v515 = vpack.c.b16 %v483, %v483
  %v516 = vpack.c.b16 %v484, %v484
  %v517 = vpack.c.b16 %v485, %v485
  %v518 = vpack.c.b16 %v486, %v486
  %v519 = vpack.c.b16 %v487, %v487
  %v520 = vpack.c.b16 %v488, %v488
  %v521 = vpack.c.b16 %v489, %v489
  %v522 = vpack.c.b16 %v490, %v490
  %v523 = vpack.c.b16 %v491, %v491
  %v524 = vpack.c.b16 %v492, %v492
  %v525 = vpack.c.b16 %v493, %v493
  %v526 = vpack.c.b16 %v494, %v494
  %v527 = vpack.c.b16 %v495, %v495
  %v528 = vpack.c.b16 %v496, %v496
  %v529 = vpack.c.b16 %v497, %v497
  %v530 = vpack.c.b16 %v498, %v498
  %v531 = vpack.c.b16 %v499, %v499
  %v532 = vpack.c.b16 %v500, %v500
  %565 = vst [vmem:[%s4] sm:$0xf] %v501
  %566 = vst [vmem:[%s4 + $0x4] sm:$0xf] %v502
  %567 = vst [vmem:[%s4 + $0x8] sm:$0xf] %v503
  %568 = vst [vmem:[%s4 + $0xc] sm:$0xf] %v504
  %569 = vst [vmem:[%s4 + $0x10] sm:$0xf] %v505
  %570 = vst [vmem:[%s4 + $0x14] sm:$0xf] %v506
  %571 = vst [vmem:[%s4 + $0x18] sm:$0xf] %v507
  %572 = vst [vmem:[%s4 + $0x1c] sm:$0xf] %v508
  %573 = vst [vmem:[%s4 + $0x20] sm:$0xf] %v509
  %574 = vst [vmem:[%s4 + $0x24] sm:$0xf] %v510
  %575 = vst [vmem:[%s4 + $0x28] sm:$0xf] %v511
  %576 = vst [vmem:[%s4 + $0x2c] sm:$0xf] %v512
  %577 = vst [vmem:[%s4 + $0x30] sm:$0xf] %v513
  %578 = vst [vmem:[%s4 + $0x34] sm:$0xf] %v514
  %579 = vst [vmem:[%s4 + $0x38] sm:$0xf] %v515
  %580 = vst [vmem:[%s4 + $0x3c] sm:$0xf] %v516
  %581 = vst [vmem:[%s4 + $0x40] sm:$0xf] %v517
  %582 = vst [vmem:[%s4 + $0x44] sm:$0xf] %v518
  %583 = vst [vmem:[%s4 + $0x48] sm:$0xf] %v519
  %584 = vst [vmem:[%s4 + $0x4c] sm:$0xf] %v520
  %585 = vst [vmem:[%s4 + $0x50] sm:$0xf] %v521
  %586 = vst [vmem:[%s4 + $0x54] sm:$0xf] %v522
  %587 = vst [vmem:[%s4 + $0x58] sm:$0xf] %v523
  %588 = vst [vmem:[%s4 + $0x5c] sm:$0xf] %v524
  %589 = vst [vmem:[%s4 + $0x60] sm:$0xf] %v525
  %590 = vst [vmem:[%s4 + $0x64] sm:$0xf] %v526
  %591 = vst [vmem:[%s4 + $0x68] sm:$0xf] %v527
  %592 = vst [vmem:[%s4 + $0x6c] sm:$0xf] %v528
  %593 = vst [vmem:[%s4 + $0x70] sm:$0xf] %v529
  %594 = vst [vmem:[%s4 + $0x74] sm:$0xf] %v530
  %595 = vst [vmem:[%s4 + $0x78] sm:$0xf] %v531
  %596 = vst [vmem:[%s4 + $0x7c] sm:$0xf] %v532
  %v597 = vpack.c.bf16 %v285, %v281
  %v598 = vpack.c.bf16 %v295, %v291
  %v599 = vpack.c.bf16 %v305, %v301
  %v600 = vpack.c.bf16 %v315, %v311
  %v601 = vpack.c.bf16 %v325, %v321
  %v602 = vpack.c.bf16 %v335, %v331
  %v603 = vpack.c.bf16 %v345, %v341
  %v604 = vpack.c.bf16 %v355, %v351
  %v605 = vpack.c.bf16 %v365, %v361
  %v606 = vpack.c.bf16 %v375, %v371
  %v607 = vpack.c.bf16 %v385, %v381
  %v608 = vpack.c.bf16 %v395, %v391
  %v609 = vpack.c.bf16 %v405, %v401
  %v610 = vpack.c.bf16 %v415, %v411
  %v611 = vpack.c.bf16 %v425, %v421
  %v612 = vpack.c.bf16 %v435, %v431
  %v629 = vunpack.c.l.b16 %v597
  %v630 = vunpack.c.h.b16 %v597
  %v631 = vunpack.c.l.b16 %v598
  %v632 = vunpack.c.h.b16 %v598
  %v633 = vunpack.c.l.b16 %v599
  %v634 = vunpack.c.h.b16 %v599
  %v635 = vunpack.c.l.b16 %v600
  %v636 = vunpack.c.h.b16 %v600
  %v637 = vunpack.c.l.b16 %v601
  %v638 = vunpack.c.h.b16 %v601
  %v639 = vunpack.c.l.b16 %v602
  %v640 = vunpack.c.h.b16 %v602
  %v641 = vunpack.c.l.b16 %v603
  %v642 = vunpack.c.h.b16 %v603
  %v643 = vunpack.c.l.b16 %v604
  %v644 = vunpack.c.h.b16 %v604
  %v645 = vunpack.c.l.b16 %v605
  %v646 = vunpack.c.h.b16 %v605
  %v647 = vunpack.c.l.b16 %v606
  %v648 = vunpack.c.h.b16 %v606
  %v649 = vunpack.c.l.b16 %v607
  %v650 = vunpack.c.h.b16 %v607
  %v651 = vunpack.c.l.b16 %v608
  %v652 = vunpack.c.h.b16 %v608
  %v653 = vunpack.c.l.b16 %v609
  %v654 = vunpack.c.h.b16 %v609
  %v655 = vunpack.c.l.b16 %v610
  %v656 = vunpack.c.h.b16 %v610
  %v657 = vunpack.c.l.b16 %v611
  %v658 = vunpack.c.h.b16 %v611
  %v659 = vunpack.c.l.b16 %v612
  %v660 = vunpack.c.h.b16 %v612
  %v661 = vpack.c.b16 %v629, %v629
  %v662 = vpack.c.b16 %v630, %v630
  %v663 = vpack.c.b16 %v631, %v631
  %v664 = vpack.c.b16 %v632, %v632
  %v665 = vpack.c.b16 %v633, %v633
  %v666 = vpack.c.b16 %v634, %v634
  %v667 = vpack.c.b16 %v635, %v635
  %v668 = vpack.c.b16 %v636, %v636
  %v669 = vpack.c.b16 %v637, %v637
  %v670 = vpack.c.b16 %v638, %v638
  %v671 = vpack.c.b16 %v639, %v639
  %v672 = vpack.c.b16 %v640, %v640
  %v673 = vpack.c.b16 %v641, %v641
  %v674 = vpack.c.b16 %v642, %v642
  %v675 = vpack.c.b16 %v643, %v643
  %v676 = vpack.c.b16 %v644, %v644
  %v677 = vpack.c.b16 %v645, %v645
  %v678 = vpack.c.b16 %v646, %v646
  %v679 = vpack.c.b16 %v647, %v647
  %v680 = vpack.c.b16 %v648, %v648
  %v681 = vpack.c.b16 %v649, %v649
  %v682 = vpack.c.b16 %v650, %v650
  %v683 = vpack.c.b16 %v651, %v651
  %v684 = vpack.c.b16 %v652, %v652
  %v685 = vpack.c.b16 %v653, %v653
  %v686 = vpack.c.b16 %v654, %v654
  %v687 = vpack.c.b16 %v655, %v655
  %v688 = vpack.c.b16 %v656, %v656
  %v689 = vpack.c.b16 %v657, %v657
  %v690 = vpack.c.b16 %v658, %v658
  %v691 = vpack.c.b16 %v659, %v659
  %v692 = vpack.c.b16 %v660, %v660
  %s725 = scalar_lea.vmem %s4, 128
  %726 = vst [vmem:[%s725] sm:$0xf] %v661
  %727 = vst [vmem:[%s725 + $0x4] sm:$0xf] %v662
  %728 = vst [vmem:[%s725 + $0x8] sm:$0xf] %v663
  %729 = vst [vmem:[%s725 + $0xc] sm:$0xf] %v664
  %730 = vst [vmem:[%s725 + $0x10] sm:$0xf] %v665
  %731 = vst [vmem:[%s725 + $0x14] sm:$0xf] %v666
  %732 = vst [vmem:[%s725 + $0x18] sm:$0xf] %v667
  %733 = vst [vmem:[%s725 + $0x1c] sm:$0xf] %v668
  %734 = vst [vmem:[%s725 + $0x20] sm:$0xf] %v669
  %735 = vst [vmem:[%s725 + $0x24] sm:$0xf] %v670
  %736 = vst [vmem:[%s725 + $0x28] sm:$0xf] %v671
  %737 = vst [vmem:[%s725 + $0x2c] sm:$0xf] %v672
  %738 = vst [vmem:[%s725 + $0x30] sm:$0xf] %v673
  %739 = vst [vmem:[%s725 + $0x34] sm:$0xf] %v674
  %740 = vst [vmem:[%s725 + $0x38] sm:$0xf] %v675
  %741 = vst [vmem:[%s725 + $0x3c] sm:$0xf] %v676
  %742 = vst [vmem:[%s725 + $0x40] sm:$0xf] %v677
  %743 = vst [vmem:[%s725 + $0x44] sm:$0xf] %v678
  %744 = vst [vmem:[%s725 + $0x48] sm:$0xf] %v679
  %745 = vst [vmem:[%s725 + $0x4c] sm:$0xf] %v680
  %746 = vst [vmem:[%s725 + $0x50] sm:$0xf] %v681
  %747 = vst [vmem:[%s725 + $0x54] sm:$0xf] %v682
  %748 = vst [vmem:[%s725 + $0x58] sm:$0xf] %v683
  %749 = vst [vmem:[%s725 + $0x5c] sm:$0xf] %v684
  %750 = vst [vmem:[%s725 + $0x60] sm:$0xf] %v685
  %751 = vst [vmem:[%s725 + $0x64] sm:$0xf] %v686
  %752 = vst [vmem:[%s725 + $0x68] sm:$0xf] %v687
  %753 = vst [vmem:[%s725 + $0x6c] sm:$0xf] %v688
  %754 = vst [vmem:[%s725 + $0x70] sm:$0xf] %v689
  %755 = vst [vmem:[%s725 + $0x74] sm:$0xf] %v690
  %756 = vst [vmem:[%s725 + $0x78] sm:$0xf] %v691
  %757 = vst [vmem:[%s725 + $0x7c] sm:$0xf] %v692
  %v758 = vld [vmem:[%s3] sm:$0xf]
  %v759 = vld [vmem:[%s3 + $0x4] sm:$0xf]
  %v760 = vld [vmem:[%s3 + $0x8] sm:$0xf]
  %v761 = vld [vmem:[%s3 + $0xc] sm:$0xf]
  %v762 = vld [vmem:[%s3 + $0x10] sm:$0xf]
  %v763 = vld [vmem:[%s3 + $0x14] sm:$0xf]
  %v764 = vld [vmem:[%s3 + $0x18] sm:$0xf]
  %v765 = vld [vmem:[%s3 + $0x1c] sm:$0xf]
  %v766 = vld [vmem:[%s3 + $0x20] sm:$0xf]
  %v767 = vld [vmem:[%s3 + $0x24] sm:$0xf]
  %v768 = vld [vmem:[%s3 + $0x28] sm:$0xf]
  %v769 = vld [vmem:[%s3 + $0x2c] sm:$0xf]
  %v770 = vld [vmem:[%s3 + $0x30] sm:$0xf]
  %v771 = vld [vmem:[%s3 + $0x34] sm:$0xf]
  %v772 = vld [vmem:[%s3 + $0x38] sm:$0xf]
  %v773 = vld [vmem:[%s3 + $0x3c] sm:$0xf]
  %v774 = vld [vmem:[%s1] sm:$0xff]
  %v775 = vld [vmem:[%s1 + $0x8] sm:$0xff]
  %v776 = vld [vmem:[%s1 + $0x10] sm:$0xff]
  %v777 = vld [vmem:[%s1 + $0x18] sm:$0xff]
  %v778 = vld [vmem:[%s1 + $0x20] sm:$0xff]
  %v779 = vld [vmem:[%s1 + $0x28] sm:$0xff]
  %v780 = vld [vmem:[%s1 + $0x30] sm:$0xff]
  %v781 = vld [vmem:[%s1 + $0x38] sm:$0xff]
  %v782 = vld [vmem:[%s1 + $0x40] sm:$0xff]
  %v783 = vld [vmem:[%s1 + $0x48] sm:$0xff]
  %v784 = vld [vmem:[%s1 + $0x50] sm:$0xff]
  %v785 = vld [vmem:[%s1 + $0x58] sm:$0xff]
  %v786 = vld [vmem:[%s1 + $0x60] sm:$0xff]
  %v787 = vld [vmem:[%s1 + $0x68] sm:$0xff]
  %v788 = vld [vmem:[%s1 + $0x70] sm:$0xff]
  %v789 = vld [vmem:[%s1 + $0x78] sm:$0xff]
  %v806 = vunpack.c.l.b16 %v758
  %v807 = vunpack.c.l.b16 %v759
  %v808 = vunpack.c.l.b16 %v760
  %v809 = vunpack.c.l.b16 %v761
  %v810 = vunpack.c.l.b16 %v762
  %v811 = vunpack.c.l.b16 %v763
  %v812 = vunpack.c.l.b16 %v764
  %v813 = vunpack.c.l.b16 %v765
  %v814 = vunpack.c.l.b16 %v766
  %v815 = vunpack.c.l.b16 %v767
  %v816 = vunpack.c.l.b16 %v768
  %v817 = vunpack.c.l.b16 %v769
  %v818 = vunpack.c.l.b16 %v770
  %v819 = vunpack.c.l.b16 %v771
  %v820 = vunpack.c.l.b16 %v772
  %v821 = vunpack.c.l.b16 %v773
  %v822 = vpack.c.b16 %v807, %v806
  %v823 = vpack.c.b16 %v809, %v808
  %v824 = vpack.c.b16 %v811, %v810
  %v825 = vpack.c.b16 %v813, %v812
  %v826 = vpack.c.b16 %v815, %v814
  %v827 = vpack.c.b16 %v817, %v816
  %v828 = vpack.c.b16 %v819, %v818
  %v829 = vpack.c.b16 %v821, %v820
  %v854 = vunpack.c.l.b16 %v774
  %v855 = vunpack.c.h.b16 %v774
  %v856 = vunpack.c.l.b16 %v775
  %v857 = vunpack.c.h.b16 %v775
  %v858 = vunpack.c.l.b16 %v776
  %v859 = vunpack.c.h.b16 %v776
  %v860 = vunpack.c.l.b16 %v777
  %v861 = vunpack.c.h.b16 %v777
  %v862 = vunpack.c.l.b16 %v778
  %v863 = vunpack.c.h.b16 %v778
  %v864 = vunpack.c.l.b16 %v779
  %v865 = vunpack.c.h.b16 %v779
  %v866 = vunpack.c.l.b16 %v780
  %v867 = vunpack.c.h.b16 %v780
  %v868 = vunpack.c.l.b16 %v781
  %v869 = vunpack.c.h.b16 %v781
  %v870 = vunpack.c.l.b16 %v782
  %v871 = vunpack.c.h.b16 %v782
  %v872 = vunpack.c.l.b16 %v783
  %v873 = vunpack.c.h.b16 %v783
  %v874 = vunpack.c.l.b16 %v784
  %v875 = vunpack.c.h.b16 %v784
  %v876 = vunpack.c.l.b16 %v785
  %v877 = vunpack.c.h.b16 %v785
  %v878 = vunpack.c.l.b16 %v786
  %v879 = vunpack.c.h.b16 %v786
  %v880 = vunpack.c.l.b16 %v787
  %v881 = vunpack.c.h.b16 %v787
  %v882 = vunpack.c.l.b16 %v788
  %v883 = vunpack.c.h.b16 %v788
  %v884 = vunpack.c.l.b16 %v789
  %v885 = vunpack.c.h.b16 %v789
  %v886 = vpack.c.b16 %v856, %v854
  %v887 = vpack.c.b16 %v857, %v855
  %v888 = vpack.c.b16 %v860, %v858
  %v889 = vpack.c.b16 %v861, %v859
  %v890 = vpack.c.b16 %v864, %v862
  %v891 = vpack.c.b16 %v865, %v863
  %v892 = vpack.c.b16 %v868, %v866
  %v893 = vpack.c.b16 %v869, %v867
  %v894 = vpack.c.b16 %v872, %v870
  %v895 = vpack.c.b16 %v873, %v871
  %v896 = vpack.c.b16 %v876, %v874
  %v897 = vpack.c.b16 %v877, %v875
  %v898 = vpack.c.b16 %v880, %v878
  %v899 = vpack.c.b16 %v881, %v879
  %v900 = vpack.c.b16 %v884, %v882
  %v901 = vpack.c.b16 %v885, %v883
  %918 = vmatprep.subr.bf16.mxu0 %v887
  %919 = vmatpush1.bf16.msra.mxu0 %v886
  %920 = vmatprep.subr.bf16.mxu0 %v889
  %921 = vmatpush1.bf16.msra.mxu0 %v888
  %922 = vmatprep.subr.bf16.mxu0 %v891
  %923 = vmatpush1.bf16.msra.mxu0 %v890
  %924 = vmatprep.subr.bf16.mxu0 %v893
  %925 = vmatpush1.bf16.msra.mxu0 %v892
  %926 = vmatprep.subr.bf16.mxu0 %v895
  %927 = vmatpush1.bf16.msra.mxu0 %v894
  %928 = vmatprep.subr.bf16.mxu0 %v897
  %929 = vmatpush1.bf16.msra.mxu0 %v896
  %930 = vmatprep.subr.bf16.mxu0 %v899
  %931 = vmatpush1.bf16.msra.mxu0 %v898
  %932 = vmatprep.subr.bf16.mxu0 %v901
  %933 = vmatpush1.bf16.msra.mxu0 %v900
  %934 = vmatprep.subr.bf16.mxu0 0
  %935 = vmatpush1.bf16.msra.mxu0 0
  %936 = vmatprep.subr.bf16.mxu0 0
  %937 = vmatpush1.bf16.msra.mxu0 0
  %938 = vmatprep.subr.bf16.mxu0 0
  %939 = vmatpush1.bf16.msra.mxu0 0
  %940 = vmatprep.subr.bf16.mxu0 0
  %941 = vmatpush1.bf16.msra.mxu0 0
  %942 = vmatprep.subr.bf16.mxu0 0
  %943 = vmatpush1.bf16.msra.mxu0 0
  %944 = vmatprep.subr.bf16.mxu0 0
  %945 = vmatpush1.bf16.msra.mxu0 0
  %946 = vmatprep.subr.bf16.mxu0 0
  %947 = vmatpush1.bf16.msra.mxu0 0
  %948 = vmatprep.subr.bf16.mxu0 0
  %949 = vmatpush1.bf16.msra.mxu0 0
  %950 = vmatprep.mubr.bf16.mxu0 0
  %951 = vmatmul.mubr.bf16.gmra.mrb[0].mxu0 %v822
  %v952 = vpop.f32.mrb[0].mxu0
  %v953 = vadd.f32 0.0, %v952
  %v954 = vpop.f32.mrb[0].mxu0
  %v955 = vadd.f32 0.0, %v954
  %v956 = vpop.f32.mrb[0].mxu0
  %v957 = vadd.f32 0.0, %v956
  %v958 = vpop.f32.mrb[0].mxu0
  %v959 = vadd.f32 0.0, %v958
  %960 = vmatprep.mubr.bf16.mxu0 0
  %961 = vmatmul.mubr.bf16.gmra.mrb[0].mxu0 %v823
  %v962 = vpop.f32.mrb[0].mxu0
  %v963 = vadd.f32 0.0, %v962
  %v964 = vpop.f32.mrb[0].mxu0
  %v965 = vadd.f32 0.0, %v964
  %v966 = vpop.f32.mrb[0].mxu0
  %v967 = vadd.f32 0.0, %v966
  %v968 = vpop.f32.mrb[0].mxu0
  %v969 = vadd.f32 0.0, %v968
  %970 = vmatprep.mubr.bf16.mxu0 0
  %971 = vmatmul.mubr.bf16.gmra.mrb[0].mxu0 %v824
  %v972 = vpop.f32.mrb[0].mxu0
  %v973 = vadd.f32 0.0, %v972
  %v974 = vpop.f32.mrb[0].mxu0
  %v975 = vadd.f32 0.0, %v974
  %v976 = vpop.f32.mrb[0].mxu0
  %v977 = vadd.f32 0.0, %v976
  %v978 = vpop.f32.mrb[0].mxu0
  %v979 = vadd.f32 0.0, %v978
  %980 = vmatprep.mubr.bf16.mxu0 0
  %981 = vmatmul.mubr.bf16.gmra.mrb[0].mxu0 %v825
  %v982 = vpop.f32.mrb[0].mxu0
  %v983 = vadd.f32 0.0, %v982
  %v984 = vpop.f32.mrb[0].mxu0
  %v985 = vadd.f32 0.0, %v984
  %v986 = vpop.f32.mrb[0].mxu0
  %v987 = vadd.f32 0.0, %v986
  %v988 = vpop.f32.mrb[0].mxu0
  %v989 = vadd.f32 0.0, %v988
  %990 = vmatprep.mubr.bf16.mxu0 0
  %991 = vmatmul.mubr.bf16.gmra.mrb[0].mxu0 %v826
  %v992 = vpop.f32.mrb[0].mxu0
  %v993 = vadd.f32 0.0, %v992
  %v994 = vpop.f32.mrb[0].mxu0
  %v995 = vadd.f32 0.0, %v994
  %v996 = vpop.f32.mrb[0].mxu0
  %v997 = vadd.f32 0.0, %v996
  %v998 = vpop.f32.mrb[0].mxu0
  %v999 = vadd.f32 0.0, %v998
  %1000 = vmatprep.mubr.bf16.mxu0 0
  %1001 = vmatmul.mubr.bf16.gmra.mrb[0].mxu0 %v827
  %v1002 = vpop.f32.mrb[0].mxu0
  %v1003 = vadd.f32 0.0, %v1002
  %v1004 = vpop.f32.mrb[0].mxu0
  %v1005 = vadd.f32 0.0, %v1004
  %v1006 = vpop.f32.mrb[0].mxu0
  %v1007 = vadd.f32 0.0, %v1006
  %v1008 = vpop.f32.mrb[0].mxu0
  %v1009 = vadd.f32 0.0, %v1008
  %1010 = vmatprep.mubr.bf16.mxu0 0
  %1011 = vmatmul.mubr.bf16.gmra.mrb[0].mxu0 %v828
  %v1012 = vpop.f32.mrb[0].mxu0
  %v1013 = vadd.f32 0.0, %v1012
  %v1014 = vpop.f32.mrb[0].mxu0
  %v1015 = vadd.f32 0.0, %v1014
  %v1016 = vpop.f32.mrb[0].mxu0
  %v1017 = vadd.f32 0.0, %v1016
  %v1018 = vpop.f32.mrb[0].mxu0
  %v1019 = vadd.f32 0.0, %v1018
  %1020 = vmatprep.mubr.bf16.mxu0 0
  %1021 = vmatmul.mubr.bf16.gmra.mrb[0].mxu0 %v829
  %v1022 = vpop.f32.mrb[0].mxu0
  %v1023 = vadd.f32 0.0, %v1022
  %v1024 = vpop.f32.mrb[0].mxu0
  %v1025 = vadd.f32 0.0, %v1024
  %v1026 = vpop.f32.mrb[0].mxu0
  %v1027 = vadd.f32 0.0, %v1026
  %v1028 = vpop.f32.mrb[0].mxu0
  %v1029 = vadd.f32 0.0, %v1028
  %1030 = vdwg.mxu0
  %v1031 = vpack.c.bf16 %v957, %v953
  %v1032 = vpack.c.bf16 %v959, %v955
  %v1033 = vpack.c.bf16 %v967, %v963
  %v1034 = vpack.c.bf16 %v969, %v965
  %v1035 = vpack.c.bf16 %v977, %v973
  %v1036 = vpack.c.bf16 %v979, %v975
  %v1037 = vpack.c.bf16 %v987, %v983
  %v1038 = vpack.c.bf16 %v989, %v985
  %v1039 = vpack.c.bf16 %v997, %v993
  %v1040 = vpack.c.bf16 %v999, %v995
  %v1041 = vpack.c.bf16 %v1007, %v1003
  %v1042 = vpack.c.bf16 %v1009, %v1005
  %v1043 = vpack.c.bf16 %v1017, %v1013
  %v1044 = vpack.c.bf16 %v1019, %v1015
  %v1045 = vpack.c.bf16 %v1027, %v1023
  %v1046 = vpack.c.bf16 %v1029, %v1025
  %v1063 = vunpack.c.l.b16 %v1031
  %v1064 = vunpack.c.l.b16 %v1032
  %v1065 = vunpack.c.h.b16 %v1031
  %v1066 = vunpack.c.h.b16 %v1032
  %v1067 = vunpack.c.l.b16 %v1033
  %v1068 = vunpack.c.l.b16 %v1034
  %v1069 = vunpack.c.h.b16 %v1033
  %v1070 = vunpack.c.h.b16 %v1034
  %v1071 = vunpack.c.l.b16 %v1035
  %v1072 = vunpack.c.l.b16 %v1036
  %v1073 = vunpack.c.h.b16 %v1035
  %v1074 = vunpack.c.h.b16 %v1036
  %v1075 = vunpack.c.l.b16 %v1037
  %v1076 = vunpack.c.l.b16 %v1038
  %v1077 = vunpack.c.h.b16 %v1037
  %v1078 = vunpack.c.h.b16 %v1038
  %v1079 = vunpack.c.l.b16 %v1039
  %v1080 = vunpack.c.l.b16 %v1040
  %v1081 = vunpack.c.h.b16 %v1039
  %v1082 = vunpack.c.h.b16 %v1040
  %v1083 = vunpack.c.l.b16 %v1041
  %v1084 = vunpack.c.l.b16 %v1042
  %v1085 = vunpack.c.h.b16 %v1041
  %v1086 = vunpack.c.h.b16 %v1042
  %v1087 = vunpack.c.l.b16 %v1043
  %v1088 = vunpack.c.l.b16 %v1044
  %v1089 = vunpack.c.h.b16 %v1043
  %v1090 = vunpack.c.h.b16 %v1044
  %v1091 = vunpack.c.l.b16 %v1045
  %v1092 = vunpack.c.l.b16 %v1046
  %v1093 = vunpack.c.h.b16 %v1045
  %v1094 = vunpack.c.h.b16 %v1046
  %v1095 = vpack.c.b16 %v1064, %v1063
  %v1096 = vpack.c.b16 %v1066, %v1065
  %v1097 = vpack.c.b16 %v1068, %v1067
  %v1098 = vpack.c.b16 %v1070, %v1069
  %v1099 = vpack.c.b16 %v1072, %v1071
  %v1100 = vpack.c.b16 %v1074, %v1073
  %v1101 = vpack.c.b16 %v1076, %v1075
  %v1102 = vpack.c.b16 %v1078, %v1077
  %v1103 = vpack.c.b16 %v1080, %v1079
  %v1104 = vpack.c.b16 %v1082, %v1081
  %v1105 = vpack.c.b16 %v1084, %v1083
  %v1106 = vpack.c.b16 %v1086, %v1085
  %v1107 = vpack.c.b16 %v1088, %v1087
  %v1108 = vpack.c.b16 %v1090, %v1089
  %v1109 = vpack.c.b16 %v1092, %v1091
  %v1110 = vpack.c.b16 %v1094, %v1093
  %1127 = vst [vmem:[%s5] sm:$0xff] %v1095
  %1128 = vst [vmem:[%s5 + $0x8] sm:$0xff] %v1096
  %1129 = vst [vmem:[%s5 + $0x10] sm:$0xff] %v1097
  %1130 = vst [vmem:[%s5 + $0x18] sm:$0xff] %v1098
  %1131 = vst [vmem:[%s5 + $0x20] sm:$0xff] %v1099
  %1132 = vst [vmem:[%s5 + $0x28] sm:$0xff] %v1100
  %1133 = vst [vmem:[%s5 + $0x30] sm:$0xff] %v1101
  %1134 = vst [vmem:[%s5 + $0x38] sm:$0xff] %v1102
  %1135 = vst [vmem:[%s5 + $0x40] sm:$0xff] %v1103
  %1136 = vst [vmem:[%s5 + $0x48] sm:$0xff] %v1104
  %1137 = vst [vmem:[%s5 + $0x50] sm:$0xff] %v1105
  %1138 = vst [vmem:[%s5 + $0x58] sm:$0xff] %v1106
  %1139 = vst [vmem:[%s5 + $0x60] sm:$0xff] %v1107
  %1140 = vst [vmem:[%s5 + $0x68] sm:$0xff] %v1108
  %1141 = vst [vmem:[%s5 + $0x70] sm:$0xff] %v1109
  %1142 = vst [vmem:[%s5 + $0x78] sm:$0xff] %v1110
  // Predicated region
  $region18: #{relation_tagger_forward.2} parent=0 // pred_check
    _
  $region19: #{relation_tagger_forward.2} parent=0 // pred_check_branch
    %1144 = sbr.rel (0) target = $region21
  $region20: #{relation_tagger_forward.2} parent=0 // pred_region
    _
  $region21: #{relation_tagger_forward.2} parent=0 // pred_fallthru
    _
  // Predicated region
  $region22: #{relation_tagger_forward.2} parent=0 // pred_check
    _
  $region23: #{relation_tagger_forward.2} parent=0 // pred_check_branch
    %1146 = sbr.rel (0) target = $region25
  $region24: #{relation_tagger_forward.2} parent=0 // pred_region
    _
  $region25: #{relation_tagger_forward.2} parent=0 // pred_fallthru
    _
  // Predicated region
  $region26: #{relation_tagger_forward.2} parent=0 // pred_check
    _
  $region27: #{relation_tagger_forward.2} parent=0 // pred_check_branch
    %1148 = sbr.rel (0) target = $region29
  $region28: #{relation_tagger_forward.2} parent=0 // pred_region
    _
  $region29: #{relation_tagger_forward.2} parent=0 // pred_fallthru
    _
  // Predicated region
  $region30: #{relation_tagger_forward.2} parent=0 // pred_check
    _
  $region31: #{relation_tagger_forward.2} parent=0 // pred_check_branch
    %1150 = sbr.rel (0) target = $region33
  $region32: #{relation_tagger_forward.2} parent=0 // pred_region
    _
  $region33: #{relation_tagger_forward.2} parent=0 // pred_fallthru
    _

// kernel: relation_tagger_forward.3
$region0: #{relation_tagger_forward.3}
  #allocation0 [shape = 'u32[]', space=smem, size = 0x4, offset = 0x4, fixed_abs, tag = 'smem constant byte address 0x4 - core index']
  #allocation1 [shape = 'u32[144,128]{1,0:T(1,128)}', space=vmem, size = 0x12000, scoped, tag = 'internal scratch']
  %s0 = inlined_call_operand.vmem [shape: bf16[2,1024,128], index: 0, kind: input, shape index: {}]
  %s1 = inlined_call_operand.vmem [shape: bf16[128,256], index: 1, kind: input, shape index: {}]
  %s2 = inlined_call_operand.vmem [shape: bf16[2,1024,256], index: 2, kind: output, shape index: {}]
  %s3 = sld [smem:[#allocation0]]
  $region18: #{relation_tagger_forward.3} parent=0
    _
  %s5 = ssub.s32 1, %s3
  %s6 = scalar_select 0, %s5, %s3
  // Predicated region
  $region2: #{relation_tagger_forward.3} parent=0 // pred_check
    _
  $region3: #{relation_tagger_forward.3} parent=0 // pred_check_branch
    %8 = sbr.rel (0) target = $region5
  $region4: #{relation_tagger_forward.3} parent=0 // pred_region
    _
  $region5: #{relation_tagger_forward.3} parent=0 // pred_fallthru
    _
  // Predicated region
  $region6: #{relation_tagger_forward.3} parent=0 // pred_check
    _
  $region7: #{relation_tagger_forward.3} parent=0 // pred_check_branch
    %10 = sbr.rel (0) target = $region9
  $region8: #{relation_tagger_forward.3} parent=0 // pred_region
    _
  $region9: #{relation_tagger_forward.3} parent=0 // pred_fallthru
    _
  %v12 = vld [vmem:[%s1] sm:$0xff]
  %v13 = vld [vmem:[%s1 + $0x8] sm:$0xff]
  %v14 = vld [vmem:[%s1 + $0x10] sm:$0xff]
  %v15 = vld [vmem:[%s1 + $0x18] sm:$0xff]
  %v16 = vld [vmem:[%s1 + $0x20] sm:$0xff]
  %v17 = vld [vmem:[%s1 + $0x28] sm:$0xff]
  %v18 = vld [vmem:[%s1 + $0x30] sm:$0xff]
  %v19 = vld [vmem:[%s1 + $0x38] sm:$0xff]
  %v20 = vld [vmem:[%s1 + $0x40] sm:$0xff]
  %v21 = vld [vmem:[%s1 + $0x48] sm:$0xff]
  %v22 = vld [vmem:[%s1 + $0x50] sm:$0xff]
  %v23 = vld [vmem:[%s1 + $0x58] sm:$0xff]
  %v24 = vld [vmem:[%s1 + $0x60] sm:$0xff]
  %v25 = vld [vmem:[%s1 + $0x68] sm:$0xff]
  %v26 = vld [vmem:[%s1 + $0x70] sm:$0xff]
  %v27 = vld [vmem:[%s1 + $0x78] sm:$0xff]
  %v28 = vld [vmem:[%s0] sm:$0xf]
  %v29 = vld [vmem:[%s0 + $0x4] sm:$0xf]
  %v30 = vld [vmem:[%s0 + $0x8] sm:$0xf]
  %v31 = vld [vmem:[%s0 + $0xc] sm:$0xf]
  %v32 = vld [vmem:[%s0 + $0x10] sm:$0xf]
  %v33 = vld [vmem:[%s0 + $0x14] sm:$0xf]
  %v34 = vld [vmem:[%s0 + $0x18] sm:$0xf]
  %v35 = vld [vmem:[%s0 + $0x1c] sm:$0xf]
  %v36 = vld [vmem:[%s0 + $0x20] sm:$0xf]
  %v37 = vld [vmem:[%s0 + $0x24] sm:$0xf]
  %v38 = vld [vmem:[%s0 + $0x28] sm:$0xf]
  %v39 = vld [vmem:[%s0 + $0x2c] sm:$0xf]
  %v40 = vld [vmem:[%s0 + $0x30] sm:$0xf]
  %v41 = vld [vmem:[%s0 + $0x34] sm:$0xf]
  %v42 = vld [vmem:[%s0 + $0x38] sm:$0xf]
  %v43 = vld [vmem:[%s0 + $0x3c] sm:$0xf]
  %v44 = vld [vmem:[%s0 + $0x40] sm:$0xf]
  %v45 = vld [vmem:[%s0 + $0x44] sm:$0xf]
  %v46 = vld [vmem:[%s0 + $0x48] sm:$0xf]
  %v47 = vld [vmem:[%s0 + $0x4c] sm:$0xf]
  %v48 = vld [vmem:[%s0 + $0x50] sm:$0xf]
  %v49 = vld [vmem:[%s0 + $0x54] sm:$0xf]
  %v50 = vld [vmem:[%s0 + $0x58] sm:$0xf]
  %v51 = vld [vmem:[%s0 + $0x5c] sm:$0xf]
  %v52 = vld [vmem:[%s0 + $0x60] sm:$0xf]
  %v53 = vld [vmem:[%s0 + $0x64] sm:$0xf]
  %v54 = vld [vmem:[%s0 + $0x68] sm:$0xf]
  %v55 = vld [vmem:[%s0 + $0x6c] sm:$0xf]
  %v56 = vld [vmem:[%s0 + $0x70] sm:$0xf]
  %v57 = vld [vmem:[%s0 + $0x74] sm:$0xf]
  %v58 = vld [vmem:[%s0 + $0x78] sm:$0xf]
  %v59 = vld [vmem:[%s0 + $0x7c] sm:$0xf]
  %v60 = vld [vmem:[%s0 + $0x80] sm:$0xf]
  %v61 = vld [vmem:[%s0 + $0x84] sm:$0xf]
  %v62 = vld [vmem:[%s0 + $0x88] sm:$0xf]
  %v63 = vld [vmem:[%s0 + $0x8c] sm:$0xf]
  %v64 = vld [vmem:[%s0 + $0x90] sm:$0xf]
  %v65 = vld [vmem:[%s0 + $0x94] sm:$0xf]
  %v66 = vld [vmem:[%s0 + $0x98] sm:$0xf]
  %v67 = vld [vmem:[%s0 + $0x9c] sm:$0xf]
  %v68 = vld [vmem:[%s0 + $0xa0] sm:$0xf]
  %v69 = vld [vmem:[%s0 + $0xa4] sm:$0xf]
  %v70 = vld [vmem:[%s0 + $0xa8] sm:$0xf]
  %v71 = vld [vmem:[%s0 + $0xac] sm:$0xf]
  %v72 = vld [vmem:[%s0 + $0xb0] sm:$0xf]
  %v73 = vld [vmem:[%s0 + $0xb4] sm:$0xf]
  %v74 = vld [vmem:[%s0 + $0xb8] sm:$0xf]
  %v75 = vld [vmem:[%s0 + $0xbc] sm:$0xf]
  %v76 = vld [vmem:[%s0 + $0xc0] sm:$0xf]
  %v77 = vld [vmem:[%s0 + $0xc4] sm:$0xf]
  %v78 = vld [vmem:[%s0 + $0xc8] sm:$0xf]
  %v79 = vld [vmem:[%s0 + $0xcc] sm:$0xf]
  %v80 = vld [vmem:[%s0 + $0xd0] sm:$0xf]
  %v81 = vld [vmem:[%s0 + $0xd4] sm:$0xf]
  %v82 = vld [vmem:[%s0 + $0xd8] sm:$0xf]
  %v83 = vld [vmem:[%s0 + $0xdc] sm:$0xf]
  %v84 = vld [vmem:[%s0 + $0xe0] sm:$0xf]
  %v85 = vld [vmem:[%s0 + $0xe4] sm:$0xf]
  %v86 = vld [vmem:[%s0 + $0xe8] sm:$0xf]
  %v87 = vld [vmem:[%s0 + $0xec] sm:$0xf]
  %v88 = vld [vmem:[%s0 + $0xf0] sm:$0xf]
  %v89 = vld [vmem:[%s0 + $0xf4] sm:$0xf]
  %v90 = vld [vmem:[%s0 + $0xf8] sm:$0xf]
  %v91 = vld [vmem:[%s0 + $0xfc] sm:$0xf]
  %v92 = vld [vmem:[%s0 + $0x100] sm:$0xf]
  %v93 = vld [vmem:[%s0 + $0x104] sm:$0xf]
  %v94 = vld [vmem:[%s0 + $0x108] sm:$0xf]
  %v95 = vld [vmem:[%s0 + $0x10c] sm:$0xf]
  %v96 = vld [vmem:[%s0 + $0x110] sm:$0xf]
  %v97 = vld [vmem:[%s0 + $0x114] sm:$0xf]
  %v98 = vld [vmem:[%s0 + $0x118] sm:$0xf]
  %v99 = vld [vmem:[%s0 + $0x11c] sm:$0xf]
  %v100 = vld [vmem:[%s0 + $0x120] sm:$0xf]
  %v101 = vld [vmem:[%s0 + $0x124] sm:$0xf]
  %v102 = vld [vmem:[%s0 + $0x128] sm:$0xf]
  %v103 = vld [vmem:[%s0 + $0x12c] sm:$0xf]
  %v104 = vld [vmem:[%s0 + $0x130] sm:$0xf]
  %v105 = vld [vmem:[%s0 + $0x134] sm:$0xf]
  %v106 = vld [vmem:[%s0 + $0x138] sm:$0xf]
  %v107 = vld [vmem:[%s0 + $0x13c] sm:$0xf]
  %v108 = vld [vmem:[%s0 + $0x140] sm:$0xf]
  %v109 = vld [vmem:[%s0 + $0x144] sm:$0xf]
  %v110 = vld [vmem:[%s0 + $0x148] sm:$0xf]
  %v111 = vld [vmem:[%s0 + $0x14c] sm:$0xf]
  %v112 = vld [vmem:[%s0 + $0x150] sm:$0xf]
  %v113 = vld [vmem:[%s0 + $0x154] sm:$0xf]
  %v114 = vld [vmem:[%s0 + $0x158] sm:$0xf]
  %v115 = vld [vmem:[%s0 + $0x15c] sm:$0xf]
  %v116 = vld [vmem:[%s0 + $0x160] sm:$0xf]
  %v117 = vld [vmem:[%s0 + $0x164] sm:$0xf]
  %v118 = vld [vmem:[%s0 + $0x168] sm:$0xf]
  %v119 = vld [vmem:[%s0 + $0x16c] sm:$0xf]
  %v120 = vld [vmem:[%s0 + $0x170] sm:$0xf]
  %v121 = vld [vmem:[%s0 + $0x174] sm:$0xf]
  %v122 = vld [vmem:[%s0 + $0x178] sm:$0xf]
  %v123 = vld [vmem:[%s0 + $0x17c] sm:$0xf]
  %v124 = vld [vmem:[%s0 + $0x180] sm:$0xf]
  %v125 = vld [vmem:[%s0 + $0x184] sm:$0xf]
  %v126 = vld [vmem:[%s0 + $0x188] sm:$0xf]
  %v127 = vld [vmem:[%s0 + $0x18c] sm:$0xf]
  %v128 = vld [vmem:[%s0 + $0x190] sm:$0xf]
  %v129 = vld [vmem:[%s0 + $0x194] sm:$0xf]
  %v130 = vld [vmem:[%s0 + $0x198] sm:$0xf]
  %v131 = vld [vmem:[%s0 + $0x19c] sm:$0xf]
  %v132 = vld [vmem:[%s0 + $0x1a0] sm:$0xf]
  %v133 = vld [vmem:[%s0 + $0x1a4] sm:$0xf]
  %v134 = vld [vmem:[%s0 + $0x1a8] sm:$0xf]
  %v135 = vld [vmem:[%s0 + $0x1ac] sm:$0xf]
  %v136 = vld [vmem:[%s0 + $0x1b0] sm:$0xf]
  %v137 = vld [vmem:[%s0 + $0x1b4] sm:$0xf]
  %v138 = vld [vmem:[%s0 + $0x1b8] sm:$0xf]
  %v139 = vld [vmem:[%s0 + $0x1bc] sm:$0xf]
  %v140 = vld [vmem:[%s0 + $0x1c0] sm:$0xf]
  %v141 = vld [vmem:[%s0 + $0x1c4] sm:$0xf]
  %v142 = vld [vmem:[%s0 + $0x1c8] sm:$0xf]
  %v143 = vld [vmem:[%s0 + $0x1cc] sm:$0xf]
  %v144 = vld [vmem:[%s0 + $0x1d0] sm:$0xf]
  %v145 = vld [vmem:[%s0 + $0x1d4] sm:$0xf]
  %v146 = vld [vmem:[%s0 + $0x1d8] sm:$0xf]
  %v147 = vld [vmem:[%s0 + $0x1dc] sm:$0xf]
  %v148 = vld [vmem:[%s0 + $0x1e0] sm:$0xf]
  %v149 = vld [vmem:[%s0 + $0x1e4] sm:$0xf]
  %v150 = vld [vmem:[%s0 + $0x1e8] sm:$0xf]
  %v151 = vld [vmem:[%s0 + $0x1ec] sm:$0xf]
  %v152 = vld [vmem:[%s0 + $0x1f0] sm:$0xf]
  %v153 = vld [vmem:[%s0 + $0x1f4] sm:$0xf]
  %v154 = vld [vmem:[%s0 + $0x1f8] sm:$0xf]
  %v155 = vld [vmem:[%s0 + $0x1fc] sm:$0xf]
  %v284 = vunpack.c.l.b16 %v28
  %v285 = vunpack.c.l.b16 %v29
  %v286 = vunpack.c.l.b16 %v30
  %v287 = vunpack.c.l.b16 %v31
  %v288 = vunpack.c.l.b16 %v32
  %v289 = vunpack.c.l.b16 %v33
  %v290 = vunpack.c.l.b16 %v34
  %v291 = vunpack.c.l.b16 %v35
  %v292 = vunpack.c.l.b16 %v36
  %v293 = vunpack.c.l.b16 %v37
  %v294 = vunpack.c.l.b16 %v38
  %v295 = vunpack.c.l.b16 %v39
  %v296 = vunpack.c.l.b16 %v40
  %v297 = vunpack.c.l.b16 %v41
  %v298 = vunpack.c.l.b16 %v42
  %v299 = vunpack.c.l.b16 %v43
  %v300 = vunpack.c.l.b16 %v44
  %v301 = vunpack.c.l.b16 %v45
  %v302 = vunpack.c.l.b16 %v46
  %v303 = vunpack.c.l.b16 %v47
  %v304 = vunpack.c.l.b16 %v48
  %v305 = vunpack.c.l.b16 %v49
  %v306 = vunpack.c.l.b16 %v50
  %v307 = vunpack.c.l.b16 %v51
  %v308 = vunpack.c.l.b16 %v52
  %v309 = vunpack.c.l.b16 %v53
  %v310 = vunpack.c.l.b16 %v54
  %v311 = vunpack.c.l.b16 %v55
  %v312 = vunpack.c.l.b16 %v56
  %v313 = vunpack.c.l.b16 %v57
  %v314 = vunpack.c.l.b16 %v58
  %v315 = vunpack.c.l.b16 %v59
  %v316 = vunpack.c.l.b16 %v60
  %v317 = vunpack.c.l.b16 %v61
  %v318 = vunpack.c.l.b16 %v62
  %v319 = vunpack.c.l.b16 %v63
  %v320 = vunpack.c.l.b16 %v64
  %v321 = vunpack.c.l.b16 %v65
  %v322 = vunpack.c.l.b16 %v66
  %v323 = vunpack.c.l.b16 %v67
  %v324 = vunpack.c.l.b16 %v68
  %v325 = vunpack.c.l.b16 %v69
  %v326 = vunpack.c.l.b16 %v70
  %v327 = vunpack.c.l.b16 %v71
  %v328 = vunpack.c.l.b16 %v72
  %v329 = vunpack.c.l.b16 %v73
  %v330 = vunpack.c.l.b16 %v74
  %v331 = vunpack.c.l.b16 %v75
  %v332 = vunpack.c.l.b16 %v76
  %v333 = vunpack.c.l.b16 %v77
  %v334 = vunpack.c.l.b16 %v78
  %v335 = vunpack.c.l.b16 %v79
  %v336 = vunpack.c.l.b16 %v80
  %v337 = vunpack.c.l.b16 %v81
  %v338 = vunpack.c.l.b16 %v82
  %v339 = vunpack.c.l.b16 %v83
  %v340 = vunpack.c.l.b16 %v84
  %v341 = vunpack.c.l.b16 %v85
  %v342 = vunpack.c.l.b16 %v86
  %v343 = vunpack.c.l.b16 %v87
  %v344 = vunpack.c.l.b16 %v88
  %v345 = vunpack.c.l.b16 %v89
  %v346 = vunpack.c.l.b16 %v90
  %v347 = vunpack.c.l.b16 %v91
  %v348 = vunpack.c.l.b16 %v92
  %v349 = vunpack.c.l.b16 %v93
  %v350 = vunpack.c.l.b16 %v94
  %v351 = vunpack.c.l.b16 %v95
  %v352 = vunpack.c.l.b16 %v96
  %v353 = vunpack.c.l.b16 %v97
  %v354 = vunpack.c.l.b16 %v98
  %v355 = vunpack.c.l.b16 %v99
  %v356 = vunpack.c.l.b16 %v100
  %v357 = vunpack.c.l.b16 %v101
  %v358 = vunpack.c.l.b16 %v102
  %v359 = vunpack.c.l.b16 %v103
  %v360 = vunpack.c.l.b16 %v104
  %v361 = vunpack.c.l.b16 %v105
  %v362 = vunpack.c.l.b16 %v106
  %v363 = vunpack.c.l.b16 %v107
  %v364 = vunpack.c.l.b16 %v108
  %v365 = vunpack.c.l.b16 %v109
  %v366 = vunpack.c.l.b16 %v110
  %v367 = vunpack.c.l.b16 %v111
  %v368 = vunpack.c.l.b16 %v112
  %v369 = vunpack.c.l.b16 %v113
  %v370 = vunpack.c.l.b16 %v114
  %v371 = vunpack.c.l.b16 %v115
  %v372 = vunpack.c.l.b16 %v116
  %v373 = vunpack.c.l.b16 %v117
  %v374 = vunpack.c.l.b16 %v118
  %v375 = vunpack.c.l.b16 %v119
  %v376 = vunpack.c.l.b16 %v120
  %v377 = vunpack.c.l.b16 %v121
  %v378 = vunpack.c.l.b16 %v122
  %v379 = vunpack.c.l.b16 %v123
  %v380 = vunpack.c.l.b16 %v124
  %v381 = vunpack.c.l.b16 %v125
  %v382 = vunpack.c.l.b16 %v126
  %v383 = vunpack.c.l.b16 %v127
  %v384 = vunpack.c.l.b16 %v128
  %v385 = vunpack.c.l.b16 %v129
  %v386 = vunpack.c.l.b16 %v130
  %v387 = vunpack.c.l.b16 %v131
  %v388 = vunpack.c.l.b16 %v132
  %v389 = vunpack.c.l.b16 %v133
  %v390 = vunpack.c.l.b16 %v134
  %v391 = vunpack.c.l.b16 %v135
  %v392 = vunpack.c.l.b16 %v136
  %v393 = vunpack.c.l.b16 %v137
  %v394 = vunpack.c.l.b16 %v138
  %v395 = vunpack.c.l.b16 %v139
  %v396 = vunpack.c.l.b16 %v140
  %v397 = vunpack.c.l.b16 %v141
  %v398 = vunpack.c.l.b16 %v142
  %v399 = vunpack.c.l.b16 %v143
  %v400 = vunpack.c.l.b16 %v144
  %v401 = vunpack.c.l.b16 %v145
  %v402 = vunpack.c.l.b16 %v146
  %v403 = vunpack.c.l.b16 %v147
  %v404 = vunpack.c.l.b16 %v148
  %v405 = vunpack.c.l.b16 %v149
  %v406 = vunpack.c.l.b16 %v150
  %v407 = vunpack.c.l.b16 %v151
  %v408 = vunpack.c.l.b16 %v152
  %v409 = vunpack.c.l.b16 %v153
  %v410 = vunpack.c.l.b16 %v154
  %v411 = vunpack.c.l.b16 %v155
  %v412 = vpack.c.b16 %v285, %v284
  %v413 = vpack.c.b16 %v287, %v286
  %v414 = vpack.c.b16 %v289, %v288
  %v415 = vpack.c.b16 %v291, %v290
  %v416 = vpack.c.b16 %v293, %v292
  %v417 = vpack.c.b16 %v295, %v294
  %v418 = vpack.c.b16 %v297, %v296
  %v419 = vpack.c.b16 %v299, %v298
  %v420 = vpack.c.b16 %v301, %v300
  %v421 = vpack.c.b16 %v303, %v302
  %v422 = vpack.c.b16 %v305, %v304
  %v423 = vpack.c.b16 %v307, %v306
  %v424 = vpack.c.b16 %v309, %v308
  %v425 = vpack.c.b16 %v311, %v310
  %v426 = vpack.c.b16 %v313, %v312
  %v427 = vpack.c.b16 %v315, %v314
  %v428 = vpack.c.b16 %v317, %v316
  %v429 = vpack.c.b16 %v319, %v318
  %v430 = vpack.c.b16 %v321, %v320
  %v431 = vpack.c.b16 %v323, %v322
  %v432 = vpack.c.b16 %v325, %v324
  %v433 = vpack.c.b16 %v327, %v326
  %v434 = vpack.c.b16 %v329, %v328
  %v435 = vpack.c.b16 %v331, %v330
  %v436 = vpack.c.b16 %v333, %v332
  %v437 = vpack.c.b16 %v335, %v334
  %v438 = vpack.c.b16 %v337, %v336
  %v439 = vpack.c.b16 %v339, %v338
  %v440 = vpack.c.b16 %v341, %v340
  %v441 = vpack.c.b16 %v343, %v342
  %v442 = vpack.c.b16 %v345, %v344
  %v443 = vpack.c.b16 %v347, %v346
  %v444 = vpack.c.b16 %v349, %v348
  %v445 = vpack.c.b16 %v351, %v350
  %v446 = vpack.c.b16 %v353, %v352
  %v447 = vpack.c.b16 %v355, %v354
  %v448 = vpack.c.b16 %v357, %v356
  %v449 = vpack.c.b16 %v359, %v358
  %v450 = vpack.c.b16 %v361, %v360
  %v451 = vpack.c.b16 %v363, %v362
  %v452 = vpack.c.b16 %v365, %v364
  %v453 = vpack.c.b16 %v367, %v366
  %v454 = vpack.c.b16 %v369, %v368
  %v455 = vpack.c.b16 %v371, %v370
  %v456 = vpack.c.b16 %v373, %v372
  %v457 = vpack.c.b16 %v375, %v374
  %v458 = vpack.c.b16 %v377, %v376
  %v459 = vpack.c.b16 %v379, %v378
  %v460 = vpack.c.b16 %v381, %v380
  %v461 = vpack.c.b16 %v383, %v382
  %v462 = vpack.c.b16 %v385, %v384
  %v463 = vpack.c.b16 %v387, %v386
  %v464 = vpack.c.b16 %v389, %v388
  %v465 = vpack.c.b16 %v391, %v390
  %v466 = vpack.c.b16 %v393, %v392
  %v467 = vpack.c.b16 %v395, %v394
  %v468 = vpack.c.b16 %v397, %v396
  %v469 = vpack.c.b16 %v399, %v398
  %v470 = vpack.c.b16 %v401, %v400
  %v471 = vpack.c.b16 %v403, %v402
  %v472 = vpack.c.b16 %v405, %v404
  %v473 = vpack.c.b16 %v407, %v406
  %v474 = vpack.c.b16 %v409, %v408
  %v475 = vpack.c.b16 %v411, %v410
  %v556 = vunpack.c.l.b16 %v12
  %v557 = vunpack.c.h.b16 %v12
  %v558 = vunpack.c.l.b16 %v13
  %v559 = vunpack.c.h.b16 %v13
  %v560 = vunpack.c.l.b16 %v14
  %v561 = vunpack.c.h.b16 %v14
  %v562 = vunpack.c.l.b16 %v15
  %v563 = vunpack.c.h.b16 %v15
  %v564 = vunpack.c.l.b16 %v16
  %v565 = vunpack.c.h.b16 %v16
  %v566 = vunpack.c.l.b16 %v17
  %v567 = vunpack.c.h.b16 %v17
  %v568 = vunpack.c.l.b16 %v18
  %v569 = vunpack.c.h.b16 %v18
  %v570 = vunpack.c.l.b16 %v19
  %v571 = vunpack.c.h.b16 %v19
  %v572 = vunpack.c.l.b16 %v20
  %v573 = vunpack.c.h.b16 %v20
  %v574 = vunpack.c.l.b16 %v21
  %v575 = vunpack.c.h.b16 %v21
  %v576 = vunpack.c.l.b16 %v22
  %v577 = vunpack.c.h.b16 %v22
  %v578 = vunpack.c.l.b16 %v23
  %v579 = vunpack.c.h.b16 %v23
  %v580 = vunpack.c.l.b16 %v24
  %v581 = vunpack.c.h.b16 %v24
  %v582 = vunpack.c.l.b16 %v25
  %v583 = vunpack.c.h.b16 %v25
  %v584 = vunpack.c.l.b16 %v26
  %v585 = vunpack.c.h.b16 %v26
  %v586 = vunpack.c.l.b16 %v27
  %v587 = vunpack.c.h.b16 %v27
  %v588 = vpack.c.b16 %v558, %v556
  %v589 = vpack.c.b16 %v559, %v557
  %v590 = vpack.c.b16 %v562, %v560
  %v591 = vpack.c.b16 %v563, %v561
  %v592 = vpack.c.b16 %v566, %v564
  %v593 = vpack.c.b16 %v567, %v565
  %v594 = vpack.c.b16 %v570, %v568
  %v595 = vpack.c.b16 %v571, %v569
  %v596 = vpack.c.b16 %v574, %v572
  %v597 = vpack.c.b16 %v575, %v573
  %v598 = vpack.c.b16 %v578, %v576
  %v599 = vpack.c.b16 %v579, %v577
  %v600 = vpack.c.b16 %v582, %v580
  %v601 = vpack.c.b16 %v583, %v581
  %v602 = vpack.c.b16 %v586, %v584
  %v603 = vpack.c.b16 %v587, %v585
  %620 = vmatprep.subr.bf16.mxu0 %v589
  %621 = vmatpush1.bf16.msra.mxu0 %v588
  %622 = vmatprep.subr.bf16.mxu0 %v591
  %623 = vmatpush1.bf16.msra.mxu0 %v590
  %624 = vmatprep.subr.bf16.mxu0 %v593
  %625 = vmatpush1.bf16.msra.mxu0 %v592
  %626 = vmatprep.subr.bf16.mxu0 %v595
  %627 = vmatpush1.bf16.msra.mxu0 %v594
  %628 = vmatprep.subr.bf16.mxu0 %v597
  %629 = vmatpush1.bf16.msra.mxu0 %v596
  %630 = vmatprep.subr.bf16.mxu0 %v599
  %631 = vmatpush1.bf16.msra.mxu0 %v598
  %632 = vmatprep.subr.bf16.mxu0 %v601
  %633 = vmatpush1.bf16.msra.mxu0 %v600
  %634 = vmatprep.subr.bf16.mxu0 %v603
  %635 = vmatpush1.bf16.msra.mxu0 %v602
  %636 = vmatprep.subr.bf16.mxu0 0
  %637 = vmatpush1.bf16.msra.mxu0 0
  %638 = vmatprep.subr.bf16.mxu0 0
  %639 = vmatpush1.bf16.msra.mxu0 0
  %640 = vmatprep.subr.bf16.mxu0 0
  %641 = vmatpush1.bf16.msra.mxu0 0
  %642 = vmatprep.subr.bf16.mxu0 0
  %643 = vmatpush1.bf16.msra.mxu0 0
  %644 = vmatprep.subr.bf16.mxu0 0
  %645 = vmatpush1.bf16.msra.mxu0 0
  %646 = vmatprep.subr.bf16.mxu0 0
  %647 = vmatpush1.bf16.msra.mxu0 0
  %648 = vmatprep.subr.bf16.mxu0 0
  %649 = vmatpush1.bf16.msra.mxu0 0
  %650 = vmatprep.subr.bf16.mxu0 0
  %651 = vmatpush1.bf16.msra.mxu0 0
  %652 = vmatprep.mubr.bf16.mxu0 0
  %653 = vmatmul.mubr.bf16.gmra.mrb[0].mxu0 %v412
  %v654 = vpop.f32.mrb[0].mxu0
  %v655 = vadd.f32 0.0, %v654
  %v656 = vpop.f32.mrb[0].mxu0
  %v657 = vadd.f32 0.0, %v656
  %v658 = vpop.f32.mrb[0].mxu0
  %v659 = vadd.f32 0.0, %v658
  %v660 = vpop.f32.mrb[0].mxu0
  %v661 = vadd.f32 0.0, %v660
  %662 = vmatprep.mubr.bf16.mxu0 0
  %663 = vmatmul.mubr.bf16.gmra.mrb[0].mxu0 %v413
  %v664 = vpop.f32.mrb[0].mxu0
  %v665 = vadd.f32 0.0, %v664
  %v666 = vpop.f32.mrb[0].mxu0
  %v667 = vadd.f32 0.0, %v666
  %v668 = vpop.f32.mrb[0].mxu0
  %v669 = vadd.f32 0.0, %v668
  %v670 = vpop.f32.mrb[0].mxu0
  %v671 = vadd.f32 0.0, %v670
  %672 = vmatprep.mubr.bf16.mxu0 0
  %673 = vmatmul.mubr.bf16.gmra.mrb[0].mxu0 %v414
  %v674 = vpop.f32.mrb[0].mxu0
  %v675 = vadd.f32 0.0, %v674
  %v676 = vpop.f32.mrb[0].mxu0
  %v677 = vadd.f32 0.0, %v676
  %v678 = vpop.f32.mrb[0].mxu0
  %v679 = vadd.f32 0.0, %v678
  %v680 = vpop.f32.mrb[0].mxu0
  %v681 = vadd.f32 0.0, %v680
  %682 = vmatprep.mubr.bf16.mxu0 0
  %683 = vmatmul.mubr.bf16.gmra.mrb[0].mxu0 %v415
  %v684 = vpop.f32.mrb[0].mxu0
  %v685 = vadd.f32 0.0, %v684
  %v686 = vpop.f32.mrb[0].mxu0
  %v687 = vadd.f32 0.0, %v686
  %v688 = vpop.f32.mrb[0].mxu0
  %v689 = vadd.f32 0.0, %v688
  %v690 = vpop.f32.mrb[0].mxu0
  %v691 = vadd.f32 0.0, %v690
  %692 = vmatprep.mubr.bf16.mxu0 0
  %693 = vmatmul.mubr.bf16.gmra.mrb[0].mxu0 %v416
  %v694 = vpop.f32.mrb[0].mxu0
  %v695 = vadd.f32 0.0, %v694
  %v696 = vpop.f32.mrb[0].mxu0
  %v697 = vadd.f32 0.0, %v696
  %v698 = vpop.f32.mrb[0].mxu0
  %v699 = vadd.f32 0.0, %v698
  %v700 = vpop.f32.mrb[0].mxu0
  %v701 = vadd.f32 0.0, %v700
  %702 = vmatprep.mubr.bf16.mxu0 0
  %703 = vmatmul.mubr.bf16.gmra.mrb[0].mxu0 %v417
  %v704 = vpop.f32.mrb[0].mxu0
  %v705 = vadd.f32 0.0, %v704
  %v706 = vpop.f32.mrb[0].mxu0
  %v707 = vadd.f32 0.0, %v706
  %v708 = vpop.f32.mrb[0].mxu0
  %v709 = vadd.f32 0.0, %v708
  %v710 = vpop.f32.mrb[0].mxu0
  %v711 = vadd.f32 0.0, %v710
  %712 = vmatprep.mubr.bf16.mxu0 0
  %713 = vmatmul.mubr.bf16.gmra.mrb[0].mxu0 %v418
  %v714 = vpop.f32.mrb[0].mxu0
  %v715 = vadd.f32 0.0, %v714
  %v716 = vpop.f32.mrb[0].mxu0
  %v717 = vadd.f32 0.0, %v716
  %v718 = vpop.f32.mrb[0].mxu0
  %v719 = vadd.f32 0.0, %v718
  %v720 = vpop.f32.mrb[0].mxu0
  %v721 = vadd.f32 0.0, %v720
  %722 = vmatprep.mubr.bf16.mxu0 0
  %723 = vmatmul.mubr.bf16.gmra.mrb[0].mxu0 %v419
  %v724 = vpop.f32.mrb[0].mxu0
  %v725 = vadd.f32 0.0, %v724
  %v726 = vpop.f32.mrb[0].mxu0
  %v727 = vadd.f32 0.0, %v726
  %v728 = vpop.f32.mrb[0].mxu0
  %v729 = vadd.f32 0.0, %v728
  %v730 = vpop.f32.mrb[0].mxu0
  %v731 = vadd.f32 0.0, %v730
  %732 = vmatprep.mubr.bf16.mxu0 0
  %733 = vmatmul.mubr.bf16.gmra.mrb[0].mxu0 %v420
  %v734 = vpop.f32.mrb[0].mxu0
  %v735 = vadd.f32 0.0, %v734
  %v736 = vpop.f32.mrb[0].mxu0
  %v737 = vadd.f32 0.0, %v736
  %v738 = vpop.f32.mrb[0].mxu0
  %v739 = vadd.f32 0.0, %v738
  %v740 = vpop.f32.mrb[0].mxu0
  %v741 = vadd.f32 0.0, %v740
  %742 = vmatprep.mubr.bf16.mxu0 0
  %743 = vmatmul.mubr.bf16.gmra.mrb[0].mxu0 %v421
  %v744 = vpop.f32.mrb[0].mxu0
  %v745 = vadd.f32 0.0, %v744
  %v746 = vpop.f32.mrb[0].mxu0
  %v747 = vadd.f32 0.0, %v746
  %v748 = vpop.f32.mrb[0].mxu0
  %v749 = vadd.f32 0.0, %v748
  %v750 = vpop.f32.mrb[0].mxu0
  %v751 = vadd.f32 0.0, %v750
  %752 = vmatprep.mubr.bf16.mxu0 0
  %753 = vmatmul.mubr.bf16.gmra.mrb[0].mxu0 %v422
  %v754 = vpop.f32.mrb[0].mxu0
  %v755 = vadd.f32 0.0, %v754
  %v756 = vpop.f32.mrb[0].mxu0
  %v757 = vadd.f32 0.0, %v756
  %v758 = vpop.f32.mrb[0].mxu0
  %v759 = vadd.f32 0.0, %v758
  %v760 = vpop.f32.mrb[0].mxu0
  %v761 = vadd.f32 0.0, %v760
  %762 = vmatprep.mubr.bf16.mxu0 0
  %763 = vmatmul.mubr.bf16.gmra.mrb[0].mxu0 %v423
  %v764 = vpop.f32.mrb[0].mxu0
  %v765 = vadd.f32 0.0, %v764
  %v766 = vpop.f32.mrb[0].mxu0
  %v767 = vadd.f32 0.0, %v766
  %v768 = vpop.f32.mrb[0].mxu0
  %v769 = vadd.f32 0.0, %v768
  %v770 = vpop.f32.mrb[0].mxu0
  %v771 = vadd.f32 0.0, %v770
  %772 = vmatprep.mubr.bf16.mxu0 0
  %773 = vmatmul.mubr.bf16.gmra.mrb[0].mxu0 %v424
  %v774 = vpop.f32.mrb[0].mxu0
  %v775 = vadd.f32 0.0, %v774
  %v776 = vpop.f32.mrb[0].mxu0
  %v777 = vadd.f32 0.0, %v776
  %v778 = vpop.f32.mrb[0].mxu0
  %v779 = vadd.f32 0.0, %v778
  %v780 = vpop.f32.mrb[0].mxu0
  %v781 = vadd.f32 0.0, %v780
  %782 = vmatprep.mubr.bf16.mxu0 0
  %783 = vmatmul.mubr.bf16.gmra.mrb[0].mxu0 %v425
  %v784 = vpop.f32.mrb[0].mxu0
  %v785 = vadd.f32 0.0, %v784
  %v786 = vpop.f32.mrb[0].mxu0
  %v787 = vadd.f32 0.0, %v786
  %v788 = vpop.f32.mrb[0].mxu0
  %v789 = vadd.f32 0.0, %v788
  %v790 = vpop.f32.mrb[0].mxu0
  %v791 = vadd.f32 0.0, %v790
  %792 = vmatprep.mubr.bf16.mxu0 0
  %793 = vmatmul.mubr.bf16.gmra.mrb[0].mxu0 %v426
  %v794 = vpop.f32.mrb[0].mxu0
  %v795 = vadd.f32 0.0, %v794
  %v796 = vpop.f32.mrb[0].mxu0
  %v797 = vadd.f32 0.0, %v796
  %v798 = vpop.f32.mrb[0].mxu0
  %v799 = vadd.f32 0.0, %v798
  %v800 = vpop.f32.mrb[0].mxu0
  %v801 = vadd.f32 0.0, %v800
  %802 = vmatprep.mubr.bf16.mxu0 0
  %803 = vmatmul.mubr.bf16.gmra.mrb[0].mxu0 %v427
  %v804 = vpop.f32.mrb[0].mxu0
  %v805 = vadd.f32 0.0, %v804
  %v806 = vpop.f32.mrb[0].mxu0
  %v807 = vadd.f32 0.0, %v806
  %v808 = vpop.f32.mrb[0].mxu0
  %v809 = vadd.f32 0.0, %v808
  %v810 = vpop.f32.mrb[0].mxu0
  %v811 = vadd.f32 0.0, %v810
  %812 = vmatprep.mubr.bf16.mxu0 0
  %813 = vmatmul.mubr.bf16.gmra.mrb[0].mxu0 %v428
  %v814 = vpop.f32.mrb[0].mxu0
  %v815 = vadd.f32 0.0, %v814
  %v816 = vpop.f32.mrb[0].mxu0
  %v817 = vadd.f32 0.0, %v816
  %v818 = vpop.f32.mrb[0].mxu0
  %v819 = vadd.f32 0.0, %v818
  %v820 = vpop.f32.mrb[0].mxu0
  %v821 = vadd.f32 0.0, %v820
  %822 = vmatprep.mubr.bf16.mxu0 0
  %823 = vmatmul.mubr.bf16.gmra.mrb[0].mxu0 %v429
  %v824 = vpop.f32.mrb[0].mxu0
  %v825 = vadd.f32 0.0, %v824
  %v826 = vpop.f32.mrb[0].mxu0
  %v827 = vadd.f32 0.0, %v826
  %v828 = vpop.f32.mrb[0].mxu0
  %v829 = vadd.f32 0.0, %v828
  %v830 = vpop.f32.mrb[0].mxu0
  %v831 = vadd.f32 0.0, %v830
  %832 = vmatprep.mubr.bf16.mxu0 0
  %833 = vmatmul.mubr.bf16.gmra.mrb[0].mxu0 %v430
  %v834 = vpop.f32.mrb[0].mxu0
  %v835 = vadd.f32 0.0, %v834
  %v836 = vpop.f32.mrb[0].mxu0
  %v837 = vadd.f32 0.0, %v836
  %v838 = vpop.f32.mrb[0].mxu0
  %v839 = vadd.f32 0.0, %v838
  %v840 = vpop.f32.mrb[0].mxu0
  %v841 = vadd.f32 0.0, %v840
  %842 = vmatprep.mubr.bf16.mxu0 0
  %843 = vmatmul.mubr.bf16.gmra.mrb[0].mxu0 %v431
  %v844 = vpop.f32.mrb[0].mxu0
  %v845 = vadd.f32 0.0, %v844
  %v846 = vpop.f32.mrb[0].mxu0
  %v847 = vadd.f32 0.0, %v846
  %v848 = vpop.f32.mrb[0].mxu0
  %v849 = vadd.f32 0.0, %v848
  %v850 = vpop.f32.mrb[0].mxu0
  %v851 = vadd.f32 0.0, %v850
  %852 = vmatprep.mubr.bf16.mxu0 0
  %853 = vmatmul.mubr.bf16.gmra.mrb[0].mxu0 %v432
  %v854 = vpop.f32.mrb[0].mxu0
  %v855 = vadd.f32 0.0, %v854
  %v856 = vpop.f32.mrb[0].mxu0
  %v857 = vadd.f32 0.0, %v856
  %v858 = vpop.f32.mrb[0].mxu0
  %v859 = vadd.f32 0.0, %v858
  %v860 = vpop.f32.mrb[0].mxu0
  %v861 = vadd.f32 0.0, %v860
  %862 = vmatprep.mubr.bf16.mxu0 0
  %863 = vmatmul.mubr.bf16.gmra.mrb[0].mxu0 %v433
  %v864 = vpop.f32.mrb[0].mxu0
  %v865 = vadd.f32 0.0, %v864
  %v866 = vpop.f32.mrb[0].mxu0
  %v867 = vadd.f32 0.0, %v866
  %v868 = vpop.f32.mrb[0].mxu0
  %v869 = vadd.f32 0.0, %v868
  %v870 = vpop.f32.mrb[0].mxu0
  %v871 = vadd.f32 0.0, %v870
  %872 = vmatprep.mubr.bf16.mxu0 0
  %873 = vmatmul.mubr.bf16.gmra.mrb[0].mxu0 %v434
  %v874 = vpop.f32.mrb[0].mxu0
  %v875 = vadd.f32 0.0, %v874
  %v876 = vpop.f32.mrb[0].mxu0
  %v877 = vadd.f32 0.0, %v876
  %v878 = vpop.f32.mrb[0].mxu0
  %v879 = vadd.f32 0.0, %v878
  %v880 = vpop.f32.mrb[0].mxu0
  %v881 = vadd.f32 0.0, %v880
  %882 = vmatprep.mubr.bf16.mxu0 0
  %883 = vmatmul.mubr.bf16.gmra.mrb[0].mxu0 %v435
  %v884 = vpop.f32.mrb[0].mxu0
  %v885 = vadd.f32 0.0, %v884
  %v886 = vpop.f32.mrb[0].mxu0
  %v887 = vadd.f32 0.0, %v886
  %v888 = vpop.f32.mrb[0].mxu0
  %v889 = vadd.f32 0.0, %v888
  %v890 = vpop.f32.mrb[0].mxu0
  %v891 = vadd.f32 0.0, %v890
  %892 = vmatprep.mubr.bf16.mxu0 0
  %893 = vmatmul.mubr.bf16.gmra.mrb[0].mxu0 %v436
  %v894 = vpop.f32.mrb[0].mxu0
  %v895 = vadd.f32 0.0, %v894
  %v896 = vpop.f32.mrb[0].mxu0
  %v897 = vadd.f32 0.0, %v896
  %v898 = vpop.f32.mrb[0].mxu0
  %v899 = vadd.f32 0.0, %v898
  %v900 = vpop.f32.mrb[0].mxu0
  %v901 = vadd.f32 0.0, %v900
  %902 = vmatprep.mubr.bf16.mxu0 0
  %903 = vmatmul.mubr.bf16.gmra.mrb[0].mxu0 %v437
  %v904 = vpop.f32.mrb[0].mxu0
  %v905 = vadd.f32 0.0, %v904
  %v906 = vpop.f32.mrb[0].mxu0
  %v907 = vadd.f32 0.0, %v906
  %v908 = vpop.f32.mrb[0].mxu0
  %v909 = vadd.f32 0.0, %v908
  %v910 = vpop.f32.mrb[0].mxu0
  %v911 = vadd.f32 0.0, %v910
  %912 = vmatprep.mubr.bf16.mxu0 0
  %913 = vmatmul.mubr.bf16.gmra.mrb[0].mxu0 %v438
  %v914 = vpop.f32.mrb[0].mxu0
  %v915 = vadd.f32 0.0, %v914
  %v916 = vpop.f32.mrb[0].mxu0
  %v917 = vadd.f32 0.0, %v916
  %v918 = vpop.f32.mrb[0].mxu0
  %v919 = vadd.f32 0.0, %v918
  %v920 = vpop.f32.mrb[0].mxu0
  %v921 = vadd.f32 0.0, %v920
  %922 = vmatprep.mubr.bf16.mxu0 0
  %923 = vmatmul.mubr.bf16.gmra.mrb[0].mxu0 %v439
  %v924 = vpop.f32.mrb[0].mxu0
  %v925 = vadd.f32 0.0, %v924
  %v926 = vpop.f32.mrb[0].mxu0
  %v927 = vadd.f32 0.0, %v926
  %v928 = vpop.f32.mrb[0].mxu0
  %v929 = vadd.f32 0.0, %v928
  %v930 = vpop.f32.mrb[0].mxu0
  %v931 = vadd.f32 0.0, %v930
  %932 = vmatprep.mubr.bf16.mxu0 0
  %933 = vmatmul.mubr.bf16.gmra.mrb[0].mxu0 %v440
  %v934 = vpop.f32.mrb[0].mxu0
  %v935 = vadd.f32 0.0, %v934
  %v936 = vpop.f32.mrb[0].mxu0
  %v937 = vadd.f32 0.0, %v936
  %v938 = vpop.f32.mrb[0].mxu0
  %v939 = vadd.f32 0.0, %v938
  %v940 = vpop.f32.mrb[0].mxu0
  %v941 = vadd.f32 0.0, %v940
  %942 = vmatprep.mubr.bf16.mxu0 0
  %943 = vmatmul.mubr.bf16.gmra.mrb[0].mxu0 %v441
  %v944 = vpop.f32.mrb[0].mxu0
  %v945 = vadd.f32 0.0, %v944
  %v946 = vpop.f32.mrb[0].mxu0
  %v947 = vadd.f32 0.0, %v946
  %v948 = vpop.f32.mrb[0].mxu0
  %v949 = vadd.f32 0.0, %v948
  %v950 = vpop.f32.mrb[0].mxu0
  %v951 = vadd.f32 0.0, %v950
  %952 = vmatprep.mubr.bf16.mxu0 0
  %953 = vmatmul.mubr.bf16.gmra.mrb[0].mxu0 %v442
  %v954 = vpop.f32.mrb[0].mxu0
  %v955 = vadd.f32 0.0, %v954
  %v956 = vpop.f32.mrb[0].mxu0
  %v957 = vadd.f32 0.0, %v956
  %v958 = vpop.f32.mrb[0].mxu0
  %v959 = vadd.f32 0.0, %v958
  %v960 = vpop.f32.mrb[0].mxu0
  %v961 = vadd.f32 0.0, %v960
  %962 = vmatprep.mubr.bf16.mxu0 0
  %963 = vmatmul.mubr.bf16.gmra.mrb[0].mxu0 %v443
  %v964 = vpop.f32.mrb[0].mxu0
  %v965 = vadd.f32 0.0, %v964
  %v966 = vpop.f32.mrb[0].mxu0
  %v967 = vadd.f32 0.0, %v966
  %v968 = vpop.f32.mrb[0].mxu0
  %v969 = vadd.f32 0.0, %v968
  %v970 = vpop.f32.mrb[0].mxu0
  %v971 = vadd.f32 0.0, %v970
  %972 = vmatprep.mubr.bf16.mxu0 0
  %973 = vmatmul.mubr.bf16.gmra.mrb[0].mxu0 %v444
  %v974 = vpop.f32.mrb[0].mxu0
  %v975 = vadd.f32 0.0, %v974
  %v976 = vpop.f32.mrb[0].mxu0
  %v977 = vadd.f32 0.0, %v976
  %v978 = vpop.f32.mrb[0].mxu0
  %v979 = vadd.f32 0.0, %v978
  %v980 = vpop.f32.mrb[0].mxu0
  %v981 = vadd.f32 0.0, %v980
  %982 = vmatprep.mubr.bf16.mxu0 0
  %983 = vmatmul.mubr.bf16.gmra.mrb[0].mxu0 %v445
  %v984 = vpop.f32.mrb[0].mxu0
  %v985 = vadd.f32 0.0, %v984
  %v986 = vpop.f32.mrb[0].mxu0
  %v987 = vadd.f32 0.0, %v986
  %v988 = vpop.f32.mrb[0].mxu0
  %v989 = vadd.f32 0.0, %v988
  %v990 = vpop.f32.mrb[0].mxu0
  %v991 = vadd.f32 0.0, %v990
  %992 = vmatprep.mubr.bf16.mxu0 0
  %993 = vmatmul.mubr.bf16.gmra.mrb[0].mxu0 %v446
  %v994 = vpop.f32.mrb[0].mxu0
  %v995 = vadd.f32 0.0, %v994
  %v996 = vpop.f32.mrb[0].mxu0
  %v997 = vadd.f32 0.0, %v996
  %v998 = vpop.f32.mrb[0].mxu0
  %v999 = vadd.f32 0.0, %v998
  %v1000 = vpop.f32.mrb[0].mxu0
  %v1001 = vadd.f32 0.0, %v1000
  %1002 = vmatprep.mubr.bf16.mxu0 0
  %1003 = vmatmul.mubr.bf16.gmra.mrb[0].mxu0 %v447
  %v1004 = vpop.f32.mrb[0].mxu0
  %v1005 = vadd.f32 0.0, %v1004
  %v1006 = vpop.f32.mrb[0].mxu0
  %v1007 = vadd.f32 0.0, %v1006
  %v1008 = vpop.f32.mrb[0].mxu0
  %v1009 = vadd.f32 0.0, %v1008
  %v1010 = vpop.f32.mrb[0].mxu0
  %v1011 = vadd.f32 0.0, %v1010
  %1012 = vmatprep.mubr.bf16.mxu0 0
  %1013 = vmatmul.mubr.bf16.gmra.mrb[0].mxu0 %v448
  %v1014 = vpop.f32.mrb[0].mxu0
  %v1015 = vadd.f32 0.0, %v1014
  %v1016 = vpop.f32.mrb[0].mxu0
  %v1017 = vadd.f32 0.0, %v1016
  %v1018 = vpop.f32.mrb[0].mxu0
  %v1019 = vadd.f32 0.0, %v1018
  %v1020 = vpop.f32.mrb[0].mxu0
  %v1021 = vadd.f32 0.0, %v1020
  %1022 = vmatprep.mubr.bf16.mxu0 0
  %1023 = vmatmul.mubr.bf16.gmra.mrb[0].mxu0 %v449
  %v1024 = vpop.f32.mrb[0].mxu0
  %v1025 = vadd.f32 0.0, %v1024
  %v1026 = vpop.f32.mrb[0].mxu0
  %v1027 = vadd.f32 0.0, %v1026
  %v1028 = vpop.f32.mrb[0].mxu0
  %v1029 = vadd.f32 0.0, %v1028
  %v1030 = vpop.f32.mrb[0].mxu0
  %v1031 = vadd.f32 0.0, %v1030
  %1032 = vmatprep.mubr.bf16.mxu0 0
  %1033 = vmatmul.mubr.bf16.gmra.mrb[0].mxu0 %v450
  %v1034 = vpop.f32.mrb[0].mxu0
  %v1035 = vadd.f32 0.0, %v1034
  %v1036 = vpop.f32.mrb[0].mxu0
  %v1037 = vadd.f32 0.0, %v1036
  %v1038 = vpop.f32.mrb[0].mxu0
  %v1039 = vadd.f32 0.0, %v1038
  %v1040 = vpop.f32.mrb[0].mxu0
  %v1041 = vadd.f32 0.0, %v1040
  %1042 = vmatprep.mubr.bf16.mxu0 0
  %1043 = vmatmul.mubr.bf16.gmra.mrb[0].mxu0 %v451
  %v1044 = vpop.f32.mrb[0].mxu0
  %v1045 = vadd.f32 0.0, %v1044
  %v1046 = vpop.f32.mrb[0].mxu0
  %v1047 = vadd.f32 0.0, %v1046
  %v1048 = vpop.f32.mrb[0].mxu0
  %v1049 = vadd.f32 0.0, %v1048
  %v1050 = vpop.f32.mrb[0].mxu0
  %v1051 = vadd.f32 0.0, %v1050
  %1052 = vmatprep.mubr.bf16.mxu0 0
  %1053 = vmatmul.mubr.bf16.gmra.mrb[0].mxu0 %v452
  %v1054 = vpop.f32.mrb[0].mxu0
  %v1055 = vadd.f32 0.0, %v1054
  %v1056 = vpop.f32.mrb[0].mxu0
  %v1057 = vadd.f32 0.0, %v1056
  %v1058 = vpop.f32.mrb[0].mxu0
  %v1059 = vadd.f32 0.0, %v1058
  %v1060 = vpop.f32.mrb[0].mxu0
  %v1061 = vadd.f32 0.0, %v1060
  %1062 = vmatprep.mubr.bf16.mxu0 0
  %1063 = vmatmul.mubr.bf16.gmra.mrb[0].mxu0 %v453
  %v1064 = vpop.f32.mrb[0].mxu0
  %v1065 = vadd.f32 0.0, %v1064
  %v1066 = vpop.f32.mrb[0].mxu0
  %v1067 = vadd.f32 0.0, %v1066
  %v1068 = vpop.f32.mrb[0].mxu0
  %v1069 = vadd.f32 0.0, %v1068
  %v1070 = vpop.f32.mrb[0].mxu0
  %v1071 = vadd.f32 0.0, %v1070
  %1072 = vmatprep.mubr.bf16.mxu0 0
  %1073 = vmatmul.mubr.bf16.gmra.mrb[0].mxu0 %v454
  %v1074 = vpop.f32.mrb[0].mxu0
  %v1075 = vadd.f32 0.0, %v1074
  %v1076 = vpop.f32.mrb[0].mxu0
  %v1077 = vadd.f32 0.0, %v1076
  %v1078 = vpop.f32.mrb[0].mxu0
  %v1079 = vadd.f32 0.0, %v1078
  %v1080 = vpop.f32.mrb[0].mxu0
  %v1081 = vadd.f32 0.0, %v1080
  %1082 = vmatprep.mubr.bf16.mxu0 0
  %1083 = vmatmul.mubr.bf16.gmra.mrb[0].mxu0 %v455
  %v1084 = vpop.f32.mrb[0].mxu0
  %v1085 = vadd.f32 0.0, %v1084
  %v1086 = vpop.f32.mrb[0].mxu0
  %v1087 = vadd.f32 0.0, %v1086
  %v1088 = vpop.f32.mrb[0].mxu0
  %v1089 = vadd.f32 0.0, %v1088
  %v1090 = vpop.f32.mrb[0].mxu0
  %v1091 = vadd.f32 0.0, %v1090
  %1092 = vmatprep.mubr.bf16.mxu0 0
  %1093 = vmatmul.mubr.bf16.gmra.mrb[0].mxu0 %v456
  %v1094 = vpop.f32.mrb[0].mxu0
  %v1095 = vadd.f32 0.0, %v1094
  %v1096 = vpop.f32.mrb[0].mxu0
  %v1097 = vadd.f32 0.0, %v1096
  %v1098 = vpop.f32.mrb[0].mxu0
  %v1099 = vadd.f32 0.0, %v1098
  %v1100 = vpop.f32.mrb[0].mxu0
  %v1101 = vadd.f32 0.0, %v1100
  %1102 = vmatprep.mubr.bf16.mxu0 0
  %1103 = vmatmul.mubr.bf16.gmra.mrb[0].mxu0 %v457
  %v1104 = vpop.f32.mrb[0].mxu0
  %v1105 = vadd.f32 0.0, %v1104
  %v1106 = vpop.f32.mrb[0].mxu0
  %v1107 = vadd.f32 0.0, %v1106
  %v1108 = vpop.f32.mrb[0].mxu0
  %v1109 = vadd.f32 0.0, %v1108
  %v1110 = vpop.f32.mrb[0].mxu0
  %v1111 = vadd.f32 0.0, %v1110
  %1112 = vmatprep.mubr.bf16.mxu0 0
  %1113 = vmatmul.mubr.bf16.gmra.mrb[0].mxu0 %v458
  %v1114 = vpop.f32.mrb[0].mxu0
  %v1115 = vadd.f32 0.0, %v1114
  %v1116 = vpop.f32.mrb[0].mxu0
  %v1117 = vadd.f32 0.0, %v1116
  %v1118 = vpop.f32.mrb[0].mxu0
  %v1119 = vadd.f32 0.0, %v1118
  %v1120 = vpop.f32.mrb[0].mxu0
  %v1121 = vadd.f32 0.0, %v1120
  %1122 = vmatprep.mubr.bf16.mxu0 0
  %1123 = vmatmul.mubr.bf16.gmra.mrb[0].mxu0 %v459
  %v1124 = vpop.f32.mrb[0].mxu0
  %v1125 = vadd.f32 0.0, %v1124
  %v1126 = vpop.f32.mrb[0].mxu0
  %v1127 = vadd.f32 0.0, %v1126
  %v1128 = vpop.f32.mrb[0].mxu0
  %v1129 = vadd.f32 0.0, %v1128
  %v1130 = vpop.f32.mrb[0].mxu0
  %v1131 = vadd.f32 0.0, %v1130
  %1132 = vmatprep.mubr.bf16.mxu0 0
  %1133 = vmatmul.mubr.bf16.gmra.mrb[0].mxu0 %v460
  %v1134 = vpop.f32.mrb[0].mxu0
  %v1135 = vadd.f32 0.0, %v1134
  %v1136 = vpop.f32.mrb[0].mxu0
  %v1137 = vadd.f32 0.0, %v1136
  %v1138 = vpop.f32.mrb[0].mxu0
  %v1139 = vadd.f32 0.0, %v1138
  %v1140 = vpop.f32.mrb[0].mxu0
  %v1141 = vadd.f32 0.0, %v1140
  %1142 = vmatprep.mubr.bf16.mxu0 0
  %1143 = vmatmul.mubr.bf16.gmra.mrb[0].mxu0 %v461
  %v1144 = vpop.f32.mrb[0].mxu0
  %v1145 = vadd.f32 0.0, %v1144
  %v1146 = vpop.f32.mrb[0].mxu0
  %v1147 = vadd.f32 0.0, %v1146
  %v1148 = vpop.f32.mrb[0].mxu0
  %v1149 = vadd.f32 0.0, %v1148
  %v1150 = vpop.f32.mrb[0].mxu0
  %v1151 = vadd.f32 0.0, %v1150
  %1152 = vmatprep.mubr.bf16.mxu0 0
  %1153 = vmatmul.mubr.bf16.gmra.mrb[0].mxu0 %v462
  %v1154 = vpop.f32.mrb[0].mxu0
  %v1155 = vadd.f32 0.0, %v1154
  %v1156 = vpop.f32.mrb[0].mxu0
  %v1157 = vadd.f32 0.0, %v1156
  %v1158 = vpop.f32.mrb[0].mxu0
  %v1159 = vadd.f32 0.0, %v1158
  %v1160 = vpop.f32.mrb[0].mxu0
  %v1161 = vadd.f32 0.0, %v1160
  %1162 = vmatprep.mubr.bf16.mxu0 0
  %1163 = vmatmul.mubr.bf16.gmra.mrb[0].mxu0 %v463
  %v1164 = vpop.f32.mrb[0].mxu0
  %v1165 = vadd.f32 0.0, %v1164
  %v1166 = vpop.f32.mrb[0].mxu0
  %v1167 = vadd.f32 0.0, %v1166
  %v1168 = vpop.f32.mrb[0].mxu0
  %v1169 = vadd.f32 0.0, %v1168
  %v1170 = vpop.f32.mrb[0].mxu0
  %v1171 = vadd.f32 0.0, %v1170
  %1172 = vmatprep.mubr.bf16.mxu0 0
  %1173 = vmatmul.mubr.bf16.gmra.mrb[0].mxu0 %v464
  %v1174 = vpop.f32.mrb[0].mxu0
  %v1175 = vadd.f32 0.0, %v1174
  %v1176 = vpop.f32.mrb[0].mxu0
  %v1177 = vadd.f32 0.0, %v1176
  %v1178 = vpop.f32.mrb[0].mxu0
  %v1179 = vadd.f32 0.0, %v1178
  %v1180 = vpop.f32.mrb[0].mxu0
  %v1181 = vadd.f32 0.0, %v1180
  %1182 = vmatprep.mubr.bf16.mxu0 0
  %1183 = vmatmul.mubr.bf16.gmra.mrb[0].mxu0 %v465
  %v1184 = vpop.f32.mrb[0].mxu0
  %v1185 = vadd.f32 0.0, %v1184
  %v1186 = vpop.f32.mrb[0].mxu0
  %v1187 = vadd.f32 0.0, %v1186
  %v1188 = vpop.f32.mrb[0].mxu0
  %v1189 = vadd.f32 0.0, %v1188
  %v1190 = vpop.f32.mrb[0].mxu0
  %v1191 = vadd.f32 0.0, %v1190
  %1192 = vmatprep.mubr.bf16.mxu0 0
  %1193 = vmatmul.mubr.bf16.gmra.mrb[0].mxu0 %v466
  %v1194 = vpop.f32.mrb[0].mxu0
  %v1195 = vadd.f32 0.0, %v1194
  %v1196 = vpop.f32.mrb[0].mxu0
  %v1197 = vadd.f32 0.0, %v1196
  %v1198 = vpop.f32.mrb[0].mxu0
  %v1199 = vadd.f32 0.0, %v1198
  %v1200 = vpop.f32.mrb[0].mxu0
  %v1201 = vadd.f32 0.0, %v1200
  %1202 = vmatprep.mubr.bf16.mxu0 0
  %1203 = vmatmul.mubr.bf16.gmra.mrb[0].mxu0 %v467
  %v1204 = vpop.f32.mrb[0].mxu0
  %v1205 = vadd.f32 0.0, %v1204
  %v1206 = vpop.f32.mrb[0].mxu0
  %v1207 = vadd.f32 0.0, %v1206
  %v1208 = vpop.f32.mrb[0].mxu0
  %v1209 = vadd.f32 0.0, %v1208
  %v1210 = vpop.f32.mrb[0].mxu0
  %v1211 = vadd.f32 0.0, %v1210
  %1212 = vmatprep.mubr.bf16.mxu0 0
  %1213 = vmatmul.mubr.bf16.gmra.mrb[0].mxu0 %v468
  %v1214 = vpop.f32.mrb[0].mxu0
  %v1215 = vadd.f32 0.0, %v1214
  %v1216 = vpop.f32.mrb[0].mxu0
  %v1217 = vadd.f32 0.0, %v1216
  %v1218 = vpop.f32.mrb[0].mxu0
  %v1219 = vadd.f32 0.0, %v1218
  %v1220 = vpop.f32.mrb[0].mxu0
  %v1221 = vadd.f32 0.0, %v1220
  %1222 = vmatprep.mubr.bf16.mxu0 0
  %1223 = vmatmul.mubr.bf16.gmra.mrb[0].mxu0 %v469
  %v1224 = vpop.f32.mrb[0].mxu0
  %v1225 = vadd.f32 0.0, %v1224
  %v1226 = vpop.f32.mrb[0].mxu0
  %v1227 = vadd.f32 0.0, %v1226
  %v1228 = vpop.f32.mrb[0].mxu0
  %v1229 = vadd.f32 0.0, %v1228
  %v1230 = vpop.f32.mrb[0].mxu0
  %v1231 = vadd.f32 0.0, %v1230
  %1232 = vmatprep.mubr.bf16.mxu0 0
  %1233 = vmatmul.mubr.bf16.gmra.mrb[0].mxu0 %v470
  %v1234 = vpop.f32.mrb[0].mxu0
  %v1235 = vadd.f32 0.0, %v1234
  %v1236 = vpop.f32.mrb[0].mxu0
  %v1237 = vadd.f32 0.0, %v1236
  %v1238 = vpop.f32.mrb[0].mxu0
  %v1239 = vadd.f32 0.0, %v1238
  %v1240 = vpop.f32.mrb[0].mxu0
  %v1241 = vadd.f32 0.0, %v1240
  %1242 = vmatprep.mubr.bf16.mxu0 0
  %1243 = vmatmul.mubr.bf16.gmra.mrb[0].mxu0 %v471
  %v1244 = vpop.f32.mrb[0].mxu0
  %v1245 = vadd.f32 0.0, %v1244
  %v1246 = vpop.f32.mrb[0].mxu0
  %v1247 = vadd.f32 0.0, %v1246
  %v1248 = vpop.f32.mrb[0].mxu0
  %v1249 = vadd.f32 0.0, %v1248
  %v1250 = vpop.f32.mrb[0].mxu0
  %v1251 = vadd.f32 0.0, %v1250
  %1252 = vmatprep.mubr.bf16.mxu0 0
  %1253 = vmatmul.mubr.bf16.gmra.mrb[0].mxu0 %v472
  %v1254 = vpop.f32.mrb[0].mxu0
  %v1255 = vadd.f32 0.0, %v1254
  %v1256 = vpop.f32.mrb[0].mxu0
  %v1257 = vadd.f32 0.0, %v1256
  %v1258 = vpop.f32.mrb[0].mxu0
  %v1259 = vadd.f32 0.0, %v1258
  %v1260 = vpop.f32.mrb[0].mxu0
  %v1261 = vadd.f32 0.0, %v1260
  %1262 = vmatprep.mubr.bf16.mxu0 0
  %1263 = vmatmul.mubr.bf16.gmra.mrb[0].mxu0 %v473
  %v1264 = vpop.f32.mrb[0].mxu0
  %v1265 = vadd.f32 0.0, %v1264
  %v1266 = vpop.f32.mrb[0].mxu0
  %v1267 = vadd.f32 0.0, %v1266
  %v1268 = vpop.f32.mrb[0].mxu0
  %v1269 = vadd.f32 0.0, %v1268
  %v1270 = vpop.f32.mrb[0].mxu0
  %v1271 = vadd.f32 0.0, %v1270
  %1272 = vmatprep.mubr.bf16.mxu0 0
  %1273 = vmatmul.mubr.bf16.gmra.mrb[0].mxu0 %v474
  %v1274 = vpop.f32.mrb[0].mxu0
  %v1275 = vadd.f32 0.0, %v1274
  %v1276 = vpop.f32.mrb[0].mxu0
  %v1277 = vadd.f32 0.0, %v1276
  %v1278 = vpop.f32.mrb[0].mxu0
  %v1279 = vadd.f32 0.0, %v1278
  %v1280 = vpop.f32.mrb[0].mxu0
  %v1281 = vadd.f32 0.0, %v1280
  %1282 = vmatprep.mubr.bf16.mxu0 0
  %1283 = vmatmul.mubr.bf16.gmra.mrb[0].mxu0 %v475
  %v1284 = vpop.f32.mrb[0].mxu0
  %v1285 = vadd.f32 0.0, %v1284
  %v1286 = vpop.f32.mrb[0].mxu0
  %v1287 = vadd.f32 0.0, %v1286
  %v1288 = vpop.f32.mrb[0].mxu0
  %v1289 = vadd.f32 0.0, %v1288
  %v1290 = vpop.f32.mrb[0].mxu0
  %v1291 = vadd.f32 0.0, %v1290
  %1292 = vdwg.mxu0
  %s1293 = scalar_lea.vmem %s0, 512
  %v1294 = vld [vmem:[%s1293] sm:$0xf]
  %v1295 = vld [vmem:[%s1293 + $0x4] sm:$0xf]
  %v1296 = vld [vmem:[%s1293 + $0x8] sm:$0xf]
  %v1297 = vld [vmem:[%s1293 + $0xc] sm:$0xf]
  %v1298 = vld [vmem:[%s1293 + $0x10] sm:$0xf]
  %v1299 = vld [vmem:[%s1293 + $0x14] sm:$0xf]
  %v1300 = vld [vmem:[%s1293 + $0x18] sm:$0xf]
  %v1301 = vld [vmem:[%s1293 + $0x1c] sm:$0xf]
  %v1302 = vld [vmem:[%s1293 + $0x20] sm:$0xf]
  %v1303 = vld [vmem:[%s1293 + $0x24] sm:$0xf]
  %v1304 = vld [vmem:[%s1293 + $0x28] sm:$0xf]
  %v1305 = vld [vmem:[%s1293 + $0x2c] sm:$0xf]
  %v1306 = vld [vmem:[%s1293 + $0x30] sm:$0xf]
  %v1307 = vld [vmem:[%s1293 + $0x34] sm:$0xf]
  %v1308 = vld [vmem:[%s1293 + $0x38] sm:$0xf]
  %v1309 = vld [vmem:[%s1293 + $0x3c] sm:$0xf]
  %v1310 = vld [vmem:[%s1293 + $0x40] sm:$0xf]
  %v1311 = vld [vmem:[%s1293 + $0x44] sm:$0xf]
  %v1312 = vld [vmem:[%s1293 + $0x48] sm:$0xf]
  %v1313 = vld [vmem:[%s1293 + $0x4c] sm:$0xf]
  %v1314 = vld [vmem:[%s1293 + $0x50] sm:$0xf]
  %v1315 = vld [vmem:[%s1293 + $0x54] sm:$0xf]
  %v1316 = vld [vmem:[%s1293 + $0x58] sm:$0xf]
  %v1317 = vld [vmem:[%s1293 + $0x5c] sm:$0xf]
  %v1318 = vld [vmem:[%s1293 + $0x60] sm:$0xf]
  %v1319 = vld [vmem:[%s1293 + $0x64] sm:$0xf]
  %v1320 = vld [vmem:[%s1293 + $0x68] sm:$0xf]
  %v1321 = vld [vmem:[%s1293 + $0x6c] sm:$0xf]
  %v1322 = vld [vmem:[%s1293 + $0x70] sm:$0xf]
  %v1323 = vld [vmem:[%s1293 + $0x74] sm:$0xf]
  %v1324 = vld [vmem:[%s1293 + $0x78] sm:$0xf]
  %v1325 = vld [vmem:[%s1293 + $0x7c] sm:$0xf]
  %v1326 = vld [vmem:[%s1293 + $0x80] sm:$0xf]
  %v1327 = vld [vmem:[%s1293 + $0x84] sm:$0xf]
  %v1328 = vld [vmem:[%s1293 + $0x88] sm:$0xf]
  %v1329 = vld [vmem:[%s1293 + $0x8c] sm:$0xf]
  %v1330 = vld [vmem:[%s1293 + $0x90] sm:$0xf]
  %v1331 = vld [vmem:[%s1293 + $0x94] sm:$0xf]
  %v1332 = vld [vmem:[%s1293 + $0x98] sm:$0xf]
  %v1333 = vld [vmem:[%s1293 + $0x9c] sm:$0xf]
  %v1334 = vld [vmem:[%s1293 + $0xa0] sm:$0xf]
  %v1335 = vld [vmem:[%s1293 + $0xa4] sm:$0xf]
  %v1336 = vld [vmem:[%s1293 + $0xa8] sm:$0xf]
  %v1337 = vld [vmem:[%s1293 + $0xac] sm:$0xf]
  %v1338 = vld [vmem:[%s1293 + $0xb0] sm:$0xf]
  %v1339 = vld [vmem:[%s1293 + $0xb4] sm:$0xf]
  %v1340 = vld [vmem:[%s1293 + $0xb8] sm:$0xf]
  %v1341 = vld [vmem:[%s1293 + $0xbc] sm:$0xf]
  %v1342 = vld [vmem:[%s1293 + $0xc0] sm:$0xf]
  %v1343 = vld [vmem:[%s1293 + $0xc4] sm:$0xf]
  %v1344 = vld [vmem:[%s1293 + $0xc8] sm:$0xf]
  %v1345 = vld [vmem:[%s1293 + $0xcc] sm:$0xf]
  %v1346 = vld [vmem:[%s1293 + $0xd0] sm:$0xf]
  %v1347 = vld [vmem:[%s1293 + $0xd4] sm:$0xf]
  %v1348 = vld [vmem:[%s1293 + $0xd8] sm:$0xf]
  %v1349 = vld [vmem:[%s1293 + $0xdc] sm:$0xf]
  %v1350 = vld [vmem:[%s1293 + $0xe0] sm:$0xf]
  %v1351 = vld [vmem:[%s1293 + $0xe4] sm:$0xf]
  %v1352 = vld [vmem:[%s1293 + $0xe8] sm:$0xf]
  %v1353 = vld [vmem:[%s1293 + $0xec] sm:$0xf]
  %v1354 = vld [vmem:[%s1293 + $0xf0] sm:$0xf]
  %v1355 = vld [vmem:[%s1293 + $0xf4] sm:$0xf]
  %v1356 = vld [vmem:[%s1293 + $0xf8] sm:$0xf]
  %v1357 = vld [vmem:[%s1293 + $0xfc] sm:$0xf]
  %v1358 = vld [vmem:[%s1293 + $0x100] sm:$0xf]
  %v1359 = vld [vmem:[%s1293 + $0x104] sm:$0xf]
  %v1360 = vld [vmem:[%s1293 + $0x108] sm:$0xf]
  %v1361 = vld [vmem:[%s1293 + $0x10c] sm:$0xf]
  %v1362 = vld [vmem:[%s1293 + $0x110] sm:$0xf]
  %v1363 = vld [vmem:[%s1293 + $0x114] sm:$0xf]
  %v1364 = vld [vmem:[%s1293 + $0x118] sm:$0xf]
  %v1365 = vld [vmem:[%s1293 + $0x11c] sm:$0xf]
  %v1366 = vld [vmem:[%s1293 + $0x120] sm:$0xf]
  %v1367 = vld [vmem:[%s1293 + $0x124] sm:$0xf]
  %v1368 = vld [vmem:[%s1293 + $0x128] sm:$0xf]
  %v1369 = vld [vmem:[%s1293 + $0x12c] sm:$0xf]
  %v1370 = vld [vmem:[%s1293 + $0x130] sm:$0xf]
  %v1371 = vld [vmem:[%s1293 + $0x134] sm:$0xf]
  %v1372 = vld [vmem:[%s1293 + $0x138] sm:$0xf]
  %v1373 = vld [vmem:[%s1293 + $0x13c] sm:$0xf]
  %v1374 = vld [vmem:[%s1293 + $0x140] sm:$0xf]
  %v1375 = vld [vmem:[%s1293 + $0x144] sm:$0xf]
  %v1376 = vld [vmem:[%s1293 + $0x148] sm:$0xf]
  %v1377 = vld [vmem:[%s1293 + $0x14c] sm:$0xf]
  %v1378 = vld [vmem:[%s1293 + $0x150] sm:$0xf]
  %v1379 = vld [vmem:[%s1293 + $0x154] sm:$0xf]
  %v1380 = vld [vmem:[%s1293 + $0x158] sm:$0xf]
  %v1381 = vld [vmem:[%s1293 + $0x15c] sm:$0xf]
  %v1382 = vld [vmem:[%s1293 + $0x160] sm:$0xf]
  %v1383 = vld [vmem:[%s1293 + $0x164] sm:$0xf]
  %v1384 = vld [vmem:[%s1293 + $0x168] sm:$0xf]
  %v1385 = vld [vmem:[%s1293 + $0x16c] sm:$0xf]
  %v1386 = vld [vmem:[%s1293 + $0x170] sm:$0xf]
  %v1387 = vld [vmem:[%s1293 + $0x174] sm:$0xf]
  %v1388 = vld [vmem:[%s1293 + $0x178] sm:$0xf]
  %v1389 = vld [vmem:[%s1293 + $0x17c] sm:$0xf]
  %v1390 = vld [vmem:[%s1293 + $0x180] sm:$0xf]
  %v1391 = vld [vmem:[%s1293 + $0x184] sm:$0xf]
  %v1392 = vld [vmem:[%s1293 + $0x188] sm:$0xf]
  %v1393 = vld [vmem:[%s1293 + $0x18c] sm:$0xf]
  %v1394 = vld [vmem:[%s1293 + $0x190] sm:$0xf]
  %v1395 = vld [vmem:[%s1293 + $0x194] sm:$0xf]
  %v1396 = vld [vmem:[%s1293 + $0x198] sm:$0xf]
  %v1397 = vld [vmem:[%s1293 + $0x19c] sm:$0xf]
  %v1398 = vld [vmem:[%s1293 + $0x1a0] sm:$0xf]
  %v1399 = vld [vmem:[%s1293 + $0x1a4] sm:$0xf]
  %v1400 = vld [vmem:[%s1293 + $0x1a8] sm:$0xf]
  %v1401 = vld [vmem:[%s1293 + $0x1ac] sm:$0xf]
  %v1402 = vld [vmem:[%s1293 + $0x1b0] sm:$0xf]
  %v1403 = vld [vmem:[%s1293 + $0x1b4] sm:$0xf]
  %v1404 = vld [vmem:[%s1293 + $0x1b8] sm:$0xf]
  %v1405 = vld [vmem:[%s1293 + $0x1bc] sm:$0xf]
  %v1406 = vld [vmem:[%s1293 + $0x1c0] sm:$0xf]
  %v1407 = vld [vmem:[%s1293 + $0x1c4] sm:$0xf]
  %v1408 = vld [vmem:[%s1293 + $0x1c8] sm:$0xf]
  %v1409 = vld [vmem:[%s1293 + $0x1cc] sm:$0xf]
  %v1410 = vld [vmem:[%s1293 + $0x1d0] sm:$0xf]
  %v1411 = vld [vmem:[%s1293 + $0x1d4] sm:$0xf]
  %v1412 = vld [vmem:[%s1293 + $0x1d8] sm:$0xf]
  %v1413 = vld [vmem:[%s1293 + $0x1dc] sm:$0xf]
  %v1414 = vld [vmem:[%s1293 + $0x1e0] sm:$0xf]
  %v1415 = vld [vmem:[%s1293 + $0x1e4] sm:$0xf]
  %v1416 = vld [vmem:[%s1293 + $0x1e8] sm:$0xf]
  %v1417 = vld [vmem:[%s1293 + $0x1ec] sm:$0xf]
  %v1418 = vld [vmem:[%s1293 + $0x1f0] sm:$0xf]
  %v1419 = vld [vmem:[%s1293 + $0x1f4] sm:$0xf]
  %v1420 = vld [vmem:[%s1293 + $0x1f8] sm:$0xf]
  %v1421 = vld [vmem:[%s1293 + $0x1fc] sm:$0xf]
  %v1550 = vunpack.c.l.b16 %v1294
  %v1551 = vunpack.c.l.b16 %v1295
  %v1552 = vunpack.c.l.b16 %v1296
  %v1553 = vunpack.c.l.b16 %v1297
  %v1554 = vunpack.c.l.b16 %v1298
  %v1555 = vunpack.c.l.b16 %v1299
  %v1556 = vunpack.c.l.b16 %v1300
  %v1557 = vunpack.c.l.b16 %v1301
  %v1558 = vunpack.c.l.b16 %v1302
  %v1559 = vunpack.c.l.b16 %v1303
  %v1560 = vunpack.c.l.b16 %v1304
  %v1561 = vunpack.c.l.b16 %v1305
  %v1562 = vunpack.c.l.b16 %v1306
  %v1563 = vunpack.c.l.b16 %v1307
  %v1564 = vunpack.c.l.b16 %v1308
  %v1565 = vunpack.c.l.b16 %v1309
  %v1566 = vunpack.c.l.b16 %v1310
  %v1567 = vunpack.c.l.b16 %v1311
  %v1568 = vunpack.c.l.b16 %v1312
  %v1569 = vunpack.c.l.b16 %v1313
  %v1570 = vunpack.c.l.b16 %v1314
  %v1571 = vunpack.c.l.b16 %v1315
  %v1572 = vunpack.c.l.b16 %v1316
  %v1573 = vunpack.c.l.b16 %v1317
  %v1574 = vunpack.c.l.b16 %v1318
  %v1575 = vunpack.c.l.b16 %v1319
  %v1576 = vunpack.c.l.b16 %v1320
  %v1577 = vunpack.c.l.b16 %v1321
  %v1578 = vunpack.c.l.b16 %v1322
  %v1579 = vunpack.c.l.b16 %v1323
  %v1580 = vunpack.c.l.b16 %v1324
  %v1581 = vunpack.c.l.b16 %v1325
  %v1582 = vunpack.c.l.b16 %v1326
  %v1583 = vunpack.c.l.b16 %v1327
  %v1584 = vunpack.c.l.b16 %v1328
  %v1585 = vunpack.c.l.b16 %v1329
  %v1586 = vunpack.c.l.b16 %v1330
  %v1587 = vunpack.c.l.b16 %v1331
  %v1588 = vunpack.c.l.b16 %v1332
  %v1589 = vunpack.c.l.b16 %v1333
  %v1590 = vunpack.c.l.b16 %v1334
  %v1591 = vunpack.c.l.b16 %v1335
  %v1592 = vunpack.c.l.b16 %v1336
  %v1593 = vunpack.c.l.b16 %v1337
  %v1594 = vunpack.c.l.b16 %v1338
  %v1595 = vunpack.c.l.b16 %v1339
  %v1596 = vunpack.c.l.b16 %v1340
  %v1597 = vunpack.c.l.b16 %v1341
  %v1598 = vunpack.c.l.b16 %v1342
  %v1599 = vunpack.c.l.b16 %v1343
  %v1600 = vunpack.c.l.b16 %v1344
  %v1601 = vunpack.c.l.b16 %v1345
  %v1602 = vunpack.c.l.b16 %v1346
  %v1603 = vunpack.c.l.b16 %v1347
  %v1604 = vunpack.c.l.b16 %v1348
  %v1605 = vunpack.c.l.b16 %v1349
  %v1606 = vunpack.c.l.b16 %v1350
  %v1607 = vunpack.c.l.b16 %v1351
  %v1608 = vunpack.c.l.b16 %v1352
  %v1609 = vunpack.c.l.b16 %v1353
  %v1610 = vunpack.c.l.b16 %v1354
  %v1611 = vunpack.c.l.b16 %v1355
  %v1612 = vunpack.c.l.b16 %v1356
  %v1613 = vunpack.c.l.b16 %v1357
  %v1614 = vunpack.c.l.b16 %v1358
  %v1615 = vunpack.c.l.b16 %v1359
  %v1616 = vunpack.c.l.b16 %v1360
  %v1617 = vunpack.c.l.b16 %v1361
  %v1618 = vunpack.c.l.b16 %v1362
  %v1619 = vunpack.c.l.b16 %v1363
  %v1620 = vunpack.c.l.b16 %v1364
  %v1621 = vunpack.c.l.b16 %v1365
  %v1622 = vunpack.c.l.b16 %v1366
  %v1623 = vunpack.c.l.b16 %v1367
  %v1624 = vunpack.c.l.b16 %v1368
  %v1625 = vunpack.c.l.b16 %v1369
  %v1626 = vunpack.c.l.b16 %v1370
  %v1627 = vunpack.c.l.b16 %v1371
  %v1628 = vunpack.c.l.b16 %v1372
  %v1629 = vunpack.c.l.b16 %v1373
  %v1630 = vunpack.c.l.b16 %v1374
  %v1631 = vunpack.c.l.b16 %v1375
  %v1632 = vunpack.c.l.b16 %v1376
  %v1633 = vunpack.c.l.b16 %v1377
  %v1634 = vunpack.c.l.b16 %v1378
  %v1635 = vunpack.c.l.b16 %v1379
  %v1636 = vunpack.c.l.b16 %v1380
  %v1637 = vunpack.c.l.b16 %v1381
  %v1638 = vunpack.c.l.b16 %v1382
  %v1639 = vunpack.c.l.b16 %v1383
  %v1640 = vunpack.c.l.b16 %v1384
  %v1641 = vunpack.c.l.b16 %v1385
  %v1642 = vunpack.c.l.b16 %v1386
  %v1643 = vunpack.c.l.b16 %v1387
  %v1644 = vunpack.c.l.b16 %v1388
  %v1645 = vunpack.c.l.b16 %v1389
  %v1646 = vunpack.c.l.b16 %v1390
  %v1647 = vunpack.c.l.b16 %v1391
  %v1648 = vunpack.c.l.b16 %v1392
  %v1649 = vunpack.c.l.b16 %v1393
  %v1650 = vunpack.c.l.b16 %v1394
  %v1651 = vunpack.c.l.b16 %v1395
  %v1652 = vunpack.c.l.b16 %v1396
  %v1653 = vunpack.c.l.b16 %v1397
  %v1654 = vunpack.c.l.b16 %v1398
  %v1655 = vunpack.c.l.b16 %v1399
  %v1656 = vunpack.c.l.b16 %v1400
  %v1657 = vunpack.c.l.b16 %v1401
  %v1658 = vunpack.c.l.b16 %v1402
  %v1659 = vunpack.c.l.b16 %v1403
  %v1660 = vunpack.c.l.b16 %v1404
  %v1661 = vunpack.c.l.b16 %v1405
  %v1662 = vunpack.c.l.b16 %v1406
  %v1663 = vunpack.c.l.b16 %v1407
  %v1664 = vunpack.c.l.b16 %v1408
  %v1665 = vunpack.c.l.b16 %v1409
  %v1666 = vunpack.c.l.b16 %v1410
  %v1667 = vunpack.c.l.b16 %v1411
  %v1668 = vunpack.c.l.b16 %v1412
  %v1669 = vunpack.c.l.b16 %v1413
  %v1670 = vunpack.c.l.b16 %v1414
  %v1671 = vunpack.c.l.b16 %v1415
  %v1672 = vunpack.c.l.b16 %v1416
  %v1673 = vunpack.c.l.b16 %v1417
  %v1674 = vunpack.c.l.b16 %v1418
  %v1675 = vunpack.c.l.b16 %v1419
  %v1676 = vunpack.c.l.b16 %v1420
  %v1677 = vunpack.c.l.b16 %v1421
  %v1678 = vpack.c.b16 %v1551, %v1550
  %v1679 = vpack.c.b16 %v1553, %v1552
  %v1680 = vpack.c.b16 %v1555, %v1554
  %v1681 = vpack.c.b16 %v1557, %v1556
  %v1682 = vpack.c.b16 %v1559, %v1558
  %v1683 = vpack.c.b16 %v1561, %v1560
  %v1684 = vpack.c.b16 %v1563, %v1562
  %v1685 = vpack.c.b16 %v1565, %v1564
  %v1686 = vpack.c.b16 %v1567, %v1566
  %v1687 = vpack.c.b16 %v1569, %v1568
  %v1688 = vpack.c.b16 %v1571, %v1570
  %v1689 = vpack.c.b16 %v1573, %v1572
  %v1690 = vpack.c.b16 %v1575, %v1574
  %v1691 = vpack.c.b16 %v1577, %v1576
  %v1692 = vpack.c.b16 %v1579, %v1578
  %v1693 = vpack.c.b16 %v1581, %v1580
  %v1694 = vpack.c.b16 %v1583, %v1582
  %v1695 = vpack.c.b16 %v1585, %v1584
  %v1696 = vpack.c.b16 %v1587, %v1586
  %v1697 = vpack.c.b16 %v1589, %v1588
  %v1698 = vpack.c.b16 %v1591, %v1590
  %v1699 = vpack.c.b16 %v1593, %v1592
  %v1700 = vpack.c.b16 %v1595, %v1594
  %v1701 = vpack.c.b16 %v1597, %v1596
  %v1702 = vpack.c.b16 %v1599, %v1598
  %v1703 = vpack.c.b16 %v1601, %v1600
  %v1704 = vpack.c.b16 %v1603, %v1602
  %v1705 = vpack.c.b16 %v1605, %v1604
  %v1706 = vpack.c.b16 %v1607, %v1606
  %v1707 = vpack.c.b16 %v1609, %v1608
  %v1708 = vpack.c.b16 %v1611, %v1610
  %v1709 = vpack.c.b16 %v1613, %v1612
  %v1710 = vpack.c.b16 %v1615, %v1614
  %v1711 = vpack.c.b16 %v1617, %v1616
  %v1712 = vpack.c.b16 %v1619, %v1618
  %v1713 = vpack.c.b16 %v1621, %v1620
  %v1714 = vpack.c.b16 %v1623, %v1622
  %v1715 = vpack.c.b16 %v1625, %v1624
  %v1716 = vpack.c.b16 %v1627, %v1626
  %v1717 = vpack.c.b16 %v1629, %v1628
  %v1718 = vpack.c.b16 %v1631, %v1630
  %v1719 = vpack.c.b16 %v1633, %v1632
  %v1720 = vpack.c.b16 %v1635, %v1634
  %v1721 = vpack.c.b16 %v1637, %v1636
  %v1722 = vpack.c.b16 %v1639, %v1638
  %v1723 = vpack.c.b16 %v1641, %v1640
  %v1724 = vpack.c.b16 %v1643, %v1642
  %v1725 = vpack.c.b16 %v1645, %v1644
  %v1726 = vpack.c.b16 %v1647, %v1646
  %v1727 = vpack.c.b16 %v1649, %v1648
  %v1728 = vpack.c.b16 %v1651, %v1650
  %v1729 = vpack.c.b16 %v1653, %v1652
  %v1730 = vpack.c.b16 %v1655, %v1654
  %v1731 = vpack.c.b16 %v1657, %v1656
  %v1732 = vpack.c.b16 %v1659, %v1658
  %v1733 = vpack.c.b16 %v1661, %v1660
  %v1734 = vpack.c.b16 %v1663, %v1662
  %v1735 = vpack.c.b16 %v1665, %v1664
  %v1736 = vpack.c.b16 %v1667, %v1666
  %v1737 = vpack.c.b16 %v1669, %v1668
  %v1738 = vpack.c.b16 %v1671, %v1670
  %v1739 = vpack.c.b16 %v1673, %v1672
  %v1740 = vpack.c.b16 %v1675, %v1674
  %v1741 = vpack.c.b16 %v1677, %v1676
  %1806 = vmatprep.subr.bf16.mxu0 %v589
  %1807 = vmatpush1.bf16.msra.mxu0 %v588
  %1808 = vmatprep.subr.bf16.mxu0 %v591
  %1809 = vmatpush1.bf16.msra.mxu0 %v590
  %1810 = vmatprep.subr.bf16.mxu0 %v593
  %1811 = vmatpush1.bf16.msra.mxu0 %v592
  %1812 = vmatprep.subr.bf16.mxu0 %v595
  %1813 = vmatpush1.bf16.msra.mxu0 %v594
  %1814 = vmatprep.subr.bf16.mxu0 %v597
  %1815 = vmatpush1.bf16.msra.mxu0 %v596
  %1816 = vmatprep.subr.bf16.mxu0 %v599
  %1817 = vmatpush1.bf16.msra.mxu0 %v598
  %1818 = vmatprep.subr.bf16.mxu0 %v601
  %1819 = vmatpush1.bf16.msra.mxu0 %v600
  %1820 = vmatprep.subr.bf16.mxu0 %v603
  %1821 = vmatpush1.bf16.msra.mxu0 %v602
  %1822 = vmatprep.subr.bf16.mxu0 0
  %1823 = vmatpush1.bf16.msra.mxu0 0
  %1824 = vmatprep.subr.bf16.mxu0 0
  %1825 = vmatpush1.bf16.msra.mxu0 0
  %1826 = vmatprep.subr.bf16.mxu0 0
  %1827 = vmatpush1.bf16.msra.mxu0 0
  %1828 = vmatprep.subr.bf16.mxu0 0
  %1829 = vmatpush1.bf16.msra.mxu0 0
  %1830 = vmatprep.subr.bf16.mxu0 0
  %1831 = vmatpush1.bf16.msra.mxu0 0
  %1832 = vmatprep.subr.bf16.mxu0 0
  %1833 = vmatpush1.bf16.msra.mxu0 0
  %1834 = vmatprep.subr.bf16.mxu0 0
  %1835 = vmatpush1.bf16.msra.mxu0 0
  %1836 = vmatprep.subr.bf16.mxu0 0
  %1837 = vmatpush1.bf16.msra.mxu0 0
  %1838 = vmatprep.mubr.bf16.mxu0 0
  %1839 = vmatmul.mubr.bf16.gmra.mrb[0].mxu0 %v1678
  %v1840 = vpop.f32.mrb[0].mxu0
  %v1841 = vadd.f32 0.0, %v1840
  %v1842 = vpop.f32.mrb[0].mxu0
  %v1843 = vadd.f32 0.0, %v1842
  %v1844 = vpop.f32.mrb[0].mxu0
  %v1845 = vadd.f32 0.0, %v1844
  %v1846 = vpop.f32.mrb[0].mxu0
  %v1847 = vadd.f32 0.0, %v1846
  %1848 = vmatprep.mubr.bf16.mxu0 0
  %1849 = vmatmul.mubr.bf16.gmra.mrb[0].mxu0 %v1679
  %v1850 = vpop.f32.mrb[0].mxu0
  %v1851 = vadd.f32 0.0, %v1850
  %v1852 = vpop.f32.mrb[0].mxu0
  %v1853 = vadd.f32 0.0, %v1852
  %v1854 = vpop.f32.mrb[0].mxu0
  %v1855 = vadd.f32 0.0, %v1854
  %v1856 = vpop.f32.mrb[0].mxu0
  %v1857 = vadd.f32 0.0, %v1856
  %1858 = vmatprep.mubr.bf16.mxu0 0
  %1859 = vmatmul.mubr.bf16.gmra.mrb[0].mxu0 %v1680
  %v1860 = vpop.f32.mrb[0].mxu0
  %v1861 = vadd.f32 0.0, %v1860
  %v1862 = vpop.f32.mrb[0].mxu0
  %v1863 = vadd.f32 0.0, %v1862
  %v1864 = vpop.f32.mrb[0].mxu0
  %v1865 = vadd.f32 0.0, %v1864
  %v1866 = vpop.f32.mrb[0].mxu0
  %v1867 = vadd.f32 0.0, %v1866
  %1868 = vmatprep.mubr.bf16.mxu0 0
  %1869 = vmatmul.mubr.bf16.gmra.mrb[0].mxu0 %v1681
  %v1870 = vpop.f32.mrb[0].mxu0
  %v1871 = vadd.f32 0.0, %v1870
  %v1872 = vpop.f32.mrb[0].mxu0
  %v1873 = vadd.f32 0.0, %v1872
  %v1874 = vpop.f32.mrb[0].mxu0
  %v1875 = vadd.f32 0.0, %v1874
  %v1876 = vpop.f32.mrb[0].mxu0
  %v1877 = vadd.f32 0.0, %v1876
  %1878 = vmatprep.mubr.bf16.mxu0 0
  %1879 = vmatmul.mubr.bf16.gmra.mrb[0].mxu0 %v1682
  %v1880 = vpop.f32.mrb[0].mxu0
  %v1881 = vadd.f32 0.0, %v1880
  %v1882 = vpop.f32.mrb[0].mxu0
  %v1883 = vadd.f32 0.0, %v1882
  %v1884 = vpop.f32.mrb[0].mxu0
  %v1885 = vadd.f32 0.0, %v1884
  %v1886 = vpop.f32.mrb[0].mxu0
  %v1887 = vadd.f32 0.0, %v1886
  %1888 = vmatprep.mubr.bf16.mxu0 0
  %1889 = vmatmul.mubr.bf16.gmra.mrb[0].mxu0 %v1683
  %v1890 = vpop.f32.mrb[0].mxu0
  %v1891 = vadd.f32 0.0, %v1890
  %v1892 = vpop.f32.mrb[0].mxu0
  %v1893 = vadd.f32 0.0, %v1892
  %v1894 = vpop.f32.mrb[0].mxu0
  %v1895 = vadd.f32 0.0, %v1894
  %v1896 = vpop.f32.mrb[0].mxu0
  %v1897 = vadd.f32 0.0, %v1896
  %1898 = vmatprep.mubr.bf16.mxu0 0
  %1899 = vmatmul.mubr.bf16.gmra.mrb[0].mxu0 %v1684
  %v1900 = vpop.f32.mrb[0].mxu0
  %v1901 = vadd.f32 0.0, %v1900
  %v1902 = vpop.f32.mrb[0].mxu0
  %v1903 = vadd.f32 0.0, %v1902
  %v1904 = vpop.f32.mrb[0].mxu0
  %v1905 = vadd.f32 0.0, %v1904
  %v1906 = vpop.f32.mrb[0].mxu0
  %v1907 = vadd.f32 0.0, %v1906
  %1908 = vmatprep.mubr.bf16.mxu0 0
  %1909 = vmatmul.mubr.bf16.gmra.mrb[0].mxu0 %v1685
  %v1910 = vpop.f32.mrb[0].mxu0
  %v1911 = vadd.f32 0.0, %v1910
  %v1912 = vpop.f32.mrb[0].mxu0
  %v1913 = vadd.f32 0.0, %v1912
  %v1914 = vpop.f32.mrb[0].mxu0
  %v1915 = vadd.f32 0.0, %v1914
  %v1916 = vpop.f32.mrb[0].mxu0
  %v1917 = vadd.f32 0.0, %v1916
  %1918 = vmatprep.mubr.bf16.mxu0 0
  %1919 = vmatmul.mubr.bf16.gmra.mrb[0].mxu0 %v1686
  %v1920 = vpop.f32.mrb[0].mxu0
  %v1921 = vadd.f32 0.0, %v1920
  %v1922 = vpop.f32.mrb[0].mxu0
  %v1923 = vadd.f32 0.0, %v1922
  %v1924 = vpop.f32.mrb[0].mxu0
  %v1925 = vadd.f32 0.0, %v1924
  %v1926 = vpop.f32.mrb[0].mxu0
  %v1927 = vadd.f32 0.0, %v1926
  %1928 = vmatprep.mubr.bf16.mxu0 0
  %1929 = vmatmul.mubr.bf16.gmra.mrb[0].mxu0 %v1687
  %v1930 = vpop.f32.mrb[0].mxu0
  %v1931 = vadd.f32 0.0, %v1930
  %v1932 = vpop.f32.mrb[0].mxu0
  %v1933 = vadd.f32 0.0, %v1932
  %v1934 = vpop.f32.mrb[0].mxu0
  %v1935 = vadd.f32 0.0, %v1934
  %v1936 = vpop.f32.mrb[0].mxu0
  %v1937 = vadd.f32 0.0, %v1936
  %1938 = vmatprep.mubr.bf16.mxu0 0
  %1939 = vmatmul.mubr.bf16.gmra.mrb[0].mxu0 %v1688
  %v1940 = vpop.f32.mrb[0].mxu0
  %v1941 = vadd.f32 0.0, %v1940
  %v1942 = vpop.f32.mrb[0].mxu0
  %v1943 = vadd.f32 0.0, %v1942
  %v1944 = vpop.f32.mrb[0].mxu0
  %v1945 = vadd.f32 0.0, %v1944
  %v1946 = vpop.f32.mrb[0].mxu0
  %v1947 = vadd.f32 0.0, %v1946
  %1948 = vmatprep.mubr.bf16.mxu0 0
  %1949 = vmatmul.mubr.bf16.gmra.mrb[0].mxu0 %v1689
  %v1950 = vpop.f32.mrb[0].mxu0
  %v1951 = vadd.f32 0.0, %v1950
  %v1952 = vpop.f32.mrb[0].mxu0
  %v1953 = vadd.f32 0.0, %v1952
  %v1954 = vpop.f32.mrb[0].mxu0
  %v1955 = vadd.f32 0.0, %v1954
  %v1956 = vpop.f32.mrb[0].mxu0
  %v1957 = vadd.f32 0.0, %v1956
  %1958 = vmatprep.mubr.bf16.mxu0 0
  %1959 = vmatmul.mubr.bf16.gmra.mrb[0].mxu0 %v1690
  %v1960 = vpop.f32.mrb[0].mxu0
  %v1961 = vadd.f32 0.0, %v1960
  %v1962 = vpop.f32.mrb[0].mxu0
  %v1963 = vadd.f32 0.0, %v1962
  %v1964 = vpop.f32.mrb[0].mxu0
  %v1965 = vadd.f32 0.0, %v1964
  %v1966 = vpop.f32.mrb[0].mxu0
  %v1967 = vadd.f32 0.0, %v1966
  %1968 = vmatprep.mubr.bf16.mxu0 0
  %1969 = vmatmul.mubr.bf16.gmra.mrb[0].mxu0 %v1691
  %v1970 = vpop.f32.mrb[0].mxu0
  %v1971 = vadd.f32 0.0, %v1970
  %v1972 = vpop.f32.mrb[0].mxu0
  %v1973 = vadd.f32 0.0, %v1972
  %v1974 = vpop.f32.mrb[0].mxu0
  %v1975 = vadd.f32 0.0, %v1974
  %v1976 = vpop.f32.mrb[0].mxu0
  %v1977 = vadd.f32 0.0, %v1976
  %1978 = vmatprep.mubr.bf16.mxu0 0
  %1979 = vmatmul.mubr.bf16.gmra.mrb[0].mxu0 %v1692
  %v1980 = vpop.f32.mrb[0].mxu0
  %v1981 = vadd.f32 0.0, %v1980
  %v1982 = vpop.f32.mrb[0].mxu0
  %v1983 = vadd.f32 0.0, %v1982
  %v1984 = vpop.f32.mrb[0].mxu0
  %v1985 = vadd.f32 0.0, %v1984
  %v1986 = vpop.f32.mrb[0].mxu0
  %v1987 = vadd.f32 0.0, %v1986
  %1988 = vmatprep.mubr.bf16.mxu0 0
  %1989 = vmatmul.mubr.bf16.gmra.mrb[0].mxu0 %v1693
  %v1990 = vpop.f32.mrb[0].mxu0
  %v1991 = vadd.f32 0.0, %v1990
  %v1992 = vpop.f32.mrb[0].mxu0
  %v1993 = vadd.f32 0.0, %v1992
  %v1994 = vpop.f32.mrb[0].mxu0
  %v1995 = vadd.f32 0.0, %v1994
  %v1996 = vpop.f32.mrb[0].mxu0
  %v1997 = vadd.f32 0.0, %v1996
  %1998 = vmatprep.mubr.bf16.mxu0 0
  %1999 = vmatmul.mubr.bf16.gmra.mrb[0].mxu0 %v1694
  %v2000 = vpop.f32.mrb[0].mxu0
  %v2001 = vadd.f32 0.0, %v2000
  %v2002 = vpop.f32.mrb[0].mxu0
  %v2003 = vadd.f32 0.0, %v2002
  %v2004 = vpop.f32.mrb[0].mxu0
  %v2005 = vadd.f32 0.0, %v2004
  %v2006 = vpop.f32.mrb[0].mxu0
  %v2007 = vadd.f32 0.0, %v2006
  %2008 = vmatprep.mubr.bf16.mxu0 0
  %2009 = vmatmul.mubr.bf16.gmra.mrb[0].mxu0 %v1695
  %v2010 = vpop.f32.mrb[0].mxu0
  %v2011 = vadd.f32 0.0, %v2010
  %v2012 = vpop.f32.mrb[0].mxu0
  %v2013 = vadd.f32 0.0, %v2012
  %v2014 = vpop.f32.mrb[0].mxu0
  %v2015 = vadd.f32 0.0, %v2014
  %v2016 = vpop.f32.mrb[0].mxu0
  %v2017 = vadd.f32 0.0, %v2016
  %2018 = vmatprep.mubr.bf16.mxu0 0
  %2019 = vmatmul.mubr.bf16.gmra.mrb[0].mxu0 %v1696
  %v2020 = vpop.f32.mrb[0].mxu0
  %v2021 = vadd.f32 0.0, %v2020
  %v2022 = vpop.f32.mrb[0].mxu0
  %v2023 = vadd.f32 0.0, %v2022
  %v2024 = vpop.f32.mrb[0].mxu0
  %v2025 = vadd.f32 0.0, %v2024
  %v2026 = vpop.f32.mrb[0].mxu0
  %v2027 = vadd.f32 0.0, %v2026
  %2028 = vmatprep.mubr.bf16.mxu0 0
  %2029 = vmatmul.mubr.bf16.gmra.mrb[0].mxu0 %v1697
  %v2030 = vpop.f32.mrb[0].mxu0
  %v2031 = vadd.f32 0.0, %v2030
  %v2032 = vpop.f32.mrb[0].mxu0
  %v2033 = vadd.f32 0.0, %v2032
  %v2034 = vpop.f32.mrb[0].mxu0
  %v2035 = vadd.f32 0.0, %v2034
  %v2036 = vpop.f32.mrb[0].mxu0
  %v2037 = vadd.f32 0.0, %v2036
  %2038 = vmatprep.mubr.bf16.mxu0 0
  %2039 = vmatmul.mubr.bf16.gmra.mrb[0].mxu0 %v1698
  %v2040 = vpop.f32.mrb[0].mxu0
  %v2041 = vadd.f32 0.0, %v2040
  %v2042 = vpop.f32.mrb[0].mxu0
  %v2043 = vadd.f32 0.0, %v2042
  %v2044 = vpop.f32.mrb[0].mxu0
  %v2045 = vadd.f32 0.0, %v2044
  %v2046 = vpop.f32.mrb[0].mxu0
  %v2047 = vadd.f32 0.0, %v2046
  %2048 = vmatprep.mubr.bf16.mxu0 0
  %2049 = vmatmul.mubr.bf16.gmra.mrb[0].mxu0 %v1699
  %v2050 = vpop.f32.mrb[0].mxu0
  %v2051 = vadd.f32 0.0, %v2050
  %v2052 = vpop.f32.mrb[0].mxu0
  %v2053 = vadd.f32 0.0, %v2052
  %v2054 = vpop.f32.mrb[0].mxu0
  %v2055 = vadd.f32 0.0, %v2054
  %v2056 = vpop.f32.mrb[0].mxu0
  %v2057 = vadd.f32 0.0, %v2056
  %2058 = vmatprep.mubr.bf16.mxu0 0
  %2059 = vmatmul.mubr.bf16.gmra.mrb[0].mxu0 %v1700
  %v2060 = vpop.f32.mrb[0].mxu0
  %v2061 = vadd.f32 0.0, %v2060
  %v2062 = vpop.f32.mrb[0].mxu0
  %v2063 = vadd.f32 0.0, %v2062
  %v2064 = vpop.f32.mrb[0].mxu0
  %v2065 = vadd.f32 0.0, %v2064
  %v2066 = vpop.f32.mrb[0].mxu0
  %v2067 = vadd.f32 0.0, %v2066
  %2068 = vmatprep.mubr.bf16.mxu0 0
  %2069 = vmatmul.mubr.bf16.gmra.mrb[0].mxu0 %v1701
  %v2070 = vpop.f32.mrb[0].mxu0
  %v2071 = vadd.f32 0.0, %v2070
  %v2072 = vpop.f32.mrb[0].mxu0
  %v2073 = vadd.f32 0.0, %v2072
  %v2074 = vpop.f32.mrb[0].mxu0
  %v2075 = vadd.f32 0.0, %v2074
  %v2076 = vpop.f32.mrb[0].mxu0
  %v2077 = vadd.f32 0.0, %v2076
  %2078 = vmatprep.mubr.bf16.mxu0 0
  %2079 = vmatmul.mubr.bf16.gmra.mrb[0].mxu0 %v1702
  %v2080 = vpop.f32.mrb[0].mxu0
  %v2081 = vadd.f32 0.0, %v2080
  %v2082 = vpop.f32.mrb[0].mxu0
  %v2083 = vadd.f32 0.0, %v2082
  %v2084 = vpop.f32.mrb[0].mxu0
  %v2085 = vadd.f32 0.0, %v2084
  %v2086 = vpop.f32.mrb[0].mxu0
  %v2087 = vadd.f32 0.0, %v2086
  %2088 = vmatprep.mubr.bf16.mxu0 0
  %2089 = vmatmul.mubr.bf16.gmra.mrb[0].mxu0 %v1703
  %v2090 = vpop.f32.mrb[0].mxu0
  %v2091 = vadd.f32 0.0, %v2090
  %v2092 = vpop.f32.mrb[0].mxu0
  %v2093 = vadd.f32 0.0, %v2092
  %v2094 = vpop.f32.mrb[0].mxu0
  %v2095 = vadd.f32 0.0, %v2094
  %v2096 = vpop.f32.mrb[0].mxu0
  %v2097 = vadd.f32 0.0, %v2096
  %2098 = vmatprep.mubr.bf16.mxu0 0
  %2099 = vmatmul.mubr.bf16.gmra.mrb[0].mxu0 %v1704
  %v2100 = vpop.f32.mrb[0].mxu0
  %v2101 = vadd.f32 0.0, %v2100
  %v2102 = vpop.f32.mrb[0].mxu0
  %v2103 = vadd.f32 0.0, %v2102
  %v2104 = vpop.f32.mrb[0].mxu0
  %v2105 = vadd.f32 0.0, %v2104
  %v2106 = vpop.f32.mrb[0].mxu0
  %v2107 = vadd.f32 0.0, %v2106
  %2108 = vmatprep.mubr.bf16.mxu0 0
  %2109 = vmatmul.mubr.bf16.gmra.mrb[0].mxu0 %v1705
  %v2110 = vpop.f32.mrb[0].mxu0
  %v2111 = vadd.f32 0.0, %v2110
  %v2112 = vpop.f32.mrb[0].mxu0
  %v2113 = vadd.f32 0.0, %v2112
  %v2114 = vpop.f32.mrb[0].mxu0
  %v2115 = vadd.f32 0.0, %v2114
  %v2116 = vpop.f32.mrb[0].mxu0
  %v2117 = vadd.f32 0.0, %v2116
  %2118 = vmatprep.mubr.bf16.mxu0 0
  %2119 = vmatmul.mubr.bf16.gmra.mrb[0].mxu0 %v1706
  %v2120 = vpop.f32.mrb[0].mxu0
  %v2121 = vadd.f32 0.0, %v2120
  %v2122 = vpop.f32.mrb[0].mxu0
  %v2123 = vadd.f32 0.0, %v2122
  %v2124 = vpop.f32.mrb[0].mxu0
  %v2125 = vadd.f32 0.0, %v2124
  %v2126 = vpop.f32.mrb[0].mxu0
  %v2127 = vadd.f32 0.0, %v2126
  %2128 = vmatprep.mubr.bf16.mxu0 0
  %2129 = vmatmul.mubr.bf16.gmra.mrb[0].mxu0 %v1707
  %v2130 = vpop.f32.mrb[0].mxu0
  %v2131 = vadd.f32 0.0, %v2130
  %v2132 = vpop.f32.mrb[0].mxu0
  %v2133 = vadd.f32 0.0, %v2132
  %v2134 = vpop.f32.mrb[0].mxu0
  %v2135 = vadd.f32 0.0, %v2134
  %v2136 = vpop.f32.mrb[0].mxu0
  %v2137 = vadd.f32 0.0, %v2136
  %2138 = vmatprep.mubr.bf16.mxu0 0
  %2139 = vmatmul.mubr.bf16.gmra.mrb[0].mxu0 %v1708
  %v2140 = vpop.f32.mrb[0].mxu0
  %v2141 = vadd.f32 0.0, %v2140
  %v2142 = vpop.f32.mrb[0].mxu0
  %v2143 = vadd.f32 0.0, %v2142
  %v2144 = vpop.f32.mrb[0].mxu0
  %v2145 = vadd.f32 0.0, %v2144
  %v2146 = vpop.f32.mrb[0].mxu0
  %v2147 = vadd.f32 0.0, %v2146
  %2148 = vmatprep.mubr.bf16.mxu0 0
  %2149 = vmatmul.mubr.bf16.gmra.mrb[0].mxu0 %v1709
  %v2150 = vpop.f32.mrb[0].mxu0
  %v2151 = vadd.f32 0.0, %v2150
  %v2152 = vpop.f32.mrb[0].mxu0
  %v2153 = vadd.f32 0.0, %v2152
  %v2154 = vpop.f32.mrb[0].mxu0
  %v2155 = vadd.f32 0.0, %v2154
  %v2156 = vpop.f32.mrb[0].mxu0
  %v2157 = vadd.f32 0.0, %v2156
  %2158 = vmatprep.mubr.bf16.mxu0 0
  %2159 = vmatmul.mubr.bf16.gmra.mrb[0].mxu0 %v1710
  %v2160 = vpop.f32.mrb[0].mxu0
  %v2161 = vadd.f32 0.0, %v2160
  %v2162 = vpop.f32.mrb[0].mxu0
  %v2163 = vadd.f32 0.0, %v2162
  %v2164 = vpop.f32.mrb[0].mxu0
  %v2165 = vadd.f32 0.0, %v2164
  %v2166 = vpop.f32.mrb[0].mxu0
  %v2167 = vadd.f32 0.0, %v2166
  %2168 = vmatprep.mubr.bf16.mxu0 0
  %2169 = vmatmul.mubr.bf16.gmra.mrb[0].mxu0 %v1711
  %v2170 = vpop.f32.mrb[0].mxu0
  %v2171 = vadd.f32 0.0, %v2170
  %v2172 = vpop.f32.mrb[0].mxu0
  %v2173 = vadd.f32 0.0, %v2172
  %v2174 = vpop.f32.mrb[0].mxu0
  %v2175 = vadd.f32 0.0, %v2174
  %v2176 = vpop.f32.mrb[0].mxu0
  %v2177 = vadd.f32 0.0, %v2176
  %2178 = vmatprep.mubr.bf16.mxu0 0
  %2179 = vmatmul.mubr.bf16.gmra.mrb[0].mxu0 %v1712
  %v2180 = vpop.f32.mrb[0].mxu0
  %v2181 = vadd.f32 0.0, %v2180
  %v2182 = vpop.f32.mrb[0].mxu0
  %v2183 = vadd.f32 0.0, %v2182
  %v2184 = vpop.f32.mrb[0].mxu0
  %v2185 = vadd.f32 0.0, %v2184
  %v2186 = vpop.f32.mrb[0].mxu0
  %v2187 = vadd.f32 0.0, %v2186
  %2188 = vmatprep.mubr.bf16.mxu0 0
  %2189 = vmatmul.mubr.bf16.gmra.mrb[0].mxu0 %v1713
  %v2190 = vpop.f32.mrb[0].mxu0
  %v2191 = vadd.f32 0.0, %v2190
  %v2192 = vpop.f32.mrb[0].mxu0
  %v2193 = vadd.f32 0.0, %v2192
  %v2194 = vpop.f32.mrb[0].mxu0
  %v2195 = vadd.f32 0.0, %v2194
  %v2196 = vpop.f32.mrb[0].mxu0
  %v2197 = vadd.f32 0.0, %v2196
  %2198 = vmatprep.mubr.bf16.mxu0 0
  %2199 = vmatmul.mubr.bf16.gmra.mrb[0].mxu0 %v1714
  %v2200 = vpop.f32.mrb[0].mxu0
  %v2201 = vadd.f32 0.0, %v2200
  %v2202 = vpop.f32.mrb[0].mxu0
  %v2203 = vadd.f32 0.0, %v2202
  %v2204 = vpop.f32.mrb[0].mxu0
  %v2205 = vadd.f32 0.0, %v2204
  %v2206 = vpop.f32.mrb[0].mxu0
  %v2207 = vadd.f32 0.0, %v2206
  %2208 = vmatprep.mubr.bf16.mxu0 0
  %2209 = vmatmul.mubr.bf16.gmra.mrb[0].mxu0 %v1715
  %v2210 = vpop.f32.mrb[0].mxu0
  %v2211 = vadd.f32 0.0, %v2210
  %v2212 = vpop.f32.mrb[0].mxu0
  %v2213 = vadd.f32 0.0, %v2212
  %v2214 = vpop.f32.mrb[0].mxu0
  %v2215 = vadd.f32 0.0, %v2214
  %v2216 = vpop.f32.mrb[0].mxu0
  %v2217 = vadd.f32 0.0, %v2216
  %2218 = vmatprep.mubr.bf16.mxu0 0
  %2219 = vmatmul.mubr.bf16.gmra.mrb[0].mxu0 %v1716
  %v2220 = vpop.f32.mrb[0].mxu0
  %v2221 = vadd.f32 0.0, %v2220
  %v2222 = vpop.f32.mrb[0].mxu0
  %v2223 = vadd.f32 0.0, %v2222
  %v2224 = vpop.f32.mrb[0].mxu0
  %v2225 = vadd.f32 0.0, %v2224
  %v2226 = vpop.f32.mrb[0].mxu0
  %v2227 = vadd.f32 0.0, %v2226
  %2228 = vmatprep.mubr.bf16.mxu0 0
  %2229 = vmatmul.mubr.bf16.gmra.mrb[0].mxu0 %v1717
  %v2230 = vpop.f32.mrb[0].mxu0
  %v2231 = vadd.f32 0.0, %v2230
  %v2232 = vpop.f32.mrb[0].mxu0
  %v2233 = vadd.f32 0.0, %v2232
  %v2234 = vpop.f32.mrb[0].mxu0
  %v2235 = vadd.f32 0.0, %v2234
  %v2236 = vpop.f32.mrb[0].mxu0
  %v2237 = vadd.f32 0.0, %v2236
  %2238 = vmatprep.mubr.bf16.mxu0 0
  %2239 = vmatmul.mubr.bf16.gmra.mrb[0].mxu0 %v1718
  %v2240 = vpop.f32.mrb[0].mxu0
  %v2241 = vadd.f32 0.0, %v2240
  %v2242 = vpop.f32.mrb[0].mxu0
  %v2243 = vadd.f32 0.0, %v2242
  %v2244 = vpop.f32.mrb[0].mxu0
  %v2245 = vadd.f32 0.0, %v2244
  %v2246 = vpop.f32.mrb[0].mxu0
  %v2247 = vadd.f32 0.0, %v2246
  %2248 = vmatprep.mubr.bf16.mxu0 0
  %2249 = vmatmul.mubr.bf16.gmra.mrb[0].mxu0 %v1719
  %v2250 = vpop.f32.mrb[0].mxu0
  %v2251 = vadd.f32 0.0, %v2250
  %v2252 = vpop.f32.mrb[0].mxu0
  %v2253 = vadd.f32 0.0, %v2252
  %v2254 = vpop.f32.mrb[0].mxu0
  %v2255 = vadd.f32 0.0, %v2254
  %v2256 = vpop.f32.mrb[0].mxu0
  %v2257 = vadd.f32 0.0, %v2256
  %2258 = vmatprep.mubr.bf16.mxu0 0
  %2259 = vmatmul.mubr.bf16.gmra.mrb[0].mxu0 %v1720
  %v2260 = vpop.f32.mrb[0].mxu0
  %v2261 = vadd.f32 0.0, %v2260
  %v2262 = vpop.f32.mrb[0].mxu0
  %v2263 = vadd.f32 0.0, %v2262
  %v2264 = vpop.f32.mrb[0].mxu0
  %v2265 = vadd.f32 0.0, %v2264
  %v2266 = vpop.f32.mrb[0].mxu0
  %v2267 = vadd.f32 0.0, %v2266
  %2268 = vmatprep.mubr.bf16.mxu0 0
  %2269 = vmatmul.mubr.bf16.gmra.mrb[0].mxu0 %v1721
  %v2270 = vpop.f32.mrb[0].mxu0
  %v2271 = vadd.f32 0.0, %v2270
  %v2272 = vpop.f32.mrb[0].mxu0
  %v2273 = vadd.f32 0.0, %v2272
  %v2274 = vpop.f32.mrb[0].mxu0
  %v2275 = vadd.f32 0.0, %v2274
  %v2276 = vpop.f32.mrb[0].mxu0
  %v2277 = vadd.f32 0.0, %v2276
  %2278 = vmatprep.mubr.bf16.mxu0 0
  %2279 = vmatmul.mubr.bf16.gmra.mrb[0].mxu0 %v1722
  %v2280 = vpop.f32.mrb[0].mxu0
  %v2281 = vadd.f32 0.0, %v2280
  %v2282 = vpop.f32.mrb[0].mxu0
  %v2283 = vadd.f32 0.0, %v2282
  %v2284 = vpop.f32.mrb[0].mxu0
  %v2285 = vadd.f32 0.0, %v2284
  %v2286 = vpop.f32.mrb[0].mxu0
  %v2287 = vadd.f32 0.0, %v2286
  %2288 = vmatprep.mubr.bf16.mxu0 0
  %2289 = vmatmul.mubr.bf16.gmra.mrb[0].mxu0 %v1723
  %v2290 = vpop.f32.mrb[0].mxu0
  %v2291 = vadd.f32 0.0, %v2290
  %v2292 = vpop.f32.mrb[0].mxu0
  %v2293 = vadd.f32 0.0, %v2292
  %v2294 = vpop.f32.mrb[0].mxu0
  %v2295 = vadd.f32 0.0, %v2294
  %v2296 = vpop.f32.mrb[0].mxu0
  %v2297 = vadd.f32 0.0, %v2296
  %2298 = vmatprep.mubr.bf16.mxu0 0
  %2299 = vmatmul.mubr.bf16.gmra.mrb[0].mxu0 %v1724
  %v2300 = vpop.f32.mrb[0].mxu0
  %v2301 = vadd.f32 0.0, %v2300
  %v2302 = vpop.f32.mrb[0].mxu0
  %v2303 = vadd.f32 0.0, %v2302
  %v2304 = vpop.f32.mrb[0].mxu0
  %v2305 = vadd.f32 0.0, %v2304
  %v2306 = vpop.f32.mrb[0].mxu0
  %v2307 = vadd.f32 0.0, %v2306
  %2308 = vmatprep.mubr.bf16.mxu0 0
  %2309 = vmatmul.mubr.bf16.gmra.mrb[0].mxu0 %v1725
  %v2310 = vpop.f32.mrb[0].mxu0
  %v2311 = vadd.f32 0.0, %v2310
  %v2312 = vpop.f32.mrb[0].mxu0
  %v2313 = vadd.f32 0.0, %v2312
  %v2314 = vpop.f32.mrb[0].mxu0
  %v2315 = vadd.f32 0.0, %v2314
  %v2316 = vpop.f32.mrb[0].mxu0
  %v2317 = vadd.f32 0.0, %v2316
  %2318 = vmatprep.mubr.bf16.mxu0 0
  %2319 = vmatmul.mubr.bf16.gmra.mrb[0].mxu0 %v1726
  %v2320 = vpop.f32.mrb[0].mxu0
  %v2321 = vadd.f32 0.0, %v2320
  %v2322 = vpop.f32.mrb[0].mxu0
  %v2323 = vadd.f32 0.0, %v2322
  %v2324 = vpop.f32.mrb[0].mxu0
  %v2325 = vadd.f32 0.0, %v2324
  %v2326 = vpop.f32.mrb[0].mxu0
  %v2327 = vadd.f32 0.0, %v2326
  %2328 = vmatprep.mubr.bf16.mxu0 0
  %2329 = vmatmul.mubr.bf16.gmra.mrb[0].mxu0 %v1727
  %v2330 = vpop.f32.mrb[0].mxu0
  %v2331 = vadd.f32 0.0, %v2330
  %v2332 = vpop.f32.mrb[0].mxu0
  %v2333 = vadd.f32 0.0, %v2332
  %v2334 = vpop.f32.mrb[0].mxu0
  %v2335 = vadd.f32 0.0, %v2334
  %v2336 = vpop.f32.mrb[0].mxu0
  %v2337 = vadd.f32 0.0, %v2336
  %2338 = vmatprep.mubr.bf16.mxu0 0
  %2339 = vmatmul.mubr.bf16.gmra.mrb[0].mxu0 %v1728
  %v2340 = vpop.f32.mrb[0].mxu0
  %v2341 = vadd.f32 0.0, %v2340
  %v2342 = vpop.f32.mrb[0].mxu0
  %v2343 = vadd.f32 0.0, %v2342
  %v2344 = vpop.f32.mrb[0].mxu0
  %v2345 = vadd.f32 0.0, %v2344
  %v2346 = vpop.f32.mrb[0].mxu0
  %v2347 = vadd.f32 0.0, %v2346
  %2348 = vmatprep.mubr.bf16.mxu0 0
  %2349 = vmatmul.mubr.bf16.gmra.mrb[0].mxu0 %v1729
  %v2350 = vpop.f32.mrb[0].mxu0
  %v2351 = vadd.f32 0.0, %v2350
  %v2352 = vpop.f32.mrb[0].mxu0
  %v2353 = vadd.f32 0.0, %v2352
  %v2354 = vpop.f32.mrb[0].mxu0
  %v2355 = vadd.f32 0.0, %v2354
  %v2356 = vpop.f32.mrb[0].mxu0
  %v2357 = vadd.f32 0.0, %v2356
  %2358 = vmatprep.mubr.bf16.mxu0 0
  %2359 = vmatmul.mubr.bf16.gmra.mrb[0].mxu0 %v1730
  %v2360 = vpop.f32.mrb[0].mxu0
  %v2361 = vadd.f32 0.0, %v2360
  %v2362 = vpop.f32.mrb[0].mxu0
  %v2363 = vadd.f32 0.0, %v2362
  %v2364 = vpop.f32.mrb[0].mxu0
  %v2365 = vadd.f32 0.0, %v2364
  %v2366 = vpop.f32.mrb[0].mxu0
  %v2367 = vadd.f32 0.0, %v2366
  %2368 = vmatprep.mubr.bf16.mxu0 0
  %2369 = vmatmul.mubr.bf16.gmra.mrb[0].mxu0 %v1731
  %v2370 = vpop.f32.mrb[0].mxu0
  %v2371 = vadd.f32 0.0, %v2370
  %v2372 = vpop.f32.mrb[0].mxu0
  %v2373 = vadd.f32 0.0, %v2372
  %v2374 = vpop.f32.mrb[0].mxu0
  %v2375 = vadd.f32 0.0, %v2374
  %v2376 = vpop.f32.mrb[0].mxu0
  %v2377 = vadd.f32 0.0, %v2376
  %2378 = vmatprep.mubr.bf16.mxu0 0
  %2379 = vmatmul.mubr.bf16.gmra.mrb[0].mxu0 %v1732
  %v2380 = vpop.f32.mrb[0].mxu0
  %v2381 = vadd.f32 0.0, %v2380
  %v2382 = vpop.f32.mrb[0].mxu0
  %v2383 = vadd.f32 0.0, %v2382
  %v2384 = vpop.f32.mrb[0].mxu0
  %v2385 = vadd.f32 0.0, %v2384
  %v2386 = vpop.f32.mrb[0].mxu0
  %v2387 = vadd.f32 0.0, %v2386
  %2388 = vmatprep.mubr.bf16.mxu0 0
  %2389 = vmatmul.mubr.bf16.gmra.mrb[0].mxu0 %v1733
  %v2390 = vpop.f32.mrb[0].mxu0
  %v2391 = vadd.f32 0.0, %v2390
  %v2392 = vpop.f32.mrb[0].mxu0
  %v2393 = vadd.f32 0.0, %v2392
  %v2394 = vpop.f32.mrb[0].mxu0
  %v2395 = vadd.f32 0.0, %v2394
  %v2396 = vpop.f32.mrb[0].mxu0
  %v2397 = vadd.f32 0.0, %v2396
  %2398 = vmatprep.mubr.bf16.mxu0 0
  %2399 = vmatmul.mubr.bf16.gmra.mrb[0].mxu0 %v1734
  %v2400 = vpop.f32.mrb[0].mxu0
  %v2401 = vadd.f32 0.0, %v2400
  %v2402 = vpop.f32.mrb[0].mxu0
  %v2403 = vadd.f32 0.0, %v2402
  %v2404 = vpop.f32.mrb[0].mxu0
  %v2405 = vadd.f32 0.0, %v2404
  %v2406 = vpop.f32.mrb[0].mxu0
  %v2407 = vadd.f32 0.0, %v2406
  %2408 = vmatprep.mubr.bf16.mxu0 0
  %2409 = vmatmul.mubr.bf16.gmra.mrb[0].mxu0 %v1735
  %v2410 = vpop.f32.mrb[0].mxu0
  %v2411 = vadd.f32 0.0, %v2410
  %v2412 = vpop.f32.mrb[0].mxu0
  %v2413 = vadd.f32 0.0, %v2412
  %v2414 = vpop.f32.mrb[0].mxu0
  %v2415 = vadd.f32 0.0, %v2414
  %v2416 = vpop.f32.mrb[0].mxu0
  %v2417 = vadd.f32 0.0, %v2416
  %2418 = vmatprep.mubr.bf16.mxu0 0
  %2419 = vmatmul.mubr.bf16.gmra.mrb[0].mxu0 %v1736
  %v2420 = vpop.f32.mrb[0].mxu0
  %v2421 = vadd.f32 0.0, %v2420
  %v2422 = vpop.f32.mrb[0].mxu0
  %v2423 = vadd.f32 0.0, %v2422
  %v2424 = vpop.f32.mrb[0].mxu0
  %v2425 = vadd.f32 0.0, %v2424
  %v2426 = vpop.f32.mrb[0].mxu0
  %v2427 = vadd.f32 0.0, %v2426
  %2428 = vmatprep.mubr.bf16.mxu0 0
  %2429 = vmatmul.mubr.bf16.gmra.mrb[0].mxu0 %v1737
  %v2430 = vpop.f32.mrb[0].mxu0
  %v2431 = vadd.f32 0.0, %v2430
  %v2432 = vpop.f32.mrb[0].mxu0
  %v2433 = vadd.f32 0.0, %v2432
  %v2434 = vpop.f32.mrb[0].mxu0
  %v2435 = vadd.f32 0.0, %v2434
  %v2436 = vpop.f32.mrb[0].mxu0
  %v2437 = vadd.f32 0.0, %v2436
  %2438 = vmatprep.mubr.bf16.mxu0 0
  %2439 = vmatmul.mubr.bf16.gmra.mrb[0].mxu0 %v1738
  %v2440 = vpop.f32.mrb[0].mxu0
  %v2441 = vadd.f32 0.0, %v2440
  %v2442 = vpop.f32.mrb[0].mxu0
  %v2443 = vadd.f32 0.0, %v2442
  %v2444 = vpop.f32.mrb[0].mxu0
  %v2445 = vadd.f32 0.0, %v2444
  %v2446 = vpop.f32.mrb[0].mxu0
  %v2447 = vadd.f32 0.0, %v2446
  %2448 = vmatprep.mubr.bf16.mxu0 0
  %2449 = vmatmul.mubr.bf16.gmra.mrb[0].mxu0 %v1739
  %v2450 = vpop.f32.mrb[0].mxu0
  %v2451 = vadd.f32 0.0, %v2450
  %v2452 = vpop.f32.mrb[0].mxu0
  %v2453 = vadd.f32 0.0, %v2452
  %v2454 = vpop.f32.mrb[0].mxu0
  %v2455 = vadd.f32 0.0, %v2454
  %v2456 = vpop.f32.mrb[0].mxu0
  %v2457 = vadd.f32 0.0, %v2456
  %2458 = vmatprep.mubr.bf16.mxu0 0
  %2459 = vmatmul.mubr.bf16.gmra.mrb[0].mxu0 %v1740
  %v2460 = vpop.f32.mrb[0].mxu0
  %v2461 = vadd.f32 0.0, %v2460
  %v2462 = vpop.f32.mrb[0].mxu0
  %v2463 = vadd.f32 0.0, %v2462
  %v2464 = vpop.f32.mrb[0].mxu0
  %v2465 = vadd.f32 0.0, %v2464
  %v2466 = vpop.f32.mrb[0].mxu0
  %v2467 = vadd.f32 0.0, %v2466
  %2468 = vmatprep.mubr.bf16.mxu0 0
  %2469 = vmatmul.mubr.bf16.gmra.mrb[0].mxu0 %v1741
  %v2470 = vpop.f32.mrb[0].mxu0
  %v2471 = vadd.f32 0.0, %v2470
  %v2472 = vpop.f32.mrb[0].mxu0
  %v2473 = vadd.f32 0.0, %v2472
  %v2474 = vpop.f32.mrb[0].mxu0
  %v2475 = vadd.f32 0.0, %v2474
  %v2476 = vpop.f32.mrb[0].mxu0
  %v2477 = vadd.f32 0.0, %v2476
  %2478 = vdwg.mxu0
  %v2479 = vpack.c.bf16 %v659, %v655
  %v2480 = vpack.c.bf16 %v661, %v657
  %v2481 = vpack.c.bf16 %v669, %v665
  %v2482 = vpack.c.bf16 %v671, %v667
  %v2483 = vpack.c.bf16 %v679, %v675
  %v2484 = vpack.c.bf16 %v681, %v677
  %v2485 = vpack.c.bf16 %v689, %v685
  %v2486 = vpack.c.bf16 %v691, %v687
  %v2487 = vpack.c.bf16 %v699, %v695
  %v2488 = vpack.c.bf16 %v701, %v697
  %v2489 = vpack.c.bf16 %v709, %v705
  %v2490 = vpack.c.bf16 %v711, %v707
  %v2491 = vpack.c.bf16 %v719, %v715
  %v2492 = vpack.c.bf16 %v721, %v717
  %v2493 = vpack.c.bf16 %v729, %v725
  %v2494 = vpack.c.bf16 %v731, %v727
  %v2495 = vpack.c.bf16 %v739, %v735
  %v2496 = vpack.c.bf16 %v741, %v737
  %v2497 = vpack.c.bf16 %v749, %v745
  %v2498 = vpack.c.bf16 %v751, %v747
  %v2499 = vpack.c.bf16 %v759, %v755
  %v2500 = vpack.c.bf16 %v761, %v757
  %v2501 = vpack.c.bf16 %v769, %v765
  %v2502 = vpack.c.bf16 %v771, %v767
  %v2503 = vpack.c.bf16 %v779, %v775
  %v2504 = vpack.c.bf16 %v781, %v777
  %v2505 = vpack.c.bf16 %v789, %v785
  %v2506 = vpack.c.bf16 %v791, %v787
  %v2507 = vpack.c.bf16 %v799, %v795
  %v2508 = vpack.c.bf16 %v801, %v797
  %v2509 = vpack.c.bf16 %v809, %v805
  %v2510 = vpack.c.bf16 %v811, %v807
  %v2511 = vpack.c.bf16 %v819, %v815
  %v2512 = vpack.c.bf16 %v821, %v817
  %v2513 = vpack.c.bf16 %v829, %v825
  %v2514 = vpack.c.bf16 %v831, %v827
  %v2515 = vpack.c.bf16 %v839, %v835
  %v2516 = vpack.c.bf16 %v841, %v837
  %v2517 = vpack.c.bf16 %v849, %v845
  %v2518 = vpack.c.bf16 %v851, %v847
  %v2519 = vpack.c.bf16 %v859, %v855
  %v2520 = vpack.c.bf16 %v861, %v857
  %v2521 = vpack.c.bf16 %v869, %v865
  %v2522 = vpack.c.bf16 %v871, %v867
  %v2523 = vpack.c.bf16 %v879, %v875
  %v2524 = vpack.c.bf16 %v881, %v877
  %v2525 = vpack.c.bf16 %v889, %v885
  %v2526 = vpack.c.bf16 %v891, %v887
  %v2527 = vpack.c.bf16 %v899, %v895
  %v2528 = vpack.c.bf16 %v901, %v897
  %v2529 = vpack.c.bf16 %v909, %v905
  %v2530 = vpack.c.bf16 %v911, %v907
  %v2531 = vpack.c.bf16 %v919, %v915
  %v2532 = vpack.c.bf16 %v921, %v917
  %v2533 = vpack.c.bf16 %v929, %v925
  %v2534 = vpack.c.bf16 %v931, %v927
  %v2535 = vpack.c.bf16 %v939, %v935
  %v2536 = vpack.c.bf16 %v941, %v937
  %v2537 = vpack.c.bf16 %v949, %v945
  %v2538 = vpack.c.bf16 %v951, %v947
  %v2539 = vpack.c.bf16 %v959, %v955
  %v2540 = vpack.c.bf16 %v961, %v957
  %v2541 = vpack.c.bf16 %v969, %v965
  %v2542 = vpack.c.bf16 %v971, %v967
  %v2543 = vpack.c.bf16 %v979, %v975
  %v2544 = vpack.c.bf16 %v981, %v977
  %v2545 = vpack.c.bf16 %v989, %v985
  %v2546 = vpack.c.bf16 %v991, %v987
  %v2547 = vpack.c.bf16 %v999, %v995
  %v2548 = vpack.c.bf16 %v1001, %v997
  %v2549 = vpack.c.bf16 %v1009, %v1005
  %v2550 = vpack.c.bf16 %v1011, %v1007
  %v2551 = vpack.c.bf16 %v1019, %v1015
  %v2552 = vpack.c.bf16 %v1021, %v1017
  %v2553 = vpack.c.bf16 %v1029, %v1025
  %v2554 = vpack.c.bf16 %v1031, %v1027
  %v2555 = vpack.c.bf16 %v1039, %v1035
  %v2556 = vpack.c.bf16 %v1041, %v1037
  %v2557 = vpack.c.bf16 %v1049, %v1045
  %v2558 = vpack.c.bf16 %v1051, %v1047
  %v2559 = vpack.c.bf16 %v1059, %v1055
  %v2560 = vpack.c.bf16 %v1061, %v1057
  %v2561 = vpack.c.bf16 %v1069, %v1065
  %v2562 = vpack.c.bf16 %v1071, %v1067
  %v2563 = vpack.c.bf16 %v1079, %v1075
  %v2564 = vpack.c.bf16 %v1081, %v1077
  %v2565 = vpack.c.bf16 %v1089, %v1085
  %v2566 = vpack.c.bf16 %v1091, %v1087
  %v2567 = vpack.c.bf16 %v1099, %v1095
  %v2568 = vpack.c.bf16 %v1101, %v1097
  %v2569 = vpack.c.bf16 %v1109, %v1105
  %v2570 = vpack.c.bf16 %v1111, %v1107
  %v2571 = vpack.c.bf16 %v1119, %v1115
  %v2572 = vpack.c.bf16 %v1121, %v1117
  %v2573 = vpack.c.bf16 %v1129, %v1125
  %v2574 = vpack.c.bf16 %v1131, %v1127
  %v2575 = vpack.c.bf16 %v1139, %v1135
  %v2576 = vpack.c.bf16 %v1141, %v1137
  %v2577 = vpack.c.bf16 %v1149, %v1145
  %v2578 = vpack.c.bf16 %v1151, %v1147
  %v2579 = vpack.c.bf16 %v1159, %v1155
  %v2580 = vpack.c.bf16 %v1161, %v1157
  %v2581 = vpack.c.bf16 %v1169, %v1165
  %v2582 = vpack.c.bf16 %v1171, %v1167
  %v2583 = vpack.c.bf16 %v1179, %v1175
  %v2584 = vpack.c.bf16 %v1181, %v1177
  %v2585 = vpack.c.bf16 %v1189, %v1185
  %v2586 = vpack.c.bf16 %v1191, %v1187
  %v2587 = vpack.c.bf16 %v1199, %v1195
  %v2588 = vpack.c.bf16 %v1201, %v1197
  %v2589 = vpack.c.bf16 %v1209, %v1205
  %v2590 = vpack.c.bf16 %v1211, %v1207
  %v2591 = vpack.c.bf16 %v1219, %v1215
  %v2592 = vpack.c.bf16 %v1221, %v1217
  %v2593 = vpack.c.bf16 %v1229, %v1225
  %v2594 = vpack.c.bf16 %v1231, %v1227
  %v2595 = vpack.c.bf16 %v1239, %v1235
  %v2596 = vpack.c.bf16 %v1241, %v1237
  %v2597 = vpack.c.bf16 %v1249, %v1245
  %v2598 = vpack.c.bf16 %v1251, %v1247
  %v2599 = vpack.c.bf16 %v1259, %v1255
  %v2600 = vpack.c.bf16 %v1261, %v1257
  %v2601 = vpack.c.bf16 %v1269, %v1265
  %v2602 = vpack.c.bf16 %v1271, %v1267
  %v2603 = vpack.c.bf16 %v1279, %v1275
  %v2604 = vpack.c.bf16 %v1281, %v1277
  %v2605 = vpack.c.bf16 %v1289, %v1285
  %v2606 = vpack.c.bf16 %v1291, %v1287
  %v2735 = vunpack.c.l.b16 %v2479
  %v2736 = vunpack.c.l.b16 %v2480
  %v2737 = vunpack.c.h.b16 %v2479
  %v2738 = vunpack.c.h.b16 %v2480
  %v2739 = vunpack.c.l.b16 %v2481
  %v2740 = vunpack.c.l.b16 %v2482
  %v2741 = vunpack.c.h.b16 %v2481
  %v2742 = vunpack.c.h.b16 %v2482
  %v2743 = vunpack.c.l.b16 %v2483
  %v2744 = vunpack.c.l.b16 %v2484
  %v2745 = vunpack.c.h.b16 %v2483
  %v2746 = vunpack.c.h.b16 %v2484
  %v2747 = vunpack.c.l.b16 %v2485
  %v2748 = vunpack.c.l.b16 %v2486
  %v2749 = vunpack.c.h.b16 %v2485
  %v2750 = vunpack.c.h.b16 %v2486
  %v2751 = vunpack.c.l.b16 %v2487
  %v2752 = vunpack.c.l.b16 %v2488
  %v2753 = vunpack.c.h.b16 %v2487
  %v2754 = vunpack.c.h.b16 %v2488
  %v2755 = vunpack.c.l.b16 %v2489
  %v2756 = vunpack.c.l.b16 %v2490
  %v2757 = vunpack.c.h.b16 %v2489
  %v2758 = vunpack.c.h.b16 %v2490
  %v2759 = vunpack.c.l.b16 %v2491
  %v2760 = vunpack.c.l.b16 %v2492
  %v2761 = vunpack.c.h.b16 %v2491
  %v2762 = vunpack.c.h.b16 %v2492
  %v2763 = vunpack.c.l.b16 %v2493
  %v2764 = vunpack.c.l.b16 %v2494
  %v2765 = vunpack.c.h.b16 %v2493
  %v2766 = vunpack.c.h.b16 %v2494
  %v2767 = vunpack.c.l.b16 %v2495
  %v2768 = vunpack.c.l.b16 %v2496
  %v2769 = vunpack.c.h.b16 %v2495
  %v2770 = vunpack.c.h.b16 %v2496
  %v2771 = vunpack.c.l.b16 %v2497
  %v2772 = vunpack.c.l.b16 %v2498
  %v2773 = vunpack.c.h.b16 %v2497
  %v2774 = vunpack.c.h.b16 %v2498
  %v2775 = vunpack.c.l.b16 %v2499
  %v2776 = vunpack.c.l.b16 %v2500
  %v2777 = vunpack.c.h.b16 %v2499
  %v2778 = vunpack.c.h.b16 %v2500
  %v2779 = vunpack.c.l.b16 %v2501
  %v2780 = vunpack.c.l.b16 %v2502
  %v2781 = vunpack.c.h.b16 %v2501
  %v2782 = vunpack.c.h.b16 %v2502
  %v2783 = vunpack.c.l.b16 %v2503
  %v2784 = vunpack.c.l.b16 %v2504
  %v2785 = vunpack.c.h.b16 %v2503
  %v2786 = vunpack.c.h.b16 %v2504
  %v2787 = vunpack.c.l.b16 %v2505
  %v2788 = vunpack.c.l.b16 %v2506
  %v2789 = vunpack.c.h.b16 %v2505
  %v2790 = vunpack.c.h.b16 %v2506
  %v2791 = vunpack.c.l.b16 %v2507
  %v2792 = vunpack.c.l.b16 %v2508
  %v2793 = vunpack.c.h.b16 %v2507
  %v2794 = vunpack.c.h.b16 %v2508
  %v2795 = vunpack.c.l.b16 %v2509
  %v2796 = vunpack.c.l.b16 %v2510
  %v2797 = vunpack.c.h.b16 %v2509
  %v2798 = vunpack.c.h.b16 %v2510
  %v2799 = vunpack.c.l.b16 %v2511
  %v2800 = vunpack.c.l.b16 %v2512
  %v2801 = vunpack.c.h.b16 %v2511
  %v2802 = vunpack.c.h.b16 %v2512
  %v2803 = vunpack.c.l.b16 %v2513
  %v2804 = vunpack.c.l.b16 %v2514
  %v2805 = vunpack.c.h.b16 %v2513
  %v2806 = vunpack.c.h.b16 %v2514
  %v2807 = vunpack.c.l.b16 %v2515
  %v2808 = vunpack.c.l.b16 %v2516
  %v2809 = vunpack.c.h.b16 %v2515
  %v2810 = vunpack.c.h.b16 %v2516
  %v2811 = vunpack.c.l.b16 %v2517
  %v2812 = vunpack.c.l.b16 %v2518
  %v2813 = vunpack.c.h.b16 %v2517
  %v2814 = vunpack.c.h.b16 %v2518
  %v2815 = vunpack.c.l.b16 %v2519
  %v2816 = vunpack.c.l.b16 %v2520
  %v2817 = vunpack.c.h.b16 %v2519
  %v2818 = vunpack.c.h.b16 %v2520
  %v2819 = vunpack.c.l.b16 %v2521
  %v2820 = vunpack.c.l.b16 %v2522
  %v2821 = vunpack.c.h.b16 %v2521
  %v2822 = vunpack.c.h.b16 %v2522
  %v2823 = vunpack.c.l.b16 %v2523
  %v2824 = vunpack.c.l.b16 %v2524
  %v2825 = vunpack.c.h.b16 %v2523
  %v2826 = vunpack.c.h.b16 %v2524
  %v2827 = vunpack.c.l.b16 %v2525
  %v2828 = vunpack.c.l.b16 %v2526
  %v2829 = vunpack.c.h.b16 %v2525
  %v2830 = vunpack.c.h.b16 %v2526
  %v2831 = vunpack.c.l.b16 %v2527
  %v2832 = vunpack.c.l.b16 %v2528
  %v2833 = vunpack.c.h.b16 %v2527
  %v2834 = vunpack.c.h.b16 %v2528
  %v2835 = vunpack.c.l.b16 %v2529
  %v2836 = vunpack.c.l.b16 %v2530
  %v2837 = vunpack.c.h.b16 %v2529
  %v2838 = vunpack.c.h.b16 %v2530
  %v2839 = vunpack.c.l.b16 %v2531
  %v2840 = vunpack.c.l.b16 %v2532
  %v2841 = vunpack.c.h.b16 %v2531
  %v2842 = vunpack.c.h.b16 %v2532
  %v2843 = vunpack.c.l.b16 %v2533
  %v2844 = vunpack.c.l.b16 %v2534
  %v2845 = vunpack.c.h.b16 %v2533
  %v2846 = vunpack.c.h.b16 %v2534
  %v2847 = vunpack.c.l.b16 %v2535
  %v2848 = vunpack.c.l.b16 %v2536
  %v2849 = vunpack.c.h.b16 %v2535
  %v2850 = vunpack.c.h.b16 %v2536
  %v2851 = vunpack.c.l.b16 %v2537
  %v2852 = vunpack.c.l.b16 %v2538
  %v2853 = vunpack.c.h.b16 %v2537
  %v2854 = vunpack.c.h.b16 %v2538
  %v2855 = vunpack.c.l.b16 %v2539
  %v2856 = vunpack.c.l.b16 %v2540
  %v2857 = vunpack.c.h.b16 %v2539
  %v2858 = vunpack.c.h.b16 %v2540
  %v2859 = vunpack.c.l.b16 %v2541
  %v2860 = vunpack.c.l.b16 %v2542
  %v2861 = vunpack.c.h.b16 %v2541
  %v2862 = vunpack.c.h.b16 %v2542
  %v2863 = vunpack.c.l.b16 %v2543
  %v2864 = vunpack.c.l.b16 %v2544
  %v2865 = vunpack.c.h.b16 %v2543
  %v2866 = vunpack.c.h.b16 %v2544
  %v2867 = vunpack.c.l.b16 %v2545
  %v2868 = vunpack.c.l.b16 %v2546
  %v2869 = vunpack.c.h.b16 %v2545
  %v2870 = vunpack.c.h.b16 %v2546
  %v2871 = vunpack.c.l.b16 %v2547
  %v2872 = vunpack.c.l.b16 %v2548
  %v2873 = vunpack.c.h.b16 %v2547
  %v2874 = vunpack.c.h.b16 %v2548
  %v2875 = vunpack.c.l.b16 %v2549
  %v2876 = vunpack.c.l.b16 %v2550
  %v2877 = vunpack.c.h.b16 %v2549
  %v2878 = vunpack.c.h.b16 %v2550
  %v2879 = vunpack.c.l.b16 %v2551
  %v2880 = vunpack.c.l.b16 %v2552
  %v2881 = vunpack.c.h.b16 %v2551
  %v2882 = vunpack.c.h.b16 %v2552
  %v2883 = vunpack.c.l.b16 %v2553
  %v2884 = vunpack.c.l.b16 %v2554
  %v2885 = vunpack.c.h.b16 %v2553
  %v2886 = vunpack.c.h.b16 %v2554
  %v2887 = vunpack.c.l.b16 %v2555
  %v2888 = vunpack.c.l.b16 %v2556
  %v2889 = vunpack.c.h.b16 %v2555
  %v2890 = vunpack.c.h.b16 %v2556
  %v2891 = vunpack.c.l.b16 %v2557
  %v2892 = vunpack.c.l.b16 %v2558
  %v2893 = vunpack.c.h.b16 %v2557
  %v2894 = vunpack.c.h.b16 %v2558
  %v2895 = vunpack.c.l.b16 %v2559
  %v2896 = vunpack.c.l.b16 %v2560
  %v2897 = vunpack.c.h.b16 %v2559
  %v2898 = vunpack.c.h.b16 %v2560
  %v2899 = vunpack.c.l.b16 %v2561
  %v2900 = vunpack.c.l.b16 %v2562
  %v2901 = vunpack.c.h.b16 %v2561
  %v2902 = vunpack.c.h.b16 %v2562
  %v2903 = vunpack.c.l.b16 %v2563
  %v2904 = vunpack.c.l.b16 %v2564
  %v2905 = vunpack.c.h.b16 %v2563
  %v2906 = vunpack.c.h.b16 %v2564
  %v2907 = vunpack.c.l.b16 %v2565
  %v2908 = vunpack.c.l.b16 %v2566
  %v2909 = vunpack.c.h.b16 %v2565
  %v2910 = vunpack.c.h.b16 %v2566
  %v2911 = vunpack.c.l.b16 %v2567
  %v2912 = vunpack.c.l.b16 %v2568
  %v2913 = vunpack.c.h.b16 %v2567
  %v2914 = vunpack.c.h.b16 %v2568
  %v2915 = vunpack.c.l.b16 %v2569
  %v2916 = vunpack.c.l.b16 %v2570
  %v2917 = vunpack.c.h.b16 %v2569
  %v2918 = vunpack.c.h.b16 %v2570
  %v2919 = vunpack.c.l.b16 %v2571
  %v2920 = vunpack.c.l.b16 %v2572
  %v2921 = vunpack.c.h.b16 %v2571
  %v2922 = vunpack.c.h.b16 %v2572
  %v2923 = vunpack.c.l.b16 %v2573
  %v2924 = vunpack.c.l.b16 %v2574
  %v2925 = vunpack.c.h.b16 %v2573
  %v2926 = vunpack.c.h.b16 %v2574
  %v2927 = vunpack.c.l.b16 %v2575
  %v2928 = vunpack.c.l.b16 %v2576
  %v2929 = vunpack.c.h.b16 %v2575
  %v2930 = vunpack.c.h.b16 %v2576
  %v2931 = vunpack.c.l.b16 %v2577
  %v2932 = vunpack.c.l.b16 %v2578
  %v2933 = vunpack.c.h.b16 %v2577
  %v2934 = vunpack.c.h.b16 %v2578
  %v2935 = vunpack.c.l.b16 %v2579
  %v2936 = vunpack.c.l.b16 %v2580
  %v2937 = vunpack.c.h.b16 %v2579
  %v2938 = vunpack.c.h.b16 %v2580
  %v2939 = vunpack.c.l.b16 %v2581
  %v2940 = vunpack.c.l.b16 %v2582
  %v2941 = vunpack.c.h.b16 %v2581
  %v2942 = vunpack.c.h.b16 %v2582
  %v2943 = vunpack.c.l.b16 %v2583
  %v2944 = vunpack.c.l.b16 %v2584
  %v2945 = vunpack.c.h.b16 %v2583
  %v2946 = vunpack.c.h.b16 %v2584
  %v2947 = vunpack.c.l.b16 %v2585
  %v2948 = vunpack.c.l.b16 %v2586
  %v2949 = vunpack.c.h.b16 %v2585
  %v2950 = vunpack.c.h.b16 %v2586
  %v2951 = vunpack.c.l.b16 %v2587
  %v2952 = vunpack.c.l.b16 %v2588
  %v2953 = vunpack.c.h.b16 %v2587
  %v2954 = vunpack.c.h.b16 %v2588
  %v2955 = vunpack.c.l.b16 %v2589
  %v2956 = vunpack.c.l.b16 %v2590
  %v2957 = vunpack.c.h.b16 %v2589
  %v2958 = vunpack.c.h.b16 %v2590
  %v2959 = vunpack.c.l.b16 %v2591
  %v2960 = vunpack.c.l.b16 %v2592
  %v2961 = vunpack.c.h.b16 %v2591
  %v2962 = vunpack.c.h.b16 %v2592
  %v2963 = vunpack.c.l.b16 %v2593
  %v2964 = vunpack.c.l.b16 %v2594
  %v2965 = vunpack.c.h.b16 %v2593
  %v2966 = vunpack.c.h.b16 %v2594
  %v2967 = vunpack.c.l.b16 %v2595
  %v2968 = vunpack.c.l.b16 %v2596
  %v2969 = vunpack.c.h.b16 %v2595
  %v2970 = vunpack.c.h.b16 %v2596
  %v2971 = vunpack.c.l.b16 %v2597
  %v2972 = vunpack.c.l.b16 %v2598
  %v2973 = vunpack.c.h.b16 %v2597
  %v2974 = vunpack.c.h.b16 %v2598
  %v2975 = vunpack.c.l.b16 %v2599
  %v2976 = vunpack.c.l.b16 %v2600
  %v2977 = vunpack.c.h.b16 %v2599
  %v2978 = vunpack.c.h.b16 %v2600
  %v2979 = vunpack.c.l.b16 %v2601
  %v2980 = vunpack.c.l.b16 %v2602
  %v2981 = vunpack.c.h.b16 %v2601
  %v2982 = vunpack.c.h.b16 %v2602
  %v2983 = vunpack.c.l.b16 %v2603
  %v2984 = vunpack.c.l.b16 %v2604
  %v2985 = vunpack.c.h.b16 %v2603
  %v2986 = vunpack.c.h.b16 %v2604
  %v2987 = vunpack.c.l.b16 %v2605
  %v2988 = vunpack.c.l.b16 %v2606
  %v2989 = vunpack.c.h.b16 %v2605
  %v2990 = vunpack.c.h.b16 %v2606
  %v2991 = vpack.c.b16 %v2736, %v2735
  %v2992 = vpack.c.b16 %v2738, %v2737
  %v2993 = vpack.c.b16 %v2740, %v2739
  %v2994 = vpack.c.b16 %v2742, %v2741
  %v2995 = vpack.c.b16 %v2744, %v2743
  %v2996 = vpack.c.b16 %v2746, %v2745
  %v2997 = vpack.c.b16 %v2748, %v2747
  %v2998 = vpack.c.b16 %v2750, %v2749
  %v2999 = vpack.c.b16 %v2752, %v2751
  %v3000 = vpack.c.b16 %v2754, %v2753
  %v3001 = vpack.c.b16 %v2756, %v2755
  %v3002 = vpack.c.b16 %v2758, %v2757
  %v3003 = vpack.c.b16 %v2760, %v2759
  %v3004 = vpack.c.b16 %v2762, %v2761
  %v3005 = vpack.c.b16 %v2764, %v2763
  %v3006 = vpack.c.b16 %v2766, %v2765
  %v3007 = vpack.c.b16 %v2768, %v2767
  %v3008 = vpack.c.b16 %v2770, %v2769
  %v3009 = vpack.c.b16 %v2772, %v2771
  %v3010 = vpack.c.b16 %v2774, %v2773
  %v3011 = vpack.c.b16 %v2776, %v2775
  %v3012 = vpack.c.b16 %v2778, %v2777
  %v3013 = vpack.c.b16 %v2780, %v2779
  %v3014 = vpack.c.b16 %v2782, %v2781
  %v3015 = vpack.c.b16 %v2784, %v2783
  %v3016 = vpack.c.b16 %v2786, %v2785
  %v3017 = vpack.c.b16 %v2788, %v2787
  %v3018 = vpack.c.b16 %v2790, %v2789
  %v3019 = vpack.c.b16 %v2792, %v2791
  %v3020 = vpack.c.b16 %v2794, %v2793
  %v3021 = vpack.c.b16 %v2796, %v2795
  %v3022 = vpack.c.b16 %v2798, %v2797
  %v3023 = vpack.c.b16 %v2800, %v2799
  %v3024 = vpack.c.b16 %v2802, %v2801
  %v3025 = vpack.c.b16 %v2804, %v2803
  %v3026 = vpack.c.b16 %v2806, %v2805
  %v3027 = vpack.c.b16 %v2808, %v2807
  %v3028 = vpack.c.b16 %v2810, %v2809
  %v3029 = vpack.c.b16 %v2812, %v2811
  %v3030 = vpack.c.b16 %v2814, %v2813
  %v3031 = vpack.c.b16 %v2816, %v2815
  %v3032 = vpack.c.b16 %v2818, %v2817
  %v3033 = vpack.c.b16 %v2820, %v2819
  %v3034 = vpack.c.b16 %v2822, %v2821
  %v3035 = vpack.c.b16 %v2824, %v2823
  %v3036 = vpack.c.b16 %v2826, %v2825
  %v3037 = vpack.c.b16 %v2828, %v2827
  %v3038 = vpack.c.b16 %v2830, %v2829
  %v3039 = vpack.c.b16 %v2832, %v2831
  %v3040 = vpack.c.b16 %v2834, %v2833
  %v3041 = vpack.c.b16 %v2836, %v2835
  %v3042 = vpack.c.b16 %v2838, %v2837
  %v3043 = vpack.c.b16 %v2840, %v2839
  %v3044 = vpack.c.b16 %v2842, %v2841
  %v3045 = vpack.c.b16 %v2844, %v2843
  %v3046 = vpack.c.b16 %v2846, %v2845
  %v3047 = vpack.c.b16 %v2848, %v2847
  %v3048 = vpack.c.b16 %v2850, %v2849
  %v3049 = vpack.c.b16 %v2852, %v2851
  %v3050 = vpack.c.b16 %v2854, %v2853
  %v3051 = vpack.c.b16 %v2856, %v2855
  %v3052 = vpack.c.b16 %v2858, %v2857
  %v3053 = vpack.c.b16 %v2860, %v2859
  %v3054 = vpack.c.b16 %v2862, %v2861
  %v3055 = vpack.c.b16 %v2864, %v2863
  %v3056 = vpack.c.b16 %v2866, %v2865
  %v3057 = vpack.c.b16 %v2868, %v2867
  %v3058 = vpack.c.b16 %v2870, %v2869
  %v3059 = vpack.c.b16 %v2872, %v2871
  %v3060 = vpack.c.b16 %v2874, %v2873
  %v3061 = vpack.c.b16 %v2876, %v2875
  %v3062 = vpack.c.b16 %v2878, %v2877
  %v3063 = vpack.c.b16 %v2880, %v2879
  %v3064 = vpack.c.b16 %v2882, %v2881
  %v3065 = vpack.c.b16 %v2884, %v2883
  %v3066 = vpack.c.b16 %v2886, %v2885
  %v3067 = vpack.c.b16 %v2888, %v2887
  %v3068 = vpack.c.b16 %v2890, %v2889
  %v3069 = vpack.c.b16 %v2892, %v2891
  %v3070 = vpack.c.b16 %v2894, %v2893
  %v3071 = vpack.c.b16 %v2896, %v2895
  %v3072 = vpack.c.b16 %v2898, %v2897
  %v3073 = vpack.c.b16 %v2900, %v2899
  %v3074 = vpack.c.b16 %v2902, %v2901
  %v3075 = vpack.c.b16 %v2904, %v2903
  %v3076 = vpack.c.b16 %v2906, %v2905
  %v3077 = vpack.c.b16 %v2908, %v2907
  %v3078 = vpack.c.b16 %v2910, %v2909
  %v3079 = vpack.c.b16 %v2912, %v2911
  %v3080 = vpack.c.b16 %v2914, %v2913
  %v3081 = vpack.c.b16 %v2916, %v2915
  %v3082 = vpack.c.b16 %v2918, %v2917
  %v3083 = vpack.c.b16 %v2920, %v2919
  %v3084 = vpack.c.b16 %v2922, %v2921
  %v3085 = vpack.c.b16 %v2924, %v2923
  %v3086 = vpack.c.b16 %v2926, %v2925
  %v3087 = vpack.c.b16 %v2928, %v2927
  %v3088 = vpack.c.b16 %v2930, %v2929
  %v3089 = vpack.c.b16 %v2932, %v2931
  %v3090 = vpack.c.b16 %v2934, %v2933
  %v3091 = vpack.c.b16 %v2936, %v2935
  %v3092 = vpack.c.b16 %v2938, %v2937
  %v3093 = vpack.c.b16 %v2940, %v2939
  %v3094 = vpack.c.b16 %v2942, %v2941
  %v3095 = vpack.c.b16 %v2944, %v2943
  %v3096 = vpack.c.b16 %v2946, %v2945
  %v3097 = vpack.c.b16 %v2948, %v2947
  %v3098 = vpack.c.b16 %v2950, %v2949
  %v3099 = vpack.c.b16 %v2952, %v2951
  %v3100 = vpack.c.b16 %v2954, %v2953
  %v3101 = vpack.c.b16 %v2956, %v2955
  %v3102 = vpack.c.b16 %v2958, %v2957
  %v3103 = vpack.c.b16 %v2960, %v2959
  %v3104 = vpack.c.b16 %v2962, %v2961
  %v3105 = vpack.c.b16 %v2964, %v2963
  %v3106 = vpack.c.b16 %v2966, %v2965
  %v3107 = vpack.c.b16 %v2968, %v2967
  %v3108 = vpack.c.b16 %v2970, %v2969
  %v3109 = vpack.c.b16 %v2972, %v2971
  %v3110 = vpack.c.b16 %v2974, %v2973
  %v3111 = vpack.c.b16 %v2976, %v2975
  %v3112 = vpack.c.b16 %v2978, %v2977
  %v3113 = vpack.c.b16 %v2980, %v2979
  %v3114 = vpack.c.b16 %v2982, %v2981
  %v3115 = vpack.c.b16 %v2984, %v2983
  %v3116 = vpack.c.b16 %v2986, %v2985
  %v3117 = vpack.c.b16 %v2988, %v2987
  %v3118 = vpack.c.b16 %v2990, %v2989
  %3247 = vst [vmem:[%s2] sm:$0xff] %v2991
  %3248 = vst [vmem:[%s2 + $0x8] sm:$0xff] %v2992
  %3249 = vst [vmem:[%s2 + $0x10] sm:$0xff] %v2993
  %3250 = vst [vmem:[%s2 + $0x18] sm:$0xff] %v2994
  %3251 = vst [vmem:[%s2 + $0x20] sm:$0xff] %v2995
  %3252 = vst [vmem:[%s2 + $0x28] sm:$0xff] %v2996
  %3253 = vst [vmem:[%s2 + $0x30] sm:$0xff] %v2997
  %3254 = vst [vmem:[%s2 + $0x38] sm:$0xff] %v2998
  %3255 = vst [vmem:[%s2 + $0x40] sm:$0xff] %v2999
  %3256 = vst [vmem:[%s2 + $0x48] sm:$0xff] %v3000
  %3257 = vst [vmem:[%s2 + $0x50] sm:$0xff] %v3001
  %3258 = vst [vmem:[%s2 + $0x58] sm:$0xff] %v3002
  %3259 = vst [vmem:[%s2 + $0x60] sm:$0xff] %v3003
  %3260 = vst [vmem:[%s2 + $0x68] sm:$0xff] %v3004
  %3261 = vst [vmem:[%s2 + $0x70] sm:$0xff] %v3005
  %3262 = vst [vmem:[%s2 + $0x78] sm:$0xff] %v3006
  %3263 = vst [vmem:[%s2 + $0x80] sm:$0xff] %v3007
  %3264 = vst [vmem:[%s2 + $0x88] sm:$0xff] %v3008
  %3265 = vst [vmem:[%s2 + $0x90] sm:$0xff] %v3009
  %3266 = vst [vmem:[%s2 + $0x98] sm:$0xff] %v3010
  %3267 = vst [vmem:[%s2 + $0xa0] sm:$0xff] %v3011
  %3268 = vst [vmem:[%s2 + $0xa8] sm:$0xff] %v3012
  %3269 = vst [vmem:[%s2 + $0xb0] sm:$0xff] %v3013
  %3270 = vst [vmem:[%s2 + $0xb8] sm:$0xff] %v3014
  %3271 = vst [vmem:[%s2 + $0xc0] sm:$0xff] %v3015
  %3272 = vst [vmem:[%s2 + $0xc8] sm:$0xff] %v3016
  %3273 = vst [vmem:[%s2 + $0xd0] sm:$0xff] %v3017
  %3274 = vst [vmem:[%s2 + $0xd8] sm:$0xff] %v3018
  %3275 = vst [vmem:[%s2 + $0xe0] sm:$0xff] %v3019
  %3276 = vst [vmem:[%s2 + $0xe8] sm:$0xff] %v3020
  %3277 = vst [vmem:[%s2 + $0xf0] sm:$0xff] %v3021
  %3278 = vst [vmem:[%s2 + $0xf8] sm:$0xff] %v3022
  %3279 = vst [vmem:[%s2 + $0x100] sm:$0xff] %v3023
  %3280 = vst [vmem:[%s2 + $0x108] sm:$0xff] %v3024
  %3281 = vst [vmem:[%s2 + $0x110] sm:$0xff] %v3025
  %3282 = vst [vmem:[%s2 + $0x118] sm:$0xff] %v3026
  %3283 = vst [vmem:[%s2 + $0x120] sm:$0xff] %v3027
  %3284 = vst [vmem:[%s2 + $0x128] sm:$0xff] %v3028
  %3285 = vst [vmem:[%s2 + $0x130] sm:$0xff] %v3029
  %3286 = vst [vmem:[%s2 + $0x138] sm:$0xff] %v3030
  %3287 = vst [vmem:[%s2 + $0x140] sm:$0xff] %v3031
  %3288 = vst [vmem:[%s2 + $0x148] sm:$0xff] %v3032
  %3289 = vst [vmem:[%s2 + $0x150] sm:$0xff] %v3033
  %3290 = vst [vmem:[%s2 + $0x158] sm:$0xff] %v3034
  %3291 = vst [vmem:[%s2 + $0x160] sm:$0xff] %v3035
  %3292 = vst [vmem:[%s2 + $0x168] sm:$0xff] %v3036
  %3293 = vst [vmem:[%s2 + $0x170] sm:$0xff] %v3037
  %3294 = vst [vmem:[%s2 + $0x178] sm:$0xff] %v3038
  %3295 = vst [vmem:[%s2 + $0x180] sm:$0xff] %v3039
  %3296 = vst [vmem:[%s2 + $0x188] sm:$0xff] %v3040
  %3297 = vst [vmem:[%s2 + $0x190] sm:$0xff] %v3041
  %3298 = vst [vmem:[%s2 + $0x198] sm:$0xff] %v3042
  %3299 = vst [vmem:[%s2 + $0x1a0] sm:$0xff] %v3043
  %3300 = vst [vmem:[%s2 + $0x1a8] sm:$0xff] %v3044
  %3301 = vst [vmem:[%s2 + $0x1b0] sm:$0xff] %v3045
  %3302 = vst [vmem:[%s2 + $0x1b8] sm:$0xff] %v3046
  %3303 = vst [vmem:[%s2 + $0x1c0] sm:$0xff] %v3047
  %3304 = vst [vmem:[%s2 + $0x1c8] sm:$0xff] %v3048
  %3305 = vst [vmem:[%s2 + $0x1d0] sm:$0xff] %v3049
  %3306 = vst [vmem:[%s2 + $0x1d8] sm:$0xff] %v3050
  %3307 = vst [vmem:[%s2 + $0x1e0] sm:$0xff] %v3051
  %3308 = vst [vmem:[%s2 + $0x1e8] sm:$0xff] %v3052
  %3309 = vst [vmem:[%s2 + $0x1f0] sm:$0xff] %v3053
  %3310 = vst [vmem:[%s2 + $0x1f8] sm:$0xff] %v3054
  %3311 = vst [vmem:[%s2 + $0x200] sm:$0xff] %v3055
  %3312 = vst [vmem:[%s2 + $0x208] sm:$0xff] %v3056
  %3313 = vst [vmem:[%s2 + $0x210] sm:$0xff] %v3057
  %3314 = vst [vmem:[%s2 + $0x218] sm:$0xff] %v3058
  %3315 = vst [vmem:[%s2 + $0x220] sm:$0xff] %v3059
  %3316 = vst [vmem:[%s2 + $0x228] sm:$0xff] %v3060
  %3317 = vst [vmem:[%s2 + $0x230] sm:$0xff] %v3061
  %3318 = vst [vmem:[%s2 + $0x238] sm:$0xff] %v3062
  %3319 = vst [vmem:[%s2 + $0x240] sm:$0xff] %v3063
  %3320 = vst [vmem:[%s2 + $0x248] sm:$0xff] %v3064
  %3321 = vst [vmem:[%s2 + $0x250] sm:$0xff] %v3065
  %3322 = vst [vmem:[%s2 + $0x258] sm:$0xff] %v3066
  %3323 = vst [vmem:[%s2 + $0x260] sm:$0xff] %v3067
  %3324 = vst [vmem:[%s2 + $0x268] sm:$0xff] %v3068
  %3325 = vst [vmem:[%s2 + $0x270] sm:$0xff] %v3069
  %3326 = vst [vmem:[%s2 + $0x278] sm:$0xff] %v3070
  %3327 = vst [vmem:[%s2 + $0x280] sm:$0xff] %v3071
  %3328 = vst [vmem:[%s2 + $0x288] sm:$0xff] %v3072
  %3329 = vst [vmem:[%s2 + $0x290] sm:$0xff] %v3073
  %3330 = vst [vmem:[%s2 + $0x298] sm:$0xff] %v3074
  %3331 = vst [vmem:[%s2 + $0x2a0] sm:$0xff] %v3075
  %3332 = vst [vmem:[%s2 + $0x2a8] sm:$0xff] %v3076
  %3333 = vst [vmem:[%s2 + $0x2b0] sm:$0xff] %v3077
  %3334 = vst [vmem:[%s2 + $0x2b8] sm:$0xff] %v3078
  %3335 = vst [vmem:[%s2 + $0x2c0] sm:$0xff] %v3079
  %3336 = vst [vmem:[%s2 + $0x2c8] sm:$0xff] %v3080
  %3337 = vst [vmem:[%s2 + $0x2d0] sm:$0xff] %v3081
  %3338 = vst [vmem:[%s2 + $0x2d8] sm:$0xff] %v3082
  %3339 = vst [vmem:[%s2 + $0x2e0] sm:$0xff] %v3083
  %3340 = vst [vmem:[%s2 + $0x2e8] sm:$0xff] %v3084
  %3341 = vst [vmem:[%s2 + $0x2f0] sm:$0xff] %v3085
  %3342 = vst [vmem:[%s2 + $0x2f8] sm:$0xff] %v3086
  %3343 = vst [vmem:[%s2 + $0x300] sm:$0xff] %v3087
  %3344 = vst [vmem:[%s2 + $0x308] sm:$0xff] %v3088
  %3345 = vst [vmem:[%s2 + $0x310] sm:$0xff] %v3089
  %3346 = vst [vmem:[%s2 + $0x318] sm:$0xff] %v3090
  %3347 = vst [vmem:[%s2 + $0x320] sm:$0xff] %v3091
  %3348 = vst [vmem:[%s2 + $0x328] sm:$0xff] %v3092
  %3349 = vst [vmem:[%s2 + $0x330] sm:$0xff] %v3093
  %3350 = vst [vmem:[%s2 + $0x338] sm:$0xff] %v3094
  %3351 = vst [vmem:[%s2 + $0x340] sm:$0xff] %v3095
  %3352 = vst [vmem:[%s2 + $0x348] sm:$0xff] %v3096
  %3353 = vst [vmem:[%s2 + $0x350] sm:$0xff] %v3097
  %3354 = vst [vmem:[%s2 + $0x358] sm:$0xff] %v3098
  %3355 = vst [vmem:[%s2 + $0x360] sm:$0xff] %v3099
  %3356 = vst [vmem:[%s2 + $0x368] sm:$0xff] %v3100
  %3357 = vst [vmem:[%s2 + $0x370] sm:$0xff] %v3101
  %3358 = vst [vmem:[%s2 + $0x378] sm:$0xff] %v3102
  %3359 = vst [vmem:[%s2 + $0x380] sm:$0xff] %v3103
  %3360 = vst [vmem:[%s2 + $0x388] sm:$0xff] %v3104
  %3361 = vst [vmem:[%s2 + $0x390] sm:$0xff] %v3105
  %3362 = vst [vmem:[%s2 + $0x398] sm:$0xff] %v3106
  %3363 = vst [vmem:[%s2 + $0x3a0] sm:$0xff] %v3107
  %3364 = vst [vmem:[%s2 + $0x3a8] sm:$0xff] %v3108
  %3365 = vst [vmem:[%s2 + $0x3b0] sm:$0xff] %v3109
  %3366 = vst [vmem:[%s2 + $0x3b8] sm:$0xff] %v3110
  %3367 = vst [vmem:[%s2 + $0x3c0] sm:$0xff] %v3111
  %3368 = vst [vmem:[%s2 + $0x3c8] sm:$0xff] %v3112
  %3369 = vst [vmem:[%s2 + $0x3d0] sm:$0xff] %v3113
  %3370 = vst [vmem:[%s2 + $0x3d8] sm:$0xff] %v3114
  %3371 = vst [vmem:[%s2 + $0x3e0] sm:$0xff] %v3115
  %3372 = vst [vmem:[%s2 + $0x3e8] sm:$0xff] %v3116
  %3373 = vst [vmem:[%s2 + $0x3f0] sm:$0xff] %v3117
  %3374 = vst [vmem:[%s2 + $0x3f8] sm:$0xff] %v3118
  %v3375 = vpack.c.bf16 %v1845, %v1841
  %v3376 = vpack.c.bf16 %v1847, %v1843
  %v3377 = vpack.c.bf16 %v1855, %v1851
  %v3378 = vpack.c.bf16 %v1857, %v1853
  %v3379 = vpack.c.bf16 %v1865, %v1861
  %v3380 = vpack.c.bf16 %v1867, %v1863
  %v3381 = vpack.c.bf16 %v1875, %v1871
  %v3382 = vpack.c.bf16 %v1877, %v1873
  %v3383 = vpack.c.bf16 %v1885, %v1881
  %v3384 = vpack.c.bf16 %v1887, %v1883
  %v3385 = vpack.c.bf16 %v1895, %v1891
  %v3386 = vpack.c.bf16 %v1897, %v1893
  %v3387 = vpack.c.bf16 %v1905, %v1901
  %v3388 = vpack.c.bf16 %v1907, %v1903
  %v3389 = vpack.c.bf16 %v1915, %v1911
  %v3390 = vpack.c.bf16 %v1917, %v1913
  %v3391 = vpack.c.bf16 %v1925, %v1921
  %v3392 = vpack.c.bf16 %v1927, %v1923
  %v3393 = vpack.c.bf16 %v1935, %v1931
  %v3394 = vpack.c.bf16 %v1937, %v1933
  %v3395 = vpack.c.bf16 %v1945, %v1941
  %v3396 = vpack.c.bf16 %v1947, %v1943
  %v3397 = vpack.c.bf16 %v1955, %v1951
  %v3398 = vpack.c.bf16 %v1957, %v1953
  %v3399 = vpack.c.bf16 %v1965, %v1961
  %v3400 = vpack.c.bf16 %v1967, %v1963
  %v3401 = vpack.c.bf16 %v1975, %v1971
  %v3402 = vpack.c.bf16 %v1977, %v1973
  %v3403 = vpack.c.bf16 %v1985, %v1981
  %v3404 = vpack.c.bf16 %v1987, %v1983
  %v3405 = vpack.c.bf16 %v1995, %v1991
  %v3406 = vpack.c.bf16 %v1997, %v1993
  %v3407 = vpack.c.bf16 %v2005, %v2001
  %v3408 = vpack.c.bf16 %v2007, %v2003
  %v3409 = vpack.c.bf16 %v2015, %v2011
  %v3410 = vpack.c.bf16 %v2017, %v2013
  %v3411 = vpack.c.bf16 %v2025, %v2021
  %v3412 = vpack.c.bf16 %v2027, %v2023
  %v3413 = vpack.c.bf16 %v2035, %v2031
  %v3414 = vpack.c.bf16 %v2037, %v2033
  %v3415 = vpack.c.bf16 %v2045, %v2041
  %v3416 = vpack.c.bf16 %v2047, %v2043
  %v3417 = vpack.c.bf16 %v2055, %v2051
  %v3418 = vpack.c.bf16 %v2057, %v2053
  %v3419 = vpack.c.bf16 %v2065, %v2061
  %v3420 = vpack.c.bf16 %v2067, %v2063
  %v3421 = vpack.c.bf16 %v2075, %v2071
  %v3422 = vpack.c.bf16 %v2077, %v2073
  %v3423 = vpack.c.bf16 %v2085, %v2081
  %v3424 = vpack.c.bf16 %v2087, %v2083
  %v3425 = vpack.c.bf16 %v2095, %v2091
  %v3426 = vpack.c.bf16 %v2097, %v2093
  %v3427 = vpack.c.bf16 %v2105, %v2101
  %v3428 = vpack.c.bf16 %v2107, %v2103
  %v3429 = vpack.c.bf16 %v2115, %v2111
  %v3430 = vpack.c.bf16 %v2117, %v2113
  %v3431 = vpack.c.bf16 %v2125, %v2121
  %v3432 = vpack.c.bf16 %v2127, %v2123
  %v3433 = vpack.c.bf16 %v2135, %v2131
  %v3434 = vpack.c.bf16 %v2137, %v2133
  %v3435 = vpack.c.bf16 %v2145, %v2141
  %v3436 = vpack.c.bf16 %v2147, %v2143
  %v3437 = vpack.c.bf16 %v2155, %v2151
  %v3438 = vpack.c.bf16 %v2157, %v2153
  %v3439 = vpack.c.bf16 %v2165, %v2161
  %v3440 = vpack.c.bf16 %v2167, %v2163
  %v3441 = vpack.c.bf16 %v2175, %v2171
  %v3442 = vpack.c.bf16 %v2177, %v2173
  %v3443 = vpack.c.bf16 %v2185, %v2181
  %v3444 = vpack.c.bf16 %v2187, %v2183
  %v3445 = vpack.c.bf16 %v2195, %v2191
  %v3446 = vpack.c.bf16 %v2197, %v2193
  %v3447 = vpack.c.bf16 %v2205, %v2201
  %v3448 = vpack.c.bf16 %v2207, %v2203
  %v3449 = vpack.c.bf16 %v2215, %v2211
  %v3450 = vpack.c.bf16 %v2217, %v2213
  %v3451 = vpack.c.bf16 %v2225, %v2221
  %v3452 = vpack.c.bf16 %v2227, %v2223
  %v3453 = vpack.c.bf16 %v2235, %v2231
  %v3454 = vpack.c.bf16 %v2237, %v2233
  %v3455 = vpack.c.bf16 %v2245, %v2241
  %v3456 = vpack.c.bf16 %v2247, %v2243
  %v3457 = vpack.c.bf16 %v2255, %v2251
  %v3458 = vpack.c.bf16 %v2257, %v2253
  %v3459 = vpack.c.bf16 %v2265, %v2261
  %v3460 = vpack.c.bf16 %v2267, %v2263
  %v3461 = vpack.c.bf16 %v2275, %v2271
  %v3462 = vpack.c.bf16 %v2277, %v2273
  %v3463 = vpack.c.bf16 %v2285, %v2281
  %v3464 = vpack.c.bf16 %v2287, %v2283
  %v3465 = vpack.c.bf16 %v2295, %v2291
  %v3466 = vpack.c.bf16 %v2297, %v2293
  %v3467 = vpack.c.bf16 %v2305, %v2301
  %v3468 = vpack.c.bf16 %v2307, %v2303
  %v3469 = vpack.c.bf16 %v2315, %v2311
  %v3470 = vpack.c.bf16 %v2317, %v2313
  %v3471 = vpack.c.bf16 %v2325, %v2321
  %v3472 = vpack.c.bf16 %v2327, %v2323
  %v3473 = vpack.c.bf16 %v2335, %v2331
  %v3474 = vpack.c.bf16 %v2337, %v2333
  %v3475 = vpack.c.bf16 %v2345, %v2341
  %v3476 = vpack.c.bf16 %v2347, %v2343
  %v3477 = vpack.c.bf16 %v2355, %v2351
  %v3478 = vpack.c.bf16 %v2357, %v2353
  %v3479 = vpack.c.bf16 %v2365, %v2361
  %v3480 = vpack.c.bf16 %v2367, %v2363
  %v3481 = vpack.c.bf16 %v2375, %v2371
  %v3482 = vpack.c.bf16 %v2377, %v2373
  %v3483 = vpack.c.bf16 %v2385, %v2381
  %v3484 = vpack.c.bf16 %v2387, %v2383
  %v3485 = vpack.c.bf16 %v2395, %v2391
  %v3486 = vpack.c.bf16 %v2397, %v2393
  %v3487 = vpack.c.bf16 %v2405, %v2401
  %v3488 = vpack.c.bf16 %v2407, %v2403
  %v3489 = vpack.c.bf16 %v2415, %v2411
  %v3490 = vpack.c.bf16 %v2417, %v2413
  %v3491 = vpack.c.bf16 %v2425, %v2421
  %v3492 = vpack.c.bf16 %v2427, %v2423
  %v3493 = vpack.c.bf16 %v2435, %v2431
  %v3494 = vpack.c.bf16 %v2437, %v2433
  %v3495 = vpack.c.bf16 %v2445, %v2441
  %v3496 = vpack.c.bf16 %v2447, %v2443
  %v3497 = vpack.c.bf16 %v2455, %v2451
  %v3498 = vpack.c.bf16 %v2457, %v2453
  %v3499 = vpack.c.bf16 %v2465, %v2461
  %v3500 = vpack.c.bf16 %v2467, %v2463
  %v3501 = vpack.c.bf16 %v2475, %v2471
  %v3502 = vpack.c.bf16 %v2477, %v2473
  %v3631 = vunpack.c.l.b16 %v3375
  %v3632 = vunpack.c.l.b16 %v3376
  %v3633 = vunpack.c.h.b16 %v3375
  %v3634 = vunpack.c.h.b16 %v3376
  %v3635 = vunpack.c.l.b16 %v3377
  %v3636 = vunpack.c.l.b16 %v3378
  %v3637 = vunpack.c.h.b16 %v3377
  %v3638 = vunpack.c.h.b16 %v3378
  %v3639 = vunpack.c.l.b16 %v3379
  %v3640 = vunpack.c.l.b16 %v3380
  %v3641 = vunpack.c.h.b16 %v3379
  %v3642 = vunpack.c.h.b16 %v3380
  %v3643 = vunpack.c.l.b16 %v3381
  %v3644 = vunpack.c.l.b16 %v3382
  %v3645 = vunpack.c.h.b16 %v3381
  %v3646 = vunpack.c.h.b16 %v3382
  %v3647 = vunpack.c.l.b16 %v3383
  %v3648 = vunpack.c.l.b16 %v3384
  %v3649 = vunpack.c.h.b16 %v3383
  %v3650 = vunpack.c.h.b16 %v3384
  %v3651 = vunpack.c.l.b16 %v3385
  %v3652 = vunpack.c.l.b16 %v3386
  %v3653 = vunpack.c.h.b16 %v3385
  %v3654 = vunpack.c.h.b16 %v3386
  %v3655 = vunpack.c.l.b16 %v3387
  %v3656 = vunpack.c.l.b16 %v3388
  %v3657 = vunpack.c.h.b16 %v3387
  %v3658 = vunpack.c.h.b16 %v3388
  %v3659 = vunpack.c.l.b16 %v3389
  %v3660 = vunpack.c.l.b16 %v3390
  %v3661 = vunpack.c.h.b16 %v3389
  %v3662 = vunpack.c.h.b16 %v3390
  %v3663 = vunpack.c.l.b16 %v3391
  %v3664 = vunpack.c.l.b16 %v3392
  %v3665 = vunpack.c.h.b16 %v3391
  %v3666 = vunpack.c.h.b16 %v3392
  %v3667 = vunpack.c.l.b16 %v3393
  %v3668 = vunpack.c.l.b16 %v3394
  %v3669 = vunpack.c.h.b16 %v3393
  %v3670 = vunpack.c.h.b16 %v3394
  %v3671 = vunpack.c.l.b16 %v3395
  %v3672 = vunpack.c.l.b16 %v3396
  %v3673 = vunpack.c.h.b16 %v3395
  %v3674 = vunpack.c.h.b16 %v3396
  %v3675 = vunpack.c.l.b16 %v3397
  %v3676 = vunpack.c.l.b16 %v3398
  %v3677 = vunpack.c.h.b16 %v3397
  %v3678 = vunpack.c.h.b16 %v3398
  %v3679 = vunpack.c.l.b16 %v3399
  %v3680 = vunpack.c.l.b16 %v3400
  %v3681 = vunpack.c.h.b16 %v3399
  %v3682 = vunpack.c.h.b16 %v3400
  %v3683 = vunpack.c.l.b16 %v3401
  %v3684 = vunpack.c.l.b16 %v3402
  %v3685 = vunpack.c.h.b16 %v3401
  %v3686 = vunpack.c.h.b16 %v3402
  %v3687 = vunpack.c.l.b16 %v3403
  %v3688 = vunpack.c.l.b16 %v3404
  %v3689 = vunpack.c.h.b16 %v3403
  %v3690 = vunpack.c.h.b16 %v3404
  %v3691 = vunpack.c.l.b16 %v3405
  %v3692 = vunpack.c.l.b16 %v3406
  %v3693 = vunpack.c.h.b16 %v3405
  %v3694 = vunpack.c.h.b16 %v3406
  %v3695 = vunpack.c.l.b16 %v3407
  %v3696 = vunpack.c.l.b16 %v3408
  %v3697 = vunpack.c.h.b16 %v3407
  %v3698 = vunpack.c.h.b16 %v3408
  %v3699 = vunpack.c.l.b16 %v3409
  %v3700 = vunpack.c.l.b16 %v3410
  %v3701 = vunpack.c.h.b16 %v3409
  %v3702 = vunpack.c.h.b16 %v3410
  %v3703 = vunpack.c.l.b16 %v3411
  %v3704 = vunpack.c.l.b16 %v3412
  %v3705 = vunpack.c.h.b16 %v3411
  %v3706 = vunpack.c.h.b16 %v3412
  %v3707 = vunpack.c.l.b16 %v3413
  %v3708 = vunpack.c.l.b16 %v3414
  %v3709 = vunpack.c.h.b16 %v3413
  %v3710 = vunpack.c.h.b16 %v3414
  %v3711 = vunpack.c.l.b16 %v3415
  %v3712 = vunpack.c.l.b16 %v3416
  %v3713 = vunpack.c.h.b16 %v3415
  %v3714 = vunpack.c.h.b16 %v3416
  %v3715 = vunpack.c.l.b16 %v3417
  %v3716 = vunpack.c.l.b16 %v3418
  %v3717 = vunpack.c.h.b16 %v3417
  %v3718 = vunpack.c.h.b16 %v3418
  %v3719 = vunpack.c.l.b16 %v3419
  %v3720 = vunpack.c.l.b16 %v3420
  %v3721 = vunpack.c.h.b16 %v3419
  %v3722 = vunpack.c.h.b16 %v3420
  %v3723 = vunpack.c.l.b16 %v3421
  %v3724 = vunpack.c.l.b16 %v3422
  %v3725 = vunpack.c.h.b16 %v3421
  %v3726 = vunpack.c.h.b16 %v3422
  %v3727 = vunpack.c.l.b16 %v3423
  %v3728 = vunpack.c.l.b16 %v3424
  %v3729 = vunpack.c.h.b16 %v3423
  %v3730 = vunpack.c.h.b16 %v3424
  %v3731 = vunpack.c.l.b16 %v3425
  %v3732 = vunpack.c.l.b16 %v3426
  %v3733 = vunpack.c.h.b16 %v3425
  %v3734 = vunpack.c.h.b16 %v3426
  %v3735 = vunpack.c.l.b16 %v3427
  %v3736 = vunpack.c.l.b16 %v3428
  %v3737 = vunpack.c.h.b16 %v3427
  %v3738 = vunpack.c.h.b16 %v3428
  %v3739 = vunpack.c.l.b16 %v3429
  %v3740 = vunpack.c.l.b16 %v3430
  %v3741 = vunpack.c.h.b16 %v3429
  %v3742 = vunpack.c.h.b16 %v3430
  %v3743 = vunpack.c.l.b16 %v3431
  %v3744 = vunpack.c.l.b16 %v3432
  %v3745 = vunpack.c.h.b16 %v3431
  %v3746 = vunpack.c.h.b16 %v3432
  %v3747 = vunpack.c.l.b16 %v3433
  %v3748 = vunpack.c.l.b16 %v3434
  %v3749 = vunpack.c.h.b16 %v3433
  %v3750 = vunpack.c.h.b16 %v3434
  %v3751 = vunpack.c.l.b16 %v3435
  %v3752 = vunpack.c.l.b16 %v3436
  %v3753 = vunpack.c.h.b16 %v3435
  %v3754 = vunpack.c.h.b16 %v3436
  %v3755 = vunpack.c.l.b16 %v3437
  %v3756 = vunpack.c.l.b16 %v3438
  %v3757 = vunpack.c.h.b16 %v3437
  %v3758 = vunpack.c.h.b16 %v3438
  %v3759 = vunpack.c.l.b16 %v3439
  %v3760 = vunpack.c.l.b16 %v3440
  %v3761 = vunpack.c.h.b16 %v3439
  %v3762 = vunpack.c.h.b16 %v3440
  %v3763 = vunpack.c.l.b16 %v3441
  %v3764 = vunpack.c.l.b16 %v3442
  %v3765 = vunpack.c.h.b16 %v3441
  %v3766 = vunpack.c.h.b16 %v3442
  %v3767 = vunpack.c.l.b16 %v3443
  %v3768 = vunpack.c.l.b16 %v3444
  %v3769 = vunpack.c.h.b16 %v3443
  %v3770 = vunpack.c.h.b16 %v3444
  %v3771 = vunpack.c.l.b16 %v3445
  %v3772 = vunpack.c.l.b16 %v3446
  %v3773 = vunpack.c.h.b16 %v3445
  %v3774 = vunpack.c.h.b16 %v3446
  %v3775 = vunpack.c.l.b16 %v3447
  %v3776 = vunpack.c.l.b16 %v3448
  %v3777 = vunpack.c.h.b16 %v3447
  %v3778 = vunpack.c.h.b16 %v3448
  %v3779 = vunpack.c.l.b16 %v3449
  %v3780 = vunpack.c.l.b16 %v3450
  %v3781 = vunpack.c.h.b16 %v3449
  %v3782 = vunpack.c.h.b16 %v3450
  %v3783 = vunpack.c.l.b16 %v3451
  %v3784 = vunpack.c.l.b16 %v3452
  %v3785 = vunpack.c.h.b16 %v3451
  %v3786 = vunpack.c.h.b16 %v3452
  %v3787 = vunpack.c.l.b16 %v3453
  %v3788 = vunpack.c.l.b16 %v3454
  %v3789 = vunpack.c.h.b16 %v3453
  %v3790 = vunpack.c.h.b16 %v3454
  %v3791 = vunpack.c.l.b16 %v3455
  %v3792 = vunpack.c.l.b16 %v3456
  %v3793 = vunpack.c.h.b16 %v3455
  %v3794 = vunpack.c.h.b16 %v3456
  %v3795 = vunpack.c.l.b16 %v3457
  %v3796 = vunpack.c.l.b16 %v3458
  %v3797 = vunpack.c.h.b16 %v3457
  %v3798 = vunpack.c.h.b16 %v3458
  %v3799 = vunpack.c.l.b16 %v3459
  %v3800 = vunpack.c.l.b16 %v3460
  %v3801 = vunpack.c.h.b16 %v3459
  %v3802 = vunpack.c.h.b16 %v3460
  %v3803 = vunpack.c.l.b16 %v3461
  %v3804 = vunpack.c.l.b16 %v3462
  %v3805 = vunpack.c.h.b16 %v3461
  %v3806 = vunpack.c.h.b16 %v3462
  %v3807 = vunpack.c.l.b16 %v3463
  %v3808 = vunpack.c.l.b16 %v3464
  %v3809 = vunpack.c.h.b16 %v3463
  %v3810 = vunpack.c.h.b16 %v3464
  %v3811 = vunpack.c.l.b16 %v3465
  %v3812 = vunpack.c.l.b16 %v3466
  %v3813 = vunpack.c.h.b16 %v3465
  %v3814 = vunpack.c.h.b16 %v3466
  %v3815 = vunpack.c.l.b16 %v3467
  %v3816 = vunpack.c.l.b16 %v3468
  %v3817 = vunpack.c.h.b16 %v3467
  %v3818 = vunpack.c.h.b16 %v3468
  %v3819 = vunpack.c.l.b16 %v3469
  %v3820 = vunpack.c.l.b16 %v3470
  %v3821 = vunpack.c.h.b16 %v3469
  %v3822 = vunpack.c.h.b16 %v3470
  %v3823 = vunpack.c.l.b16 %v3471
  %v3824 = vunpack.c.l.b16 %v3472
  %v3825 = vunpack.c.h.b16 %v3471
  %v3826 = vunpack.c.h.b16 %v3472
  %v3827 = vunpack.c.l.b16 %v3473
  %v3828 = vunpack.c.l.b16 %v3474
  %v3829 = vunpack.c.h.b16 %v3473
  %v3830 = vunpack.c.h.b16 %v3474
  %v3831 = vunpack.c.l.b16 %v3475
  %v3832 = vunpack.c.l.b16 %v3476
  %v3833 = vunpack.c.h.b16 %v3475
  %v3834 = vunpack.c.h.b16 %v3476
  %v3835 = vunpack.c.l.b16 %v3477
  %v3836 = vunpack.c.l.b16 %v3478
  %v3837 = vunpack.c.h.b16 %v3477
  %v3838 = vunpack.c.h.b16 %v3478
  %v3839 = vunpack.c.l.b16 %v3479
  %v3840 = vunpack.c.l.b16 %v3480
  %v3841 = vunpack.c.h.b16 %v3479
  %v3842 = vunpack.c.h.b16 %v3480
  %v3843 = vunpack.c.l.b16 %v3481
  %v3844 = vunpack.c.l.b16 %v3482
  %v3845 = vunpack.c.h.b16 %v3481
  %v3846 = vunpack.c.h.b16 %v3482
  %v3847 = vunpack.c.l.b16 %v3483
  %v3848 = vunpack.c.l.b16 %v3484
  %v3849 = vunpack.c.h.b16 %v3483
  %v3850 = vunpack.c.h.b16 %v3484
  %v3851 = vunpack.c.l.b16 %v3485
  %v3852 = vunpack.c.l.b16 %v3486
  %v3853 = vunpack.c.h.b16 %v3485
  %v3854 = vunpack.c.h.b16 %v3486
  %v3855 = vunpack.c.l.b16 %v3487
  %v3856 = vunpack.c.l.b16 %v3488
  %v3857 = vunpack.c.h.b16 %v3487
  %v3858 = vunpack.c.h.b16 %v3488
  %v3859 = vunpack.c.l.b16 %v3489
  %v3860 = vunpack.c.l.b16 %v3490
  %v3861 = vunpack.c.h.b16 %v3489
  %v3862 = vunpack.c.h.b16 %v3490
  %v3863 = vunpack.c.l.b16 %v3491
  %v3864 = vunpack.c.l.b16 %v3492
  %v3865 = vunpack.c.h.b16 %v3491
  %v3866 = vunpack.c.h.b16 %v3492
  %v3867 = vunpack.c.l.b16 %v3493
  %v3868 = vunpack.c.l.b16 %v3494
  %v3869 = vunpack.c.h.b16 %v3493
  %v3870 = vunpack.c.h.b16 %v3494
  %v3871 = vunpack.c.l.b16 %v3495
  %v3872 = vunpack.c.l.b16 %v3496
  %v3873 = vunpack.c.h.b16 %v3495
  %v3874 = vunpack.c.h.b16 %v3496
  %v3875 = vunpack.c.l.b16 %v3497
  %v3876 = vunpack.c.l.b16 %v3498
  %v3877 = vunpack.c.h.b16 %v3497
  %v3878 = vunpack.c.h.b16 %v3498
  %v3879 = vunpack.c.l.b16 %v3499
  %v3880 = vunpack.c.l.b16 %v3500
  %v3881 = vunpack.c.h.b16 %v3499
  %v3882 = vunpack.c.h.b16 %v3500
  %v3883 = vunpack.c.l.b16 %v3501
  %v3884 = vunpack.c.l.b16 %v3502
  %v3885 = vunpack.c.h.b16 %v3501
  %v3886 = vunpack.c.h.b16 %v3502
  %v3887 = vpack.c.b16 %v3632, %v3631
  %v3888 = vpack.c.b16 %v3634, %v3633
  %v3889 = vpack.c.b16 %v3636, %v3635
  %v3890 = vpack.c.b16 %v3638, %v3637
  %v3891 = vpack.c.b16 %v3640, %v3639
  %v3892 = vpack.c.b16 %v3642, %v3641
  %v3893 = vpack.c.b16 %v3644, %v3643
  %v3894 = vpack.c.b16 %v3646, %v3645
  %v3895 = vpack.c.b16 %v3648, %v3647
  %v3896 = vpack.c.b16 %v3650, %v3649
  %v3897 = vpack.c.b16 %v3652, %v3651
  %v3898 = vpack.c.b16 %v3654, %v3653
  %v3899 = vpack.c.b16 %v3656, %v3655
  %v3900 = vpack.c.b16 %v3658, %v3657
  %v3901 = vpack.c.b16 %v3660, %v3659
  %v3902 = vpack.c.b16 %v3662, %v3661
  %v3903 = vpack.c.b16 %v3664, %v3663
  %v3904 = vpack.c.b16 %v3666, %v3665
  %v3905 = vpack.c.b16 %v3668, %v3667
  %v3906 = vpack.c.b16 %v3670, %v3669
  %v3907 = vpack.c.b16 %v3672, %v3671
  %v3908 = vpack.c.b16 %v3674, %v3673
  %v3909 = vpack.c.b16 %v3676, %v3675
  %v3910 = vpack.c.b16 %v3678, %v3677
  %v3911 = vpack.c.b16 %v3680, %v3679
  %v3912 = vpack.c.b16 %v3682, %v3681
  %v3913 = vpack.c.b16 %v3684, %v3683
  %v3914 = vpack.c.b16 %v3686, %v3685
  %v3915 = vpack.c.b16 %v3688, %v3687
  %v3916 = vpack.c.b16 %v3690, %v3689
  %v3917 = vpack.c.b16 %v3692, %v3691
  %v3918 = vpack.c.b16 %v3694, %v3693
  %v3919 = vpack.c.b16 %v3696, %v3695
  %v3920 = vpack.c.b16 %v3698, %v3697
  %v3921 = vpack.c.b16 %v3700, %v3699
  %v3922 = vpack.c.b16 %v3702, %v3701
  %v3923 = vpack.c.b16 %v3704, %v3703
  %v3924 = vpack.c.b16 %v3706, %v3705
  %v3925 = vpack.c.b16 %v3708, %v3707
  %v3926 = vpack.c.b16 %v3710, %v3709
  %v3927 = vpack.c.b16 %v3712, %v3711
  %v3928 = vpack.c.b16 %v3714, %v3713
  %v3929 = vpack.c.b16 %v3716, %v3715
  %v3930 = vpack.c.b16 %v3718, %v3717
  %v3931 = vpack.c.b16 %v3720, %v3719
  %v3932 = vpack.c.b16 %v3722, %v3721
  %v3933 = vpack.c.b16 %v3724, %v3723
  %v3934 = vpack.c.b16 %v3726, %v3725
  %v3935 = vpack.c.b16 %v3728, %v3727
  %v3936 = vpack.c.b16 %v3730, %v3729
  %v3937 = vpack.c.b16 %v3732, %v3731
  %v3938 = vpack.c.b16 %v3734, %v3733
  %v3939 = vpack.c.b16 %v3736, %v3735
  %v3940 = vpack.c.b16 %v3738, %v3737
  %v3941 = vpack.c.b16 %v3740, %v3739
  %v3942 = vpack.c.b16 %v3742, %v3741
  %v3943 = vpack.c.b16 %v3744, %v3743
  %v3944 = vpack.c.b16 %v3746, %v3745
  %v3945 = vpack.c.b16 %v3748, %v3747
  %v3946 = vpack.c.b16 %v3750, %v3749
  %v3947 = vpack.c.b16 %v3752, %v3751
  %v3948 = vpack.c.b16 %v3754, %v3753
  %v3949 = vpack.c.b16 %v3756, %v3755
  %v3950 = vpack.c.b16 %v3758, %v3757
  %v3951 = vpack.c.b16 %v3760, %v3759
  %v3952 = vpack.c.b16 %v3762, %v3761
  %v3953 = vpack.c.b16 %v3764, %v3763
  %v3954 = vpack.c.b16 %v3766, %v3765
  %v3955 = vpack.c.b16 %v3768, %v3767
  %v3956 = vpack.c.b16 %v3770, %v3769
  %v3957 = vpack.c.b16 %v3772, %v3771
  %v3958 = vpack.c.b16 %v3774, %v3773
  %v3959 = vpack.c.b16 %v3776, %v3775
  %v3960 = vpack.c.b16 %v3778, %v3777
  %v3961 = vpack.c.b16 %v3780, %v3779
  %v3962 = vpack.c.b16 %v3782, %v3781
  %v3963 = vpack.c.b16 %v3784, %v3783
  %v3964 = vpack.c.b16 %v3786, %v3785
  %v3965 = vpack.c.b16 %v3788, %v3787
  %v3966 = vpack.c.b16 %v3790, %v3789
  %v3967 = vpack.c.b16 %v3792, %v3791
  %v3968 = vpack.c.b16 %v3794, %v3793
  %v3969 = vpack.c.b16 %v3796, %v3795
  %v3970 = vpack.c.b16 %v3798, %v3797
  %v3971 = vpack.c.b16 %v3800, %v3799
  %v3972 = vpack.c.b16 %v3802, %v3801
  %v3973 = vpack.c.b16 %v3804, %v3803
  %v3974 = vpack.c.b16 %v3806, %v3805
  %v3975 = vpack.c.b16 %v3808, %v3807
  %v3976 = vpack.c.b16 %v3810, %v3809
  %v3977 = vpack.c.b16 %v3812, %v3811
  %v3978 = vpack.c.b16 %v3814, %v3813
  %v3979 = vpack.c.b16 %v3816, %v3815
  %v3980 = vpack.c.b16 %v3818, %v3817
  %v3981 = vpack.c.b16 %v3820, %v3819
  %v3982 = vpack.c.b16 %v3822, %v3821
  %v3983 = vpack.c.b16 %v3824, %v3823
  %v3984 = vpack.c.b16 %v3826, %v3825
  %v3985 = vpack.c.b16 %v3828, %v3827
  %v3986 = vpack.c.b16 %v3830, %v3829
  %v3987 = vpack.c.b16 %v3832, %v3831
  %v3988 = vpack.c.b16 %v3834, %v3833
  %v3989 = vpack.c.b16 %v3836, %v3835
  %v3990 = vpack.c.b16 %v3838, %v3837
  %v3991 = vpack.c.b16 %v3840, %v3839
  %v3992 = vpack.c.b16 %v3842, %v3841
  %v3993 = vpack.c.b16 %v3844, %v3843
  %v3994 = vpack.c.b16 %v3846, %v3845
  %v3995 = vpack.c.b16 %v3848, %v3847
  %v3996 = vpack.c.b16 %v3850, %v3849
  %v3997 = vpack.c.b16 %v3852, %v3851
  %v3998 = vpack.c.b16 %v3854, %v3853
  %v3999 = vpack.c.b16 %v3856, %v3855
  %v4000 = vpack.c.b16 %v3858, %v3857
  %v4001 = vpack.c.b16 %v3860, %v3859
  %v4002 = vpack.c.b16 %v3862, %v3861
  %v4003 = vpack.c.b16 %v3864, %v3863
  %v4004 = vpack.c.b16 %v3866, %v3865
  %v4005 = vpack.c.b16 %v3868, %v3867
  %v4006 = vpack.c.b16 %v3870, %v3869
  %v4007 = vpack.c.b16 %v3872, %v3871
  %v4008 = vpack.c.b16 %v3874, %v3873
  %v4009 = vpack.c.b16 %v3876, %v3875
  %v4010 = vpack.c.b16 %v3878, %v3877
  %v4011 = vpack.c.b16 %v3880, %v3879
  %v4012 = vpack.c.b16 %v3882, %v3881
  %v4013 = vpack.c.b16 %v3884, %v3883
  %v4014 = vpack.c.b16 %v3886, %v3885
  %s4143 = scalar_lea.vmem %s2, 1024
  %4144 = vst [vmem:[%s4143] sm:$0xff] %v3887
  %4145 = vst [vmem:[%s4143 + $0x8] sm:$0xff] %v3888
  %4146 = vst [vmem:[%s4143 + $0x10] sm:$0xff] %v3889
  %4147 = vst [vmem:[%s4143 + $0x18] sm:$0xff] %v3890
  %4148 = vst [vmem:[%s4143 + $0x20] sm:$0xff] %v3891
  %4149 = vst [vmem:[%s4143 + $0x28] sm:$0xff] %v3892
  %4150 = vst [vmem:[%s4143 + $0x30] sm:$0xff] %v3893
  %4151 = vst [vmem:[%s4143 + $0x38] sm:$0xff] %v3894
  %4152 = vst [vmem:[%s4143 + $0x40] sm:$0xff] %v3895
  %4153 = vst [vmem:[%s4143 + $0x48] sm:$0xff] %v3896
  %4154 = vst [vmem:[%s4143 + $0x50] sm:$0xff] %v3897
  %4155 = vst [vmem:[%s4143 + $0x58] sm:$0xff] %v3898
  %4156 = vst [vmem:[%s4143 + $0x60] sm:$0xff] %v3899
  %4157 = vst [vmem:[%s4143 + $0x68] sm:$0xff] %v3900
  %4158 = vst [vmem:[%s4143 + $0x70] sm:$0xff] %v3901
  %4159 = vst [vmem:[%s4143 + $0x78] sm:$0xff] %v3902
  %4160 = vst [vmem:[%s4143 + $0x80] sm:$0xff] %v3903
  %4161 = vst [vmem:[%s4143 + $0x88] sm:$0xff] %v3904
  %4162 = vst [vmem:[%s4143 + $0x90] sm:$0xff] %v3905
  %4163 = vst [vmem:[%s4143 + $0x98] sm:$0xff] %v3906
  %4164 = vst [vmem:[%s4143 + $0xa0] sm:$0xff] %v3907
  %4165 = vst [vmem:[%s4143 + $0xa8] sm:$0xff] %v3908
  %4166 = vst [vmem:[%s4143 + $0xb0] sm:$0xff] %v3909
  %4167 = vst [vmem:[%s4143 + $0xb8] sm:$0xff] %v3910
  %4168 = vst [vmem:[%s4143 + $0xc0] sm:$0xff] %v3911
  %4169 = vst [vmem:[%s4143 + $0xc8] sm:$0xff] %v3912
  %4170 = vst [vmem:[%s4143 + $0xd0] sm:$0xff] %v3913
  %4171 = vst [vmem:[%s4143 + $0xd8] sm:$0xff] %v3914
  %4172 = vst [vmem:[%s4143 + $0xe0] sm:$0xff] %v3915
  %4173 = vst [vmem:[%s4143 + $0xe8] sm:$0xff] %v3916
  %4174 = vst [vmem:[%s4143 + $0xf0] sm:$0xff] %v3917
  %4175 = vst [vmem:[%s4143 + $0xf8] sm:$0xff] %v3918
  %4176 = vst [vmem:[%s4143 + $0x100] sm:$0xff] %v3919
  %4177 = vst [vmem:[%s4143 + $0x108] sm:$0xff] %v3920
  %4178 = vst [vmem:[%s4143 + $0x110] sm:$0xff] %v3921
  %4179 = vst [vmem:[%s4143 + $0x118] sm:$0xff] %v3922
  %4180 = vst [vmem:[%s4143 + $0x120] sm:$0xff] %v3923
  %4181 = vst [vmem:[%s4143 + $0x128] sm:$0xff] %v3924
  %4182 = vst [vmem:[%s4143 + $0x130] sm:$0xff] %v3925
  %4183 = vst [vmem:[%s4143 + $0x138] sm:$0xff] %v3926
  %4184 = vst [vmem:[%s4143 + $0x140] sm:$0xff] %v3927
  %4185 = vst [vmem:[%s4143 + $0x148] sm:$0xff] %v3928
  %4186 = vst [vmem:[%s4143 + $0x150] sm:$0xff] %v3929
  %4187 = vst [vmem:[%s4143 + $0x158] sm:$0xff] %v3930
  %4188 = vst [vmem:[%s4143 + $0x160] sm:$0xff] %v3931
  %4189 = vst [vmem:[%s4143 + $0x168] sm:$0xff] %v3932
  %4190 = vst [vmem:[%s4143 + $0x170] sm:$0xff] %v3933
  %4191 = vst [vmem:[%s4143 + $0x178] sm:$0xff] %v3934
  %4192 = vst [vmem:[%s4143 + $0x180] sm:$0xff] %v3935
  %4193 = vst [vmem:[%s4143 + $0x188] sm:$0xff] %v3936
  %4194 = vst [vmem:[%s4143 + $0x190] sm:$0xff] %v3937
  %4195 = vst [vmem:[%s4143 + $0x198] sm:$0xff] %v3938
  %4196 = vst [vmem:[%s4143 + $0x1a0] sm:$0xff] %v3939
  %4197 = vst [vmem:[%s4143 + $0x1a8] sm:$0xff] %v3940
  %4198 = vst [vmem:[%s4143 + $0x1b0] sm:$0xff] %v3941
  %4199 = vst [vmem:[%s4143 + $0x1b8] sm:$0xff] %v3942
  %4200 = vst [vmem:[%s4143 + $0x1c0] sm:$0xff] %v3943
  %4201 = vst [vmem:[%s4143 + $0x1c8] sm:$0xff] %v3944
  %4202 = vst [vmem:[%s4143 + $0x1d0] sm:$0xff] %v3945
  %4203 = vst [vmem:[%s4143 + $0x1d8] sm:$0xff] %v3946
  %4204 = vst [vmem:[%s4143 + $0x1e0] sm:$0xff] %v3947
  %4205 = vst [vmem:[%s4143 + $0x1e8] sm:$0xff] %v3948
  %4206 = vst [vmem:[%s4143 + $0x1f0] sm:$0xff] %v3949
  %4207 = vst [vmem:[%s4143 + $0x1f8] sm:$0xff] %v3950
  %4208 = vst [vmem:[%s4143 + $0x200] sm:$0xff] %v3951
  %4209 = vst [vmem:[%s4143 + $0x208] sm:$0xff] %v3952
  %4210 = vst [vmem:[%s4143 + $0x210] sm:$0xff] %v3953
  %4211 = vst [vmem:[%s4143 + $0x218] sm:$0xff] %v3954
  %4212 = vst [vmem:[%s4143 + $0x220] sm:$0xff] %v3955
  %4213 = vst [vmem:[%s4143 + $0x228] sm:$0xff] %v3956
  %4214 = vst [vmem:[%s4143 + $0x230] sm:$0xff] %v3957
  %4215 = vst [vmem:[%s4143 + $0x238] sm:$0xff] %v3958
  %4216 = vst [vmem:[%s4143 + $0x240] sm:$0xff] %v3959
  %4217 = vst [vmem:[%s4143 + $0x248] sm:$0xff] %v3960
  %4218 = vst [vmem:[%s4143 + $0x250] sm:$0xff] %v3961
  %4219 = vst [vmem:[%s4143 + $0x258] sm:$0xff] %v3962
  %4220 = vst [vmem:[%s4143 + $0x260] sm:$0xff] %v3963
  %4221 = vst [vmem:[%s4143 + $0x268] sm:$0xff] %v3964
  %4222 = vst [vmem:[%s4143 + $0x270] sm:$0xff] %v3965
  %4223 = vst [vmem:[%s4143 + $0x278] sm:$0xff] %v3966
  %4224 = vst [vmem:[%s4143 + $0x280] sm:$0xff] %v3967
  %4225 = vst [vmem:[%s4143 + $0x288] sm:$0xff] %v3968
  %4226 = vst [vmem:[%s4143 + $0x290] sm:$0xff] %v3969
  %4227 = vst [vmem:[%s4143 + $0x298] sm:$0xff] %v3970
  %4228 = vst [vmem:[%s4143 + $0x2a0] sm:$0xff] %v3971
  %4229 = vst [vmem:[%s4143 + $0x2a8] sm:$0xff] %v3972
  %4230 = vst [vmem:[%s4143 + $0x2b0] sm:$0xff] %v3973
  %4231 = vst [vmem:[%s4143 + $0x2b8] sm:$0xff] %v3974
  %4232 = vst [vmem:[%s4143 + $0x2c0] sm:$0xff] %v3975
  %4233 = vst [vmem:[%s4143 + $0x2c8] sm:$0xff] %v3976
  %4234 = vst [vmem:[%s4143 + $0x2d0] sm:$0xff] %v3977
  %4235 = vst [vmem:[%s4143 + $0x2d8] sm:$0xff] %v3978
  %4236 = vst [vmem:[%s4143 + $0x2e0] sm:$0xff] %v3979
  %4237 = vst [vmem:[%s4143 + $0x2e8] sm:$0xff] %v3980
  %4238 = vst [vmem:[%s4143 + $0x2f0] sm:$0xff] %v3981
  %4239 = vst [vmem:[%s4143 + $0x2f8] sm:$0xff] %v3982
  %4240 = vst [vmem:[%s4143 + $0x300] sm:$0xff] %v3983
  %4241 = vst [vmem:[%s4143 + $0x308] sm:$0xff] %v3984
  %4242 = vst [vmem:[%s4143 + $0x310] sm:$0xff] %v3985
  %4243 = vst [vmem:[%s4143 + $0x318] sm:$0xff] %v3986
  %4244 = vst [vmem:[%s4143 + $0x320] sm:$0xff] %v3987
  %4245 = vst [vmem:[%s4143 + $0x328] sm:$0xff] %v3988
  %4246 = vst [vmem:[%s4143 + $0x330] sm:$0xff] %v3989
  %4247 = vst [vmem:[%s4143 + $0x338] sm:$0xff] %v3990
  %4248 = vst [vmem:[%s4143 + $0x340] sm:$0xff] %v3991
  %4249 = vst [vmem:[%s4143 + $0x348] sm:$0xff] %v3992
  %4250 = vst [vmem:[%s4143 + $0x350] sm:$0xff] %v3993
  %4251 = vst [vmem:[%s4143 + $0x358] sm:$0xff] %v3994
  %4252 = vst [vmem:[%s4143 + $0x360] sm:$0xff] %v3995
  %4253 = vst [vmem:[%s4143 + $0x368] sm:$0xff] %v3996
  %4254 = vst [vmem:[%s4143 + $0x370] sm:$0xff] %v3997
  %4255 = vst [vmem:[%s4143 + $0x378] sm:$0xff] %v3998
  %4256 = vst [vmem:[%s4143 + $0x380] sm:$0xff] %v3999
  %4257 = vst [vmem:[%s4143 + $0x388] sm:$0xff] %v4000
  %4258 = vst [vmem:[%s4143 + $0x390] sm:$0xff] %v4001
  %4259 = vst [vmem:[%s4143 + $0x398] sm:$0xff] %v4002
  %4260 = vst [vmem:[%s4143 + $0x3a0] sm:$0xff] %v4003
  %4261 = vst [vmem:[%s4143 + $0x3a8] sm:$0xff] %v4004
  %4262 = vst [vmem:[%s4143 + $0x3b0] sm:$0xff] %v4005
  %4263 = vst [vmem:[%s4143 + $0x3b8] sm:$0xff] %v4006
  %4264 = vst [vmem:[%s4143 + $0x3c0] sm:$0xff] %v4007
  %4265 = vst [vmem:[%s4143 + $0x3c8] sm:$0xff] %v4008
  %4266 = vst [vmem:[%s4143 + $0x3d0] sm:$0xff] %v4009
  %4267 = vst [vmem:[%s4143 + $0x3d8] sm:$0xff] %v4010
  %4268 = vst [vmem:[%s4143 + $0x3e0] sm:$0xff] %v4011
  %4269 = vst [vmem:[%s4143 + $0x3e8] sm:$0xff] %v4012
  %4270 = vst [vmem:[%s4143 + $0x3f0] sm:$0xff] %v4013
  %4271 = vst [vmem:[%s4143 + $0x3f8] sm:$0xff] %v4014
  // Predicated region
  $region10: #{relation_tagger_forward.3} parent=0 // pred_check
    _
  $region11: #{relation_tagger_forward.3} parent=0 // pred_check_branch
    %4273 = sbr.rel (0) target = $region13
  $region12: #{relation_tagger_forward.3} parent=0 // pred_region
    _
  $region13: #{relation_tagger_forward.3} parent=0 // pred_fallthru
    _
  // Predicated region
  $region14: #{relation_tagger_forward.3} parent=0 // pred_check
    _
  $region15: #{relation_tagger_forward.3} parent=0 // pred_check_branch
    %4275 = sbr.rel (0) target = $region17
  $region16: #{relation_tagger_forward.3} parent=0 // pred_region
    _
  $region17: #{relation_tagger_forward.3} parent=0 // pred_fallthru
    _

</llo_original>
